<compile_context>
chip_gen: v7x
topology: tpu7x:2x2x1
jax: 0.10.0
libtpu: 0.0.40
codegen_flags: <defaults>
</compile_context>

<pallas_src>
import functools

import jax
import jax.numpy as jnp
from jax import lax
from jax.experimental import pallas as pl
from jax.experimental.pallas import tpu as pltpu


# ----------------------------------------------------------------------------
# Pallas kernel: one full Bottleneck forward for a single batch element.
#   conv1(1x1) -> bn1 -> relu -> conv2(3x3, pad=1, stride=1) -> bn2 -> relu
#   -> conv3(1x1) -> bn3 -> (+ identity residual) -> relu
# All refs are 2D, channels on the lane axis.
# ----------------------------------------------------------------------------
def _bottleneck_kernel(x_ref, w1_ref, w2_ref, w3_ref,
                       s1_ref, b1_ref, s2_ref, b2_ref, s3_ref, b3_ref,
                       o_ref, *, H, W):
    HW = H * W
    P = w1_ref.shape[1]                    # padded planes
    cdt = w1_ref.dtype                     # MXU operand dtype (bf16 or f32)

    x_in = x_ref[...]                      # (HW, Cin_p), compute dtype

    # --- conv1 (1x1) + bn1 + relu (f32 epilogue) -----------------------------
    y1 = jnp.dot(x_in, w1_ref[...], preferred_element_type=jnp.float32)
    y1 = jnp.maximum(y1 * s1_ref[...] + b1_ref[...], 0.0)        # (HW, P) f32

    # --- conv2 (3x3, stride=1, pad=1) + bn2 + relu ---------------------------
    # Zero-pad y1 along the flattened-row axis once; every (dy, dx) tap is then
    # a contiguous sublane window of `ypad`, masked where the column wraps.
    PADR = ((W + 1 + 7) // 8) * 8          # sublane-aligned zero-pad rows
    zpad = jnp.zeros((PADR, P), jnp.float32)
    ypad = jnp.concatenate([zpad, y1, zpad], axis=0)             # (HW+2*PADR, P)

    pos = lax.broadcasted_iota(jnp.int32, (HW, 1), 0)
    ww = pos % W                                                  # column index

    acc = jnp.zeros((HW, P), jnp.float32)
    for dy in (-1, 0, 1):
        taps = []
        for dx in (-1, 0, 1):
            start = PADR + dy * W + dx                            # static int
            tap = ypad[start:start + HW, :]                       # (HW, P)
            if dx != 0:
                valid = (ww + dx >= 0) & (ww + dx < W)            # row-wrap mask
                tap = jnp.where(valid, tap, 0.0)
            taps.append(tap)
        patch = jnp.concatenate(taps, axis=-1).astype(cdt)        # (HW, 3P)
        acc = acc + jnp.dot(patch, w2_ref[dy + 1],                # K = 3P matmul
                            preferred_element_type=jnp.float32)
    y2 = jnp.maximum(acc * s2_ref[...] + b2_ref[...], 0.0)        # (HW, P) f32

    # --- conv3 (1x1) + bn3 ----------------------------------------------------
    y3 = jnp.dot(y2.astype(cdt), w3_ref[...],
                 preferred_element_type=jnp.float32)
    y3 = y3 * s3_ref[...] + b3_ref[...]                           # (HW, Cout_p)

    # --- residual add (re-read x late, f32) + relu ----------------------------
    out = jnp.maximum(y3 + x_ref[...].astype(jnp.float32), 0.0)
    o_ref[...] = out.astype(o_ref.dtype)


# ----------------------------------------------------------------------------
# Wrapper: layout plumbing, BN folding, channel padding, pallas_call.
# ----------------------------------------------------------------------------
def _round_up(v, m=128):
    return ((v + m - 1) // m) * m


def _fold_bn(gamma, beta, mean, var, padded_dim, eps=1e-5):
    scale = (gamma / jnp.sqrt(var + eps)).astype(jnp.float32)
    shift = (beta - mean * scale).astype(jnp.float32)
    c = gamma.shape[0]
    s = jnp.zeros((1, padded_dim), jnp.float32).at[0, :c].set(scale)
    b = jnp.zeros((1, padded_dim), jnp.float32).at[0, :c].set(shift)
    return s, b


def bottleneck_forward(x_nchw, params, *, compute_dtype=jnp.bfloat16):
    """Bottleneck forward. Input/output are NCHW (PyTorch convention)."""
    N, Cin, H, W = x_nchw.shape
    P = params["w1"].shape[1]
    Cout = params["w3"].shape[1]
    if Cin != Cout:
        raise ValueError("identity residual requires inplanes == planes * 4")
    HW = H * W

    Cin_p = _round_up(Cin)
    P_p = _round_up(P)
    Cout_p = _round_up(Cout)

    # NCHW -> lane-dense (N, H*W, C) with zero-padded channels; MXU dtype.
    x = jnp.transpose(x_nchw, (0, 2, 3, 1)).reshape(N, HW, Cin)
    x = jnp.pad(x, ((0, 0), (0, 0), (0, Cin_p - Cin))).astype(compute_dtype)

    w1 = jnp.pad(params["w1"],
                 ((0, Cin_p - Cin), (0, P_p - P))).astype(compute_dtype)
    w3 = jnp.pad(params["w3"],
                 ((0, P_p - P), (0, Cout_p - Cout))).astype(compute_dtype)
    # (3, 3, P, P) HWIO -> per-ky weight with the three kx taps stacked on K.
    w2 = jnp.pad(params["w2"], ((0, 0), (0, 0), (0, P_p - P), (0, P_p - P)))
    w2 = w2.reshape(3, 3 * P_p, P_p).astype(compute_dtype)

    s1, b1 = _fold_bn(params["g1"], params["be1"], params["m1"], params["v1"], P_p)
    s2, b2 = _fold_bn(params["g2"], params["be2"], params["m2"], params["v2"], P_p)
    s3, b3 = _fold_bn(params["g3"], params["be3"], params["m3"], params["v3"], Cout_p)

    kernel = functools.partial(_bottleneck_kernel, H=H, W=W)
    out = pl.pallas_call(
        kernel,
        out_shape=jax.ShapeDtypeStruct((N, HW, Cout_p), jnp.float32),
        grid=(N,),
        in_specs=[
            pl.BlockSpec((None, HW, Cin_p), lambda n: (n, 0, 0)),   # x
            pl.BlockSpec((Cin_p, P_p), lambda n: (0, 0)),           # w1
            pl.BlockSpec((3, 3 * P_p, P_p), lambda n: (0, 0, 0)),   # w2 (K=3P)
            pl.BlockSpec((P_p, Cout_p), lambda n: (0, 0)),          # w3
            pl.BlockSpec((1, P_p), lambda n: (0, 0)),               # s1
            pl.BlockSpec((1, P_p), lambda n: (0, 0)),               # b1
            pl.BlockSpec((1, P_p), lambda n: (0, 0)),               # s2
            pl.BlockSpec((1, P_p), lambda n: (0, 0)),               # b2
            pl.BlockSpec((1, Cout_p), lambda n: (0, 0)),            # s3
            pl.BlockSpec((1, Cout_p), lambda n: (0, 0)),            # b3
        ],
        out_specs=pl.BlockSpec((None, HW, Cout_p), lambda n: (n, 0, 0)),
        compiler_params=pltpu.CompilerParams(
            dimension_semantics=("parallel",),
            vmem_limit_bytes=48 * 1024 * 1024),
    )(x, w1, w2, w3, s1, b1, s2, b2, s3, b3)

    out = out[:, :, :Cout].reshape(N, H, W, Cout)
    return jnp.transpose(out, (0, 3, 1, 2))                        # -> NCHW


# ----------------------------------------------------------------------------
# Pure-JAX reference (gold standard, full f32 precision).
# ----------------------------------------------------------------------------
def bottleneck_reference(x_nchw, params):
    x = jnp.transpose(x_nchw, (0, 2, 3, 1)).astype(jnp.float32)    # NHWC
    hi = lax.Precision.HIGHEST

    def fold(g, be, m, v, eps=1e-5):
        s = g / jnp.sqrt(v + eps)
        return s, be - m * s

    s1, b1 = fold(params["g1"], params["be1"], params["m1"], params["v1"])
    s2, b2 = fold(params["g2"], params["be2"], params["m2"], params["v2"])
    s3, b3 = fold(params["g3"], params["be3"], params["m3"], params["v3"])

    y = jnp.einsum("nhwc,co->nhwo", x, params["w1"], precision=hi)
    y = jax.nn.relu(y * s1 + b1)
    y = lax.conv_general_dilated(
        y, params["w2"], window_strides=(1, 1), padding="SAME",
        dimension_numbers=("NHWC", "HWIO", "NHWC"), precision=hi)
    y = jax.nn.relu(y * s2 + b2)
    y = jnp.einsum("nhwc,co->nhwo", y, params["w3"], precision=hi)
    y = y * s3 + b3
    y = jax.nn.relu(y + x)
    return jnp.transpose(y, (0, 3, 1, 2))                          # NCHW


def make_params(key, inplanes, planes):
    expansion = 4
    cout = planes * expansion
    ks = jax.random.split(key, 12)
    return {
        # conv weights (no bias, as in the PyTorch module)
        "w1": 0.1 * jax.random.normal(ks[0], (inplanes, planes), jnp.float32),
        "w2": 0.1 * jax.random.normal(ks[1], (3, 3, planes, planes), jnp.float32),
        "w3": 0.1 * jax.random.normal(ks[2], (planes, cout), jnp.float32),
        # batchnorm parameters (inference mode: running stats)
        "g1": 1.0 + 0.1 * jax.random.normal(ks[3], (planes,), jnp.float32),
        "be1": 0.1 * jax.random.normal(ks[4], (planes,), jnp.float32),
        "m1": 0.1 * jax.random.normal(ks[5], (planes,), jnp.float32),
        "v1": 1.0 + 0.1 * jax.random.uniform(ks[6], (planes,), jnp.float32),
        "g2": 1.0 + 0.1 * jax.random.normal(ks[7], (planes,), jnp.float32),
        "be2": 0.1 * jax.random.normal(ks[8], (planes,), jnp.float32),
        "m2": jnp.zeros((planes,), jnp.float32),
        "v2": jnp.ones((planes,), jnp.float32),
        "g3": 1.0 + 0.1 * jax.random.normal(ks[9], (cout,), jnp.float32),
        "be3": 0.1 * jax.random.normal(ks[10], (cout,), jnp.float32),
        "m3": jnp.zeros((cout,), jnp.float32),
        "v3": jnp.ones((cout,), jnp.float32),
    }


if __name__ == "__main__":
    # Bottleneck-consistent small shapes: inplanes = planes * expansion so the
    # identity residual is valid (downsample=None, stride=1); channels chosen
    # lane-dense (Cin = Cout = 128).
    N, planes, H, W = 2, 32, 16, 16
    inplanes = planes * 4  # 128

    key = jax.random.PRNGKey(0)
    kx, kp = jax.random.split(key)
    x = jax.random.normal(kx, (N, inplanes, H, W), jnp.float32)   # NCHW
    params = make_params(kp, inplanes, planes)

    ref = jax.block_until_ready(bottleneck_reference(x, params))

    # Strict check: f32 MXU operands.
    out_f32 = jax.block_until_ready(
        bottleneck_forward(x, params, compute_dtype=jnp.float32))
    assert out_f32.shape == (N, inplanes, H, W)
    if not jnp.allclose(out_f32, ref, atol=1e-3, rtol=1e-3):
        raise AssertionError("Pallas kernel (f32) does not match reference")

    # Performance path: bf16 MXU operands, f32 accumulation & epilogues.
    out_bf16 = jax.block_until_ready(
        bottleneck_forward(x, params, compute_dtype=jnp.bfloat16))
    if not jnp.allclose(out_bf16, ref, atol=5e-2, rtol=5e-2):
        raise AssertionError("Pallas kernel (bf16) does not match reference")

    print("KERNEL_OK")
</pallas_src>

<mosaic_0001>
module attributes {stable_mosaic.version = 11 : i64} {
  func.func @_bottleneck_kernel(%arg0: i32, %arg1: memref<1x256x128xf32, #tpu.memory_space<vmem>>, %arg2: memref<128x128xf32, #tpu.memory_space<vmem>>, %arg3: memref<3x384x128xf32, #tpu.memory_space<vmem>>, %arg4: memref<128x128xf32, #tpu.memory_space<vmem>>, %arg5: memref<1x128xf32, #tpu.memory_space<vmem>>, %arg6: memref<1x128xf32, #tpu.memory_space<vmem>>, %arg7: memref<1x128xf32, #tpu.memory_space<vmem>>, %arg8: memref<1x128xf32, #tpu.memory_space<vmem>>, %arg9: memref<1x128xf32, #tpu.memory_space<vmem>>, %arg10: memref<1x128xf32, #tpu.memory_space<vmem>>, %arg11: memref<1x256x128xf32, #tpu.memory_space<vmem>>) attributes {dimension_semantics = [#tpu.dimension_semantics<parallel>], iteration_bounds = array<i64: 2>, scalar_prefetch = 0 : i64, scratch_operands = 0 : i64, tpu.core_type = #tpu.core_type<tc>, window_params = [{transform_indices = @transform_0, window_bounds = array<i64: 1, 256, 128>}, {pipeline_mode = #tpu.pipeline_mode<synchronous>, transform_indices = @transform_1, window_bounds = array<i64: 128, 128>}, {pipeline_mode = #tpu.pipeline_mode<synchronous>, transform_indices = @transform_2, window_bounds = array<i64: 3, 384, 128>}, {pipeline_mode = #tpu.pipeline_mode<synchronous>, transform_indices = @transform_3, window_bounds = array<i64: 128, 128>}, {pipeline_mode = #tpu.pipeline_mode<synchronous>, transform_indices = @transform_4, window_bounds = array<i64: 1, 128>}, {pipeline_mode = #tpu.pipeline_mode<synchronous>, transform_indices = @transform_5, window_bounds = array<i64: 1, 128>}, {pipeline_mode = #tpu.pipeline_mode<synchronous>, transform_indices = @transform_6, window_bounds = array<i64: 1, 128>}, {pipeline_mode = #tpu.pipeline_mode<synchronous>, transform_indices = @transform_7, window_bounds = array<i64: 1, 128>}, {pipeline_mode = #tpu.pipeline_mode<synchronous>, transform_indices = @transform_8, window_bounds = array<i64: 1, 128>}, {pipeline_mode = #tpu.pipeline_mode<synchronous>, transform_indices = @transform_9, window_bounds = array<i64: 1, 128>}, {transform_indices = @transform_10, window_bounds = array<i64: 1, 256, 128>}]} {
    %c0 = arith.constant 0 : index
    %c0_0 = arith.constant 0 : index
    %c0_1 = arith.constant 0 : index
    %0 = vector.load %arg1[%c0, %c0_0, %c0_1] : memref<1x256x128xf32, #tpu.memory_space<vmem>>, vector<1x256x128xf32>
    %1 = vector.shape_cast %0 : vector<1x256x128xf32> to vector<256x128xf32>
    %c0_2 = arith.constant 0 : index
    %c0_3 = arith.constant 0 : index
    %2 = vector.load %arg2[%c0_2, %c0_3] : memref<128x128xf32, #tpu.memory_space<vmem>>, vector<128x128xf32>
    %cst = arith.constant dense<0.000000e+00> : vector<256x128xf32>
    %3 = tpu.matmul %1, %2, %cst {dimension_numbers = #tpu.dot_dimension_numbers<[1], [0], [0], [1], [0, 0, 1, 1], [], []>} : vector<256x128xf32>, vector<128x128xf32>, vector<256x128xf32> -> vector<256x128xf32>
    %c0_4 = arith.constant 0 : index
    %c0_5 = arith.constant 0 : index
    %4 = vector.load %arg5[%c0_4, %c0_5] : memref<1x128xf32, #tpu.memory_space<vmem>>, vector<1x128xf32>
    %5 = vector.broadcast %4 : vector<1x128xf32> to vector<256x128xf32>
    %6 = arith.mulf %3, %5 : vector<256x128xf32>
    %c0_6 = arith.constant 0 : index
    %c0_7 = arith.constant 0 : index
    %7 = vector.load %arg6[%c0_6, %c0_7] : memref<1x128xf32, #tpu.memory_space<vmem>>, vector<1x128xf32>
    %8 = vector.broadcast %7 : vector<1x128xf32> to vector<256x128xf32>
    %9 = arith.addf %6, %8 : vector<256x128xf32>
    %cst_8 = arith.constant 0.000000e+00 : f32
    %10 = vector.broadcast %cst_8 : f32 to vector<256x128xf32>
    %11 = arith.maximumf %9, %10 : vector<256x128xf32>
    %cst_9 = arith.constant 0.000000e+00 : f32
    %12 = vector.broadcast %cst_9 : f32 to vector<24x128xf32>
    %13 = tpu.concatenate %12, %11, %12 in 0 : vector<24x128xf32>, vector<256x128xf32>, vector<24x128xf32> -> vector<304x128xf32>
    %14 = tpu.iota {dimensions = array<i32: 0>} : vector<256x1xi32>
    %c16_i32 = arith.constant 16 : i32
    %c0_i32 = arith.constant 0 : i32
    %15 = arith.cmpi eq, %c16_i32, %c0_i32 : i32
    %c1_i32 = arith.constant 1 : i32
    %16 = arith.select %15, %c1_i32, %c16_i32 : i32
    %17 = vector.broadcast %16 : i32 to vector<256x1xi32>
    %18 = arith.remsi %14, %17 : vector<256x1xi32>
    %c0_i32_10 = arith.constant 0 : i32
    %19 = vector.broadcast %c0_i32_10 : i32 to vector<256x1xi32>
    %20 = arith.cmpi ne, %18, %19 : vector<256x1xi32>
    %c0_i32_11 = arith.constant 0 : i32
    %21 = vector.broadcast %c0_i32_11 : i32 to vector<256x1xi32>
    %22 = arith.cmpi slt, %18, %21 : vector<256x1xi32>
    %c0_i32_12 = arith.constant 0 : i32
    %23 = arith.cmpi slt, %16, %c0_i32_12 : i32
    %24 = vector.broadcast %23 : i1 to vector<256x1xi1>
    %25 = vector.broadcast %24 : vector<256x1xi1> to vector<256x1xi1>
    %26 = arith.xori %22, %25 : vector<256x1xi1>
    %27 = arith.andi %26, %20 : vector<256x1xi1>
    %28 = vector.broadcast %16 : i32 to vector<256x1xi32>
    %29 = arith.addi %18, %28 : vector<256x1xi32>
    %30 = arith.select %27, %29, %18 : vector<256x1xi1>, vector<256x1xi32>
    %cst_13 = arith.constant 0.000000e+00 : f32
    %31 = vector.broadcast %cst_13 : f32 to vector<256x128xf32>
    %32 = vector.extract_strided_slice %13 {offsets = [7, 0], sizes = [256, 128], strides = [1, 1]} : vector<304x128xf32> to vector<256x128xf32>
    %c-1_i32 = arith.constant -1 : i32
    %33 = vector.broadcast %c-1_i32 : i32 to vector<256x1xi32>
    %34 = arith.addi %30, %33 : vector<256x1xi32>
    %c0_i32_14 = arith.constant 0 : i32
    %35 = vector.broadcast %c0_i32_14 : i32 to vector<256x1xi32>
    %36 = arith.cmpi sge, %34, %35 : vector<256x1xi32>
    %c-1_i32_15 = arith.constant -1 : i32
    %37 = vector.broadcast %c-1_i32_15 : i32 to vector<256x1xi32>
    %38 = arith.addi %30, %37 : vector<256x1xi32>
    %c16_i32_16 = arith.constant 16 : i32
    %39 = vector.broadcast %c16_i32_16 : i32 to vector<256x1xi32>
    %40 = arith.cmpi slt, %38, %39 : vector<256x1xi32>
    %41 = arith.andi %36, %40 : vector<256x1xi1>
    %cst_17 = arith.constant 0.000000e+00 : f32
    %42 = vector.shape_cast %41 : vector<256x1xi1> to vector<256x1xi1>
    %43 = vector.broadcast %42 : vector<256x1xi1> to vector<256x128xi1>
    %44 = vector.broadcast %cst_17 : f32 to vector<256x128xf32>
    %45 = arith.select %43, %32, %44 : vector<256x128xi1>, vector<256x128xf32>
    %46 = vector.extract_strided_slice %13 {offsets = [8, 0], sizes = [256, 128], strides = [1, 1]} : vector<304x128xf32> to vector<256x128xf32>
    %47 = vector.extract_strided_slice %13 {offsets = [9, 0], sizes = [256, 128], strides = [1, 1]} : vector<304x128xf32> to vector<256x128xf32>
    %c1_i32_18 = arith.constant 1 : i32
    %48 = vector.broadcast %c1_i32_18 : i32 to vector<256x1xi32>
    %49 = arith.addi %30, %48 : vector<256x1xi32>
    %c0_i32_19 = arith.constant 0 : i32
    %50 = vector.broadcast %c0_i32_19 : i32 to vector<256x1xi32>
    %51 = arith.cmpi sge, %49, %50 : vector<256x1xi32>
    %c1_i32_20 = arith.constant 1 : i32
    %52 = vector.broadcast %c1_i32_20 : i32 to vector<256x1xi32>
    %53 = arith.addi %30, %52 : vector<256x1xi32>
    %c16_i32_21 = arith.constant 16 : i32
    %54 = vector.broadcast %c16_i32_21 : i32 to vector<256x1xi32>
    %55 = arith.cmpi slt, %53, %54 : vector<256x1xi32>
    %56 = arith.andi %51, %55 : vector<256x1xi1>
    %cst_22 = arith.constant 0.000000e+00 : f32
    %57 = vector.shape_cast %56 : vector<256x1xi1> to vector<256x1xi1>
    %58 = vector.broadcast %57 : vector<256x1xi1> to vector<256x128xi1>
    %59 = vector.broadcast %cst_22 : f32 to vector<256x128xf32>
    %60 = arith.select %58, %47, %59 : vector<256x128xi1>, vector<256x128xf32>
    %61 = tpu.concatenate %45, %46, %60 in 1 : vector<256x128xf32>, vector<256x128xf32>, vector<256x128xf32> -> vector<256x384xf32>
    %c0_23 = arith.constant 0 : index
    %c0_24 = arith.constant 0 : index
    %c0_25 = arith.constant 0 : index
    %62 = vector.load %arg3[%c0_23, %c0_24, %c0_25] : memref<3x384x128xf32, #tpu.memory_space<vmem>>, vector<1x384x128xf32>
    %63 = vector.shape_cast %62 : vector<1x384x128xf32> to vector<384x128xf32>
    %cst_26 = arith.constant dense<0.000000e+00> : vector<256x128xf32>
    %64 = tpu.matmul %61, %63, %cst_26 {dimension_numbers = #tpu.dot_dimension_numbers<[1], [0], [0], [1], [0, 0, 1, 1], [], []>} : vector<256x384xf32>, vector<384x128xf32>, vector<256x128xf32> -> vector<256x128xf32>
    %65 = arith.addf %31, %64 : vector<256x128xf32>
    %66 = vector.extract_strided_slice %13 {offsets = [23, 0], sizes = [256, 128], strides = [1, 1]} : vector<304x128xf32> to vector<256x128xf32>
    %c-1_i32_27 = arith.constant -1 : i32
    %67 = vector.broadcast %c-1_i32_27 : i32 to vector<256x1xi32>
    %68 = arith.addi %30, %67 : vector<256x1xi32>
    %c0_i32_28 = arith.constant 0 : i32
    %69 = vector.broadcast %c0_i32_28 : i32 to vector<256x1xi32>
    %70 = arith.cmpi sge, %68, %69 : vector<256x1xi32>
    %c-1_i32_29 = arith.constant -1 : i32
    %71 = vector.broadcast %c-1_i32_29 : i32 to vector<256x1xi32>
    %72 = arith.addi %30, %71 : vector<256x1xi32>
    %c16_i32_30 = arith.constant 16 : i32
    %73 = vector.broadcast %c16_i32_30 : i32 to vector<256x1xi32>
    %74 = arith.cmpi slt, %72, %73 : vector<256x1xi32>
    %75 = arith.andi %70, %74 : vector<256x1xi1>
    %cst_31 = arith.constant 0.000000e+00 : f32
    %76 = vector.shape_cast %75 : vector<256x1xi1> to vector<256x1xi1>
    %77 = vector.broadcast %76 : vector<256x1xi1> to vector<256x128xi1>
    %78 = vector.broadcast %cst_31 : f32 to vector<256x128xf32>
    %79 = arith.select %77, %66, %78 : vector<256x128xi1>, vector<256x128xf32>
    %80 = vector.extract_strided_slice %13 {offsets = [24, 0], sizes = [256, 128], strides = [1, 1]} : vector<304x128xf32> to vector<256x128xf32>
    %81 = vector.extract_strided_slice %13 {offsets = [25, 0], sizes = [256, 128], strides = [1, 1]} : vector<304x128xf32> to vector<256x128xf32>
    %c1_i32_32 = arith.constant 1 : i32
    %82 = vector.broadcast %c1_i32_32 : i32 to vector<256x1xi32>
    %83 = arith.addi %30, %82 : vector<256x1xi32>
    %c0_i32_33 = arith.constant 0 : i32
    %84 = vector.broadcast %c0_i32_33 : i32 to vector<256x1xi32>
    %85 = arith.cmpi sge, %83, %84 : vector<256x1xi32>
    %c1_i32_34 = arith.constant 1 : i32
    %86 = vector.broadcast %c1_i32_34 : i32 to vector<256x1xi32>
    %87 = arith.addi %30, %86 : vector<256x1xi32>
    %c16_i32_35 = arith.constant 16 : i32
    %88 = vector.broadcast %c16_i32_35 : i32 to vector<256x1xi32>
    %89 = arith.cmpi slt, %87, %88 : vector<256x1xi32>
    %90 = arith.andi %85, %89 : vector<256x1xi1>
    %cst_36 = arith.constant 0.000000e+00 : f32
    %91 = vector.shape_cast %90 : vector<256x1xi1> to vector<256x1xi1>
    %92 = vector.broadcast %91 : vector<256x1xi1> to vector<256x128xi1>
    %93 = vector.broadcast %cst_36 : f32 to vector<256x128xf32>
    %94 = arith.select %92, %81, %93 : vector<256x128xi1>, vector<256x128xf32>
    %95 = tpu.concatenate %79, %80, %94 in 1 : vector<256x128xf32>, vector<256x128xf32>, vector<256x128xf32> -> vector<256x384xf32>
    %c1 = arith.constant 1 : index
    %c0_37 = arith.constant 0 : index
    %c0_38 = arith.constant 0 : index
    %96 = vector.load %arg3[%c1, %c0_37, %c0_38] : memref<3x384x128xf32, #tpu.memory_space<vmem>>, vector<1x384x128xf32>
    %97 = vector.shape_cast %96 : vector<1x384x128xf32> to vector<384x128xf32>
    %cst_39 = arith.constant dense<0.000000e+00> : vector<256x128xf32>
    %98 = tpu.matmul %95, %97, %cst_39 {dimension_numbers = #tpu.dot_dimension_numbers<[1], [0], [0], [1], [0, 0, 1, 1], [], []>} : vector<256x384xf32>, vector<384x128xf32>, vector<256x128xf32> -> vector<256x128xf32>
    %99 = arith.addf %65, %98 : vector<256x128xf32>
    %100 = vector.extract_strided_slice %13 {offsets = [39, 0], sizes = [256, 128], strides = [1, 1]} : vector<304x128xf32> to vector<256x128xf32>
    %c-1_i32_40 = arith.constant -1 : i32
    %101 = vector.broadcast %c-1_i32_40 : i32 to vector<256x1xi32>
    %102 = arith.addi %30, %101 : vector<256x1xi32>
    %c0_i32_41 = arith.constant 0 : i32
    %103 = vector.broadcast %c0_i32_41 : i32 to vector<256x1xi32>
    %104 = arith.cmpi sge, %102, %103 : vector<256x1xi32>
    %c-1_i32_42 = arith.constant -1 : i32
    %105 = vector.broadcast %c-1_i32_42 : i32 to vector<256x1xi32>
    %106 = arith.addi %30, %105 : vector<256x1xi32>
    %c16_i32_43 = arith.constant 16 : i32
    %107 = vector.broadcast %c16_i32_43 : i32 to vector<256x1xi32>
    %108 = arith.cmpi slt, %106, %107 : vector<256x1xi32>
    %109 = arith.andi %104, %108 : vector<256x1xi1>
    %cst_44 = arith.constant 0.000000e+00 : f32
    %110 = vector.shape_cast %109 : vector<256x1xi1> to vector<256x1xi1>
    %111 = vector.broadcast %110 : vector<256x1xi1> to vector<256x128xi1>
    %112 = vector.broadcast %cst_44 : f32 to vector<256x128xf32>
    %113 = arith.select %111, %100, %112 : vector<256x128xi1>, vector<256x128xf32>
    %114 = vector.extract_strided_slice %13 {offsets = [40, 0], sizes = [256, 128], strides = [1, 1]} : vector<304x128xf32> to vector<256x128xf32>
    %115 = vector.extract_strided_slice %13 {offsets = [41, 0], sizes = [256, 128], strides = [1, 1]} : vector<304x128xf32> to vector<256x128xf32>
    %c1_i32_45 = arith.constant 1 : i32
    %116 = vector.broadcast %c1_i32_45 : i32 to vector<256x1xi32>
    %117 = arith.addi %30, %116 : vector<256x1xi32>
    %c0_i32_46 = arith.constant 0 : i32
    %118 = vector.broadcast %c0_i32_46 : i32 to vector<256x1xi32>
    %119 = arith.cmpi sge, %117, %118 : vector<256x1xi32>
    %c1_i32_47 = arith.constant 1 : i32
    %120 = vector.broadcast %c1_i32_47 : i32 to vector<256x1xi32>
    %121 = arith.addi %30, %120 : vector<256x1xi32>
    %c16_i32_48 = arith.constant 16 : i32
    %122 = vector.broadcast %c16_i32_48 : i32 to vector<256x1xi32>
    %123 = arith.cmpi slt, %121, %122 : vector<256x1xi32>
    %124 = arith.andi %119, %123 : vector<256x1xi1>
    %cst_49 = arith.constant 0.000000e+00 : f32
    %125 = vector.shape_cast %124 : vector<256x1xi1> to vector<256x1xi1>
    %126 = vector.broadcast %125 : vector<256x1xi1> to vector<256x128xi1>
    %127 = vector.broadcast %cst_49 : f32 to vector<256x128xf32>
    %128 = arith.select %126, %115, %127 : vector<256x128xi1>, vector<256x128xf32>
    %129 = tpu.concatenate %113, %114, %128 in 1 : vector<256x128xf32>, vector<256x128xf32>, vector<256x128xf32> -> vector<256x384xf32>
    %c2 = arith.constant 2 : index
    %c0_50 = arith.constant 0 : index
    %c0_51 = arith.constant 0 : index
    %130 = vector.load %arg3[%c2, %c0_50, %c0_51] : memref<3x384x128xf32, #tpu.memory_space<vmem>>, vector<1x384x128xf32>
    %131 = vector.shape_cast %130 : vector<1x384x128xf32> to vector<384x128xf32>
    %cst_52 = arith.constant dense<0.000000e+00> : vector<256x128xf32>
    %132 = tpu.matmul %129, %131, %cst_52 {dimension_numbers = #tpu.dot_dimension_numbers<[1], [0], [0], [1], [0, 0, 1, 1], [], []>} : vector<256x384xf32>, vector<384x128xf32>, vector<256x128xf32> -> vector<256x128xf32>
    %133 = arith.addf %99, %132 : vector<256x128xf32>
    %c0_53 = arith.constant 0 : index
    %c0_54 = arith.constant 0 : index
    %134 = vector.load %arg7[%c0_53, %c0_54] : memref<1x128xf32, #tpu.memory_space<vmem>>, vector<1x128xf32>
    %135 = vector.broadcast %134 : vector<1x128xf32> to vector<256x128xf32>
    %136 = arith.mulf %133, %135 : vector<256x128xf32>
    %c0_55 = arith.constant 0 : index
    %c0_56 = arith.constant 0 : index
    %137 = vector.load %arg8[%c0_55, %c0_56] : memref<1x128xf32, #tpu.memory_space<vmem>>, vector<1x128xf32>
    %138 = vector.broadcast %137 : vector<1x128xf32> to vector<256x128xf32>
    %139 = arith.addf %136, %138 : vector<256x128xf32>
    %cst_57 = arith.constant 0.000000e+00 : f32
    %140 = vector.broadcast %cst_57 : f32 to vector<256x128xf32>
    %141 = arith.maximumf %139, %140 : vector<256x128xf32>
    %c0_58 = arith.constant 0 : index
    %c0_59 = arith.constant 0 : index
    %142 = vector.load %arg4[%c0_58, %c0_59] : memref<128x128xf32, #tpu.memory_space<vmem>>, vector<128x128xf32>
    %cst_60 = arith.constant dense<0.000000e+00> : vector<256x128xf32>
    %143 = tpu.matmul %141, %142, %cst_60 {dimension_numbers = #tpu.dot_dimension_numbers<[1], [0], [0], [1], [0, 0, 1, 1], [], []>} : vector<256x128xf32>, vector<128x128xf32>, vector<256x128xf32> -> vector<256x128xf32>
    %c0_61 = arith.constant 0 : index
    %c0_62 = arith.constant 0 : index
    %144 = vector.load %arg9[%c0_61, %c0_62] : memref<1x128xf32, #tpu.memory_space<vmem>>, vector<1x128xf32>
    %145 = vector.broadcast %144 : vector<1x128xf32> to vector<256x128xf32>
    %146 = arith.mulf %143, %145 : vector<256x128xf32>
    %c0_63 = arith.constant 0 : index
    %c0_64 = arith.constant 0 : index
    %147 = vector.load %arg10[%c0_63, %c0_64] : memref<1x128xf32, #tpu.memory_space<vmem>>, vector<1x128xf32>
    %148 = vector.broadcast %147 : vector<1x128xf32> to vector<256x128xf32>
    %149 = arith.addf %146, %148 : vector<256x128xf32>
    %c0_65 = arith.constant 0 : index
    %c0_66 = arith.constant 0 : index
    %c0_67 = arith.constant 0 : index
    %150 = vector.load %arg1[%c0_65, %c0_66, %c0_67] : memref<1x256x128xf32, #tpu.memory_space<vmem>>, vector<1x256x128xf32>
    %151 = vector.shape_cast %150 : vector<1x256x128xf32> to vector<256x128xf32>
    %152 = arith.addf %149, %151 : vector<256x128xf32>
    %cst_68 = arith.constant 0.000000e+00 : f32
    %153 = vector.broadcast %cst_68 : f32 to vector<256x128xf32>
    %154 = arith.maximumf %152, %153 : vector<256x128xf32>
    %c0_69 = arith.constant 0 : index
    %c0_70 = arith.constant 0 : index
    %c0_71 = arith.constant 0 : index
    %155 = vector.load %arg11[%c0_69, %c0_70, %c0_71] : memref<1x256x128xf32, #tpu.memory_space<vmem>>, vector<1x256x128xf32>
    %156 = vector.shape_cast %155 : vector<1x256x128xf32> to vector<256x128xf32>
    %157 = vector.shape_cast %154 : vector<256x128xf32> to vector<1x256x128xf32>
    tpu.vector_store %arg11[%c0_69, %c0_70, %c0_71], %157 {strides = array<i32>} : memref<1x256x128xf32, #tpu.memory_space<vmem>>, vector<1x256x128xf32>,
    return
  }
  func.func @transform_0(%arg0: i32) -> (i32, i32, i32) {
    %c0_i32 = arith.constant 0 : i32
    %c0_i32_0 = arith.constant 0 : i32
    %c0_i32_1 = arith.constant 0 : i32
    return %arg0, %c0_i32, %c0_i32_0 : i32, i32, i32
  }
  func.func @transform_1(%arg0: i32) -> (i32, i32) {
    %c0_i32 = arith.constant 0 : i32
    %c0_i32_0 = arith.constant 0 : i32
    %c0_i32_1 = arith.constant 0 : i32
    return %c0_i32, %c0_i32_0 : i32, i32
  }
  func.func @transform_2(%arg0: i32) -> (i32, i32, i32) {
    %c0_i32 = arith.constant 0 : i32
    %c0_i32_0 = arith.constant 0 : i32
    %c0_i32_1 = arith.constant 0 : i32
    %c0_i32_2 = arith.constant 0 : i32
    return %c0_i32, %c0_i32_0, %c0_i32_1 : i32, i32, i32
  }
  func.func @transform_3(%arg0: i32) -> (i32, i32) {
    %c0_i32 = arith.constant 0 : i32
    %c0_i32_0 = arith.constant 0 : i32
    %c0_i32_1 = arith.constant 0 : i32
    return %c0_i32, %c0_i32_0 : i32, i32
  }
  func.func @transform_4(%arg0: i32) -> (i32, i32) {
    %c0_i32 = arith.constant 0 : i32
    %c0_i32_0 = arith.constant 0 : i32
    %c0_i32_1 = arith.constant 0 : i32
    return %c0_i32, %c0_i32_0 : i32, i32
  }
  func.func @transform_5(%arg0: i32) -> (i32, i32) {
    %c0_i32 = arith.constant 0 : i32
    %c0_i32_0 = arith.constant 0 : i32
    %c0_i32_1 = arith.constant 0 : i32
    return %c0_i32, %c0_i32_0 : i32, i32
  }
  func.func @transform_6(%arg0: i32) -> (i32, i32) {
    %c0_i32 = arith.constant 0 : i32
    %c0_i32_0 = arith.constant 0 : i32
    %c0_i32_1 = arith.constant 0 : i32
    return %c0_i32, %c0_i32_0 : i32, i32
  }
  func.func @transform_7(%arg0: i32) -> (i32, i32) {
    %c0_i32 = arith.constant 0 : i32
    %c0_i32_0 = arith.constant 0 : i32
    %c0_i32_1 = arith.constant 0 : i32
    return %c0_i32, %c0_i32_0 : i32, i32
  }
  func.func @transform_8(%arg0: i32) -> (i32, i32) {
    %c0_i32 = arith.constant 0 : i32
    %c0_i32_0 = arith.constant 0 : i32
    %c0_i32_1 = arith.constant 0 : i32
    return %c0_i32, %c0_i32_0 : i32, i32
  }
  func.func @transform_9(%arg0: i32) -> (i32, i32) {
    %c0_i32 = arith.constant 0 : i32
    %c0_i32_0 = arith.constant 0 : i32
    %c0_i32_1 = arith.constant 0 : i32
    return %c0_i32, %c0_i32_0 : i32, i32
  }
  func.func @transform_10(%arg0: i32) -> (i32, i32, i32) {
    %c0_i32 = arith.constant 0 : i32
    %c0_i32_0 = arith.constant 0 : i32
    %c0_i32_1 = arith.constant 0 : i32
    return %arg0, %c0_i32, %c0_i32_0 : i32, i32, i32
  }
}

</mosaic_0001>

<llo_original>
// kernel: tpu_custom_call.1
$region0: #{tpu_custom_call.1}
  #allocation0 [shape = 'u32[]', space=smem, size = 0x4, offset = 0x4, fixed_abs, tag = 'smem constant byte address 0x4 - core index']
  #allocation1 [shape = 'u32[144,128]{1,0:T(1,128)}', space=vmem, size = 0x12000, scoped, tag = 'internal scratch']
  %s0 = inlined_call_operand.hbm [shape: f32[2,256,128], index: 0, kind: input, shape index: {}]
  %s1 = inlined_call_operand.hbm [shape: f32[128,128], index: 1, kind: input, shape index: {}]
  %s2 = inlined_call_operand.hbm [shape: f32[3,384,128], index: 2, kind: input, shape index: {}]
  %s3 = inlined_call_operand.hbm [shape: f32[128,128], index: 3, kind: input, shape index: {}]
  %s4 = inlined_call_operand.vmem [shape: f32[1,128], index: 4, kind: input, shape index: {}]
  %s5 = inlined_call_operand.vmem [shape: f32[1,128], index: 5, kind: input, shape index: {}]
  %s6 = inlined_call_operand.vmem [shape: f32[1,128], index: 6, kind: input, shape index: {}]
  %s7 = inlined_call_operand.vmem [shape: f32[1,128], index: 7, kind: input, shape index: {}]
  %s8 = inlined_call_operand.vmem [shape: f32[1,128], index: 8, kind: input, shape index: {}]
  %s9 = inlined_call_operand.vmem [shape: f32[1,128], index: 9, kind: input, shape index: {}]
  %s10 = inlined_call_operand.hbm [shape: f32[2,256,128], index: 10, kind: output, shape index: {}]
  %s11 = sld [smem:[#allocation0]]
  $region89: #{tpu_custom_call.1} parent=0
    _
  %s13 = ssub.s32 1, %s11
  %s14 = scalar_select 0, %s13, %s11
  $region1: #{tpu_custom_call.1} parent=0
    #allocation2 [shape = 'u8[262144]{0}', space=vmem, size = 0x40000, scoped, tag = 'input window, operand 0']
    #allocation3 [shape = 's32[2]{0}', space=sflag, size = 0x8, scoped, tag = 'scoped memory for tpu_custom_call.1']
    #allocation4 [shape = 's32[2]{0}', space=sflag, size = 0x8, scoped, tag = 'scoped memory for tpu_custom_call.1']
    #allocation5 [shape = 'u8[65536]{0}', space=vmem, size = 0x10000, scoped, tag = 'input window, operand 1, single buffered']
    #allocation6 [shape = 's32[1]{0}', space=sflag, size = 0x4, scoped, tag = 'scoped memory for tpu_custom_call.1']
    #allocation7 [shape = 'u8[589824]{0}', space=vmem, size = 0x90000, scoped, tag = 'input window, operand 2, single buffered']
    #allocation8 [shape = 'u8[65536]{0}', space=vmem, size = 0x10000, scoped, tag = 'input window, operand 3, single buffered']
    #allocation9 [shape = 's32[1]{0}', space=sflag, size = 0x4, scoped, tag = 'scoped memory for tpu_custom_call.1']
    #allocation10 [shape = 'u8[262144]{0}', space=vmem, size = 0x40000, scoped, tag = 'output window, operand 0']
    %15 = vsyncpa [#allocation3], 0
    %s16 = scalar_lea.sflag [#allocation3], 1
    %17 = vsyncpa %s16, 0
    %18 = vsyncpa [#allocation6], 0
    %19 = vsyncpa [#allocation9], 0
    %20 = vsyncpa [#allocation4], 0
    %s21 = scalar_lea.sflag [#allocation4], 1
    %22 = vsyncpa %s21, 0
    loop: start=0, step=1, limit=4
    $region2: #{tpu_custom_call.1} parent=1 // loop_pre_header
      _
    $region3: #{tpu_custom_call.1} parent=1 // loop_header
      %s24 = sphi 0, %s28
      %p25 = scmp.ge.s32.totalorder %s24, 4
      %s34 = sphi 0, %s36
      %s37 = sphi 0, %s34
      %s38 = sphi 0, %s37
      %s54 = sphi 0, %s38
      %s58 = sphi 0, %s58
      %s60 = sphi 0, %s58
      %s61 = sphi 0, %s60
      %s75 = sphi 0, %s61
      %s79 = sphi 0, %s79
      %s81 = sphi 0, %s79
      %s82 = sphi 0, %s81
      %s96 = sphi 0, %s82
      %s100 = sphi 0, %s100
      %s102 = sphi 0, %s100
      %s103 = sphi 0, %s102
      %s117 = sphi 0, %s103
      %s121 = sphi 0, %s121
      %s123 = sphi 0, %s121
      %s124 = sphi 0, %s123
      %s138 = sphi 0, %s124
      %s142 = sphi 0, %s142
      %s144 = sphi 0, %s142
      %s145 = sphi 0, %s144
      %s159 = sphi 0, %s145
      %s163 = sphi 0, %s163
      %s165 = sphi 0, %s163
      %s166 = sphi 0, %s165
      %s180 = sphi 0, %s166
      %s184 = sphi 0, %s184
      %s186 = sphi 0, %s184
      %s187 = sphi 0, %s186
      %s201 = sphi 0, %s187
      %s205 = sphi 0, %s205
      %s207 = sphi 0, %s205
      %s208 = sphi 0, %s207
      %s222 = sphi 0, %s208
      %s226 = sphi 0, %s226
      %s228 = sphi 0, %s226
      %s229 = sphi 0, %s228
      %s243 = sphi 0, %s229
      %s249 = sphi 0, %s251
      %s252 = sphi 0, %s249
      %s253 = sphi 0, %s252
      %s269 = sphi 0, %s253
    $region4: #{tpu_custom_call.1} parent=1 // loop_header_branch
      %27 = sbr.rel (%p25) target = $region8
    $region5: #{tpu_custom_call.1} parent=1 // loop_body
      %s29 = ssub.s32 %s24, 1
      %s30 = ssub.s32 %s24, 2
      %s31 = sadd.s32 %s24, 1
      %s32 = ssub.s32 %s24, %s31
      %p33 = scmp.eq.s32.totalorder %s32, 0
      %s35 = sadd.s32 %s34, 1
      %s36 = scalar_select %p33, %s34, %s35
      %p39 = pneg %p33
      %p40 = scmp.eq.s32.totalorder %s24, 1
      %p41 = por %p39, %p40
      %p42 = scmp.ne.s32.totalorder %s34, %s37
      %p43 = scmp.eq.s32.totalorder %s24, 0
      %p44 = por %p42, %p43
      %p45 = scmp.ne.s32.totalorder %s34, %s37
      %p46 = scmp.eq.s32.totalorder %s29, 1
      %p47 = por %p45, %p46
      %p48 = scmp.ne.s32.totalorder %s37, %s38
      %p49 = scmp.eq.s32.totalorder %s29, 0
      %p50 = por %p48, %p49
      %p51 = scmp.ne.s32.totalorder %s37, %s38
      %p52 = scmp.eq.s32.totalorder %s30, 1
      %p53 = por %p51, %p52
      %p55 = scmp.ne.s32.totalorder %s38, %s54
      %p56 = scmp.eq.s32.totalorder %s30, 0
      %p57 = por %p55, %p56
      %s59 = sadd.s32 %s58, 1
      %p62 = scmp.eq.s32.totalorder %s24, 1
      %p63 = scmp.ne.s32.totalorder %s58, %s60
      %p64 = scmp.eq.s32.totalorder %s24, 0
      %p65 = por %p63, %p64
      %p66 = scmp.ne.s32.totalorder %s58, %s60
      %p67 = scmp.eq.s32.totalorder %s29, 1
      %p68 = por %p66, %p67
      %p69 = scmp.ne.s32.totalorder %s60, %s61
      %p70 = scmp.eq.s32.totalorder %s29, 0
      %p71 = por %p69, %p70
      %p72 = scmp.ne.s32.totalorder %s60, %s61
      %p73 = scmp.eq.s32.totalorder %s30, 1
      %p74 = por %p72, %p73
      %p76 = scmp.ne.s32.totalorder %s61, %s75
      %p77 = scmp.eq.s32.totalorder %s30, 0
      %p78 = por %p76, %p77
      %s80 = sadd.s32 %s79, 1
      %p83 = scmp.eq.s32.totalorder %s24, 1
      %p84 = scmp.ne.s32.totalorder %s79, %s81
      %p85 = scmp.eq.s32.totalorder %s24, 0
      %p86 = por %p84, %p85
      %p87 = scmp.ne.s32.totalorder %s79, %s81
      %p88 = scmp.eq.s32.totalorder %s29, 1
      %p89 = por %p87, %p88
      %p90 = scmp.ne.s32.totalorder %s81, %s82
      %p91 = scmp.eq.s32.totalorder %s29, 0
      %p92 = por %p90, %p91
      %p93 = scmp.ne.s32.totalorder %s81, %s82
      %p94 = scmp.eq.s32.totalorder %s30, 1
      %p95 = por %p93, %p94
      %p97 = scmp.ne.s32.totalorder %s82, %s96
      %p98 = scmp.eq.s32.totalorder %s30, 0
      %p99 = por %p97, %p98
      %s101 = sadd.s32 %s100, 1
      %p104 = scmp.eq.s32.totalorder %s24, 1
      %p105 = scmp.ne.s32.totalorder %s100, %s102
      %p106 = scmp.eq.s32.totalorder %s24, 0
      %p107 = por %p105, %p106
      %p108 = scmp.ne.s32.totalorder %s100, %s102
      %p109 = scmp.eq.s32.totalorder %s29, 1
      %p110 = por %p108, %p109
      %p111 = scmp.ne.s32.totalorder %s102, %s103
      %p112 = scmp.eq.s32.totalorder %s29, 0
      %p113 = por %p111, %p112
      %p114 = scmp.ne.s32.totalorder %s102, %s103
      %p115 = scmp.eq.s32.totalorder %s30, 1
      %p116 = por %p114, %p115
      %p118 = scmp.ne.s32.totalorder %s103, %s117
      %p119 = scmp.eq.s32.totalorder %s30, 0
      %p120 = por %p118, %p119
      %s122 = sadd.s32 %s121, 1
      %p125 = scmp.eq.s32.totalorder %s24, 1
      %p126 = scmp.ne.s32.totalorder %s121, %s123
      %p127 = scmp.eq.s32.totalorder %s24, 0
      %p128 = por %p126, %p127
      %p129 = scmp.ne.s32.totalorder %s121, %s123
      %p130 = scmp.eq.s32.totalorder %s29, 1
      %p131 = por %p129, %p130
      %p132 = scmp.ne.s32.totalorder %s123, %s124
      %p133 = scmp.eq.s32.totalorder %s29, 0
      %p134 = por %p132, %p133
      %p135 = scmp.ne.s32.totalorder %s123, %s124
      %p136 = scmp.eq.s32.totalorder %s30, 1
      %p137 = por %p135, %p136
      %p139 = scmp.ne.s32.totalorder %s124, %s138
      %p140 = scmp.eq.s32.totalorder %s30, 0
      %p141 = por %p139, %p140
      %s143 = sadd.s32 %s142, 1
      %p146 = scmp.eq.s32.totalorder %s24, 1
      %p147 = scmp.ne.s32.totalorder %s142, %s144
      %p148 = scmp.eq.s32.totalorder %s24, 0
      %p149 = por %p147, %p148
      %p150 = scmp.ne.s32.totalorder %s142, %s144
      %p151 = scmp.eq.s32.totalorder %s29, 1
      %p152 = por %p150, %p151
      %p153 = scmp.ne.s32.totalorder %s144, %s145
      %p154 = scmp.eq.s32.totalorder %s29, 0
      %p155 = por %p153, %p154
      %p156 = scmp.ne.s32.totalorder %s144, %s145
      %p157 = scmp.eq.s32.totalorder %s30, 1
      %p158 = por %p156, %p157
      %p160 = scmp.ne.s32.totalorder %s145, %s159
      %p161 = scmp.eq.s32.totalorder %s30, 0
      %p162 = por %p160, %p161
      %s164 = sadd.s32 %s163, 1
      %p167 = scmp.eq.s32.totalorder %s24, 1
      %p168 = scmp.ne.s32.totalorder %s163, %s165
      %p169 = scmp.eq.s32.totalorder %s24, 0
      %p170 = por %p168, %p169
      %p171 = scmp.ne.s32.totalorder %s163, %s165
      %p172 = scmp.eq.s32.totalorder %s29, 1
      %p173 = por %p171, %p172
      %p174 = scmp.ne.s32.totalorder %s165, %s166
      %p175 = scmp.eq.s32.totalorder %s29, 0
      %p176 = por %p174, %p175
      %p177 = scmp.ne.s32.totalorder %s165, %s166
      %p178 = scmp.eq.s32.totalorder %s30, 1
      %p179 = por %p177, %p178
      %p181 = scmp.ne.s32.totalorder %s166, %s180
      %p182 = scmp.eq.s32.totalorder %s30, 0
      %p183 = por %p181, %p182
      %s185 = sadd.s32 %s184, 1
      %p188 = scmp.eq.s32.totalorder %s24, 1
      %p189 = scmp.ne.s32.totalorder %s184, %s186
      %p190 = scmp.eq.s32.totalorder %s24, 0
      %p191 = por %p189, %p190
      %p192 = scmp.ne.s32.totalorder %s184, %s186
      %p193 = scmp.eq.s32.totalorder %s29, 1
      %p194 = por %p192, %p193
      %p195 = scmp.ne.s32.totalorder %s186, %s187
      %p196 = scmp.eq.s32.totalorder %s29, 0
      %p197 = por %p195, %p196
      %p198 = scmp.ne.s32.totalorder %s186, %s187
      %p199 = scmp.eq.s32.totalorder %s30, 1
      %p200 = por %p198, %p199
      %p202 = scmp.ne.s32.totalorder %s187, %s201
      %p203 = scmp.eq.s32.totalorder %s30, 0
      %p204 = por %p202, %p203
      %s206 = sadd.s32 %s205, 1
      %p209 = scmp.eq.s32.totalorder %s24, 1
      %p210 = scmp.ne.s32.totalorder %s205, %s207
      %p211 = scmp.eq.s32.totalorder %s24, 0
      %p212 = por %p210, %p211
      %p213 = scmp.ne.s32.totalorder %s205, %s207
      %p214 = scmp.eq.s32.totalorder %s29, 1
      %p215 = por %p213, %p214
      %p216 = scmp.ne.s32.totalorder %s207, %s208
      %p217 = scmp.eq.s32.totalorder %s29, 0
      %p218 = por %p216, %p217
      %p219 = scmp.ne.s32.totalorder %s207, %s208
      %p220 = scmp.eq.s32.totalorder %s30, 1
      %p221 = por %p219, %p220
      %p223 = scmp.ne.s32.totalorder %s208, %s222
      %p224 = scmp.eq.s32.totalorder %s30, 0
      %p225 = por %p223, %p224
      %s227 = sadd.s32 %s226, 1
      %p230 = scmp.eq.s32.totalorder %s24, 1
      %p231 = scmp.ne.s32.totalorder %s226, %s228
      %p232 = scmp.eq.s32.totalorder %s24, 0
      %p233 = por %p231, %p232
      %p234 = scmp.ne.s32.totalorder %s226, %s228
      %p235 = scmp.eq.s32.totalorder %s29, 1
      %p236 = por %p234, %p235
      %p237 = scmp.ne.s32.totalorder %s228, %s229
      %p238 = scmp.eq.s32.totalorder %s29, 0
      %p239 = por %p237, %p238
      %p240 = scmp.ne.s32.totalorder %s228, %s229
      %p241 = scmp.eq.s32.totalorder %s30, 1
      %p242 = por %p240, %p241
      %p244 = scmp.ne.s32.totalorder %s229, %s243
      %p245 = scmp.eq.s32.totalorder %s30, 0
      %p246 = por %p244, %p245
      %s247 = ssub.s32 %s24, %s31
      %p248 = scmp.eq.s32.totalorder %s247, 0
      %s250 = sadd.s32 %s249, 1
      %s251 = scalar_select %p248, %s249, %s250
      %p254 = pneg %p248
      %p255 = scmp.eq.s32.totalorder %s24, 1
      %p256 = por %p254, %p255
      %p257 = scmp.ne.s32.totalorder %s249, %s252
      %p258 = scmp.eq.s32.totalorder %s24, 0
      %p259 = por %p257, %p258
      %p260 = scmp.ne.s32.totalorder %s249, %s252
      %p261 = scmp.eq.s32.totalorder %s29, 1
      %p262 = por %p260, %p261
      %p263 = scmp.ne.s32.totalorder %s252, %s253
      %p264 = scmp.eq.s32.totalorder %s29, 0
      %p265 = por %p263, %p264
      %p266 = scmp.ne.s32.totalorder %s252, %s253
      %p267 = scmp.eq.s32.totalorder %s30, 1
      %p268 = por %p266, %p267
      %p270 = scmp.ne.s32.totalorder %s253, %s269
      %p271 = scmp.eq.s32.totalorder %s30, 0
      %p272 = por %p270, %p271
      %p273 = scmp.le.s32.totalorder 1, %s24
      %p274 = scmp.lt.s32.totalorder %s24, 3
      %p275 = pnand %p273, %p274
      %p276 = pneg %p275
      // Predicated region
      $region9: #{tpu_custom_call.1} parent=5 // pred_check
        _
      $region10: #{tpu_custom_call.1} parent=5 // pred_check_branch
        %278 = sbr.rel (%p275) target = $region12
      $region11: #{tpu_custom_call.1} parent=5 // pred_region
        %s279 = ssub.s32 %s24, 1
        // Predicated region
        $region13: #{tpu_custom_call.1} parent=11 // pred_check
          %p280 = pneg %p71
        $region14: #{tpu_custom_call.1} parent=11 // pred_check_branch
          %282 = sbr.rel (%p280) target = $region16
        $region15: #{tpu_custom_call.1} parent=11 // pred_region
          %s284 = ssub.s32 2048, 2048
          %285 = vsyncadd [#allocation6], %s284
          %s286 = sshll.u32 [#allocation5], 4
          %s287 = int_to_ptr.vmem [resolvable:$true] %s286
          %292 = dma.hbm_to_vmem [thread:$0]  %s1, 2048, %s287, [#allocation6], 128, 128, 8
        $region16: #{tpu_custom_call.1} parent=11 // pred_fallthru
          _
        // Predicated region
        $region17: #{tpu_custom_call.1} parent=11 // pred_check
          %p293 = pneg %p92
        $region18: #{tpu_custom_call.1} parent=11 // pred_check_branch
          %295 = sbr.rel (%p293) target = $region20
        $region19: #{tpu_custom_call.1} parent=11 // pred_region
          %s297 = ssub.s32 18432, 18432
          %298 = vsyncadd [#allocation6], %s297
          %s299 = sshll.u32 [#allocation7], 4
          %s300 = int_to_ptr.vmem [resolvable:$true] %s299
          %305 = dma.hbm_to_vmem [thread:$0]  %s2, 18432, %s300, [#allocation6], 128, 128, 8
        $region20: #{tpu_custom_call.1} parent=11 // pred_fallthru
          _
        // Predicated region
        $region21: #{tpu_custom_call.1} parent=11 // pred_check
          %p306 = pneg %p113
        $region22: #{tpu_custom_call.1} parent=11 // pred_check_branch
          %308 = sbr.rel (%p306) target = $region24
        $region23: #{tpu_custom_call.1} parent=11 // pred_region
          %s310 = ssub.s32 2048, 2048
          %311 = vsyncadd [#allocation9], %s310
          %s312 = sshll.u32 [#allocation8], 4
          %s313 = int_to_ptr.vmem [resolvable:$true] %s312
          %318 = dma.hbm_to_vmem [thread:$0]  %s3, 2048, %s313, [#allocation9], 128, 128, 8
        $region24: #{tpu_custom_call.1} parent=11 // pred_fallthru
          _
        // Predicated region
        $region25: #{tpu_custom_call.1} parent=11 // pred_check
          %p319 = pneg %p134
        $region26: #{tpu_custom_call.1} parent=11 // pred_check_branch
          %321 = sbr.rel (%p319) target = $region28
        $region27: #{tpu_custom_call.1} parent=11 // pred_region
          _
        $region28: #{tpu_custom_call.1} parent=11 // pred_fallthru
          _
        // Predicated region
        $region29: #{tpu_custom_call.1} parent=11 // pred_check
          %p322 = pneg %p155
        $region30: #{tpu_custom_call.1} parent=11 // pred_check_branch
          %324 = sbr.rel (%p322) target = $region32
        $region31: #{tpu_custom_call.1} parent=11 // pred_region
          _
        $region32: #{tpu_custom_call.1} parent=11 // pred_fallthru
          _
        // Predicated region
        $region33: #{tpu_custom_call.1} parent=11 // pred_check
          %p325 = pneg %p176
        $region34: #{tpu_custom_call.1} parent=11 // pred_check_branch
          %327 = sbr.rel (%p325) target = $region36
        $region35: #{tpu_custom_call.1} parent=11 // pred_region
          _
        $region36: #{tpu_custom_call.1} parent=11 // pred_fallthru
          _
        // Predicated region
        $region37: #{tpu_custom_call.1} parent=11 // pred_check
          %p328 = pneg %p197
        $region38: #{tpu_custom_call.1} parent=11 // pred_check_branch
          %330 = sbr.rel (%p328) target = $region40
        $region39: #{tpu_custom_call.1} parent=11 // pred_region
          _
        $region40: #{tpu_custom_call.1} parent=11 // pred_fallthru
          _
        // Predicated region
        $region41: #{tpu_custom_call.1} parent=11 // pred_check
          %p331 = pneg %p218
        $region42: #{tpu_custom_call.1} parent=11 // pred_check_branch
          %333 = sbr.rel (%p331) target = $region44
        $region43: #{tpu_custom_call.1} parent=11 // pred_region
          _
        $region44: #{tpu_custom_call.1} parent=11 // pred_fallthru
          _
        // Predicated region
        $region45: #{tpu_custom_call.1} parent=11 // pred_check
          %p334 = pneg %p239
        $region46: #{tpu_custom_call.1} parent=11 // pred_check_branch
          %336 = sbr.rel (%p334) target = $region48
        $region47: #{tpu_custom_call.1} parent=11 // pred_region
          _
        $region48: #{tpu_custom_call.1} parent=11 // pred_fallthru
          _
      $region12: #{tpu_custom_call.1} parent=5 // pred_fallthru
        _
      %p337 = scmp.lt.s32.totalorder %s24, 2
      // Predicated region
      $region49: #{tpu_custom_call.1} parent=5 // pred_check
        %p338 = pneg %p337
      $region50: #{tpu_custom_call.1} parent=5 // pred_check_branch
        %340 = sbr.rel (%p338) target = $region52
      $region51: #{tpu_custom_call.1} parent=5 // pred_region
        // Predicated region
        $region53: #{tpu_custom_call.1} parent=51 // pred_check
          %p341 = pneg %p44
        $region54: #{tpu_custom_call.1} parent=51 // pred_check_branch
          %343 = sbr.rel (%p341) target = $region56
        $region55: #{tpu_custom_call.1} parent=51 // pred_region
          %s344 = sand.u32 %s34, 1
          %s345 = scalar_lea.sflag [#allocation3], %s344
          %s346 = sand.u32 %s34, 1
          %s347 = smul.addr %s346, 256
          %s348 = scalar_lea.vmem [#allocation2], %s347
          %s350 = ssub.s32 4096, 4096
          %351 = vsyncadd %s345, %s350
          %s352 = smul.addr %s24, 32
          %s353 = smul.addr %s352, 128
          %s354 = scalar_lea.hbm %s0, %s353
          %s355 = sshll.u32 %s348, 4
          %s356 = int_to_ptr.vmem [resolvable:$true] %s355
          %361 = dma.hbm_to_vmem [thread:$0]  %s354, 4096, %s356, %s345, 128, 128, 8
        $region56: #{tpu_custom_call.1} parent=51 // pred_fallthru
          _
      $region52: #{tpu_custom_call.1} parent=5 // pred_fallthru
        _
      %p362 = scmp.le.s32.totalorder 1, %s24
      %p363 = scmp.lt.s32.totalorder %s24, 3
      %p364 = pnand %p362, %p363
      %p365 = pneg %p364
      // Predicated region
      $region57: #{tpu_custom_call.1} parent=5 // pred_check
        _
      $region58: #{tpu_custom_call.1} parent=5 // pred_check_branch
        %367 = sbr.rel (%p364) target = $region60
      $region59: #{tpu_custom_call.1} parent=5 // pred_region
        %s368 = ssub.s32 %s24, 1
        %s369 = sand.u32 %s37, 1
        %s370 = scalar_lea.sflag [#allocation3], %s369
        %s371 = sand.u32 %s37, 1
        %s372 = smul.addr %s371, 256
        %s373 = scalar_lea.vmem [#allocation2], %s372
        // Predicated region
        $region61: #{tpu_custom_call.1} parent=59 // pred_check
          %p374 = pneg %p50
        $region62: #{tpu_custom_call.1} parent=59 // pred_check_branch
          %376 = sbr.rel (%p374) target = $region64
        $region63: #{tpu_custom_call.1} parent=59 // pred_region
          %377 = dma.done %s370, 4096
        $region64: #{tpu_custom_call.1} parent=59 // pred_fallthru
          _
        // Predicated region
        $region65: #{tpu_custom_call.1} parent=59 // pred_check
          %p378 = pneg %p71
        $region66: #{tpu_custom_call.1} parent=59 // pred_check_branch
          %380 = sbr.rel (%p378) target = $region68
        $region67: #{tpu_custom_call.1} parent=59 // pred_region
          %381 = dma.done [#allocation6], 2048
        $region68: #{tpu_custom_call.1} parent=59 // pred_fallthru
          _
        // Predicated region
        $region69: #{tpu_custom_call.1} parent=59 // pred_check
          %p382 = pneg %p92
        $region70: #{tpu_custom_call.1} parent=59 // pred_check_branch
          %384 = sbr.rel (%p382) target = $region72
        $region71: #{tpu_custom_call.1} parent=59 // pred_region
          %385 = dma.done [#allocation6], 18432
        $region72: #{tpu_custom_call.1} parent=59 // pred_fallthru
          _
        // Predicated region
        $region73: #{tpu_custom_call.1} parent=59 // pred_check
          %p386 = pneg %p113
        $region74: #{tpu_custom_call.1} parent=59 // pred_check_branch
          %388 = sbr.rel (%p386) target = $region76
        $region75: #{tpu_custom_call.1} parent=59 // pred_region
          %389 = dma.done [#allocation9], 2048
        $region76: #{tpu_custom_call.1} parent=59 // pred_fallthru
          _
        %s390 = sand.u32 %s37, 1
        %s391 = scalar_lea.sflag [#allocation3], %s390
        %s392 = sand.u32 %s37, 1
        %s393 = smul.addr %s392, 256
        %s394 = scalar_lea.vmem [#allocation2], %s393
        %p395 = pneg %p50
        %p396 = pneg %p47
        %p397 = pneg %p71
        %p398 = pneg %p68
        %p399 = pneg %p92
        %p400 = pneg %p89
        %p401 = pneg %p113
        %p402 = pneg %p110
        %p403 = pneg %p134
        %p404 = pneg %p131
        %p405 = pneg %p155
        %p406 = pneg %p152
        %p407 = pneg %p176
        %p408 = pneg %p173
        %p409 = pneg %p197
        %p410 = pneg %p194
        %p411 = pneg %p218
        %p412 = pneg %p215
        %p413 = pneg %p239
        %p414 = pneg %p236
        %p415 = pneg %p265
        %p416 = pneg %p262
        %s417 = sand.u32 %s252, 1
        %s418 = scalar_lea.sflag [#allocation4], %s417
        %s419 = sand.u32 %s252, 1
        %s420 = smul.addr %s419, 256
        %s421 = scalar_lea.vmem [#allocation10], %s420
        %v422 = vld [vmem:[%s373] sm:$0xff]
        %v423 = vld [vmem:[%s373 + $0x8] sm:$0xff]
        %v424 = vld [vmem:[%s373 + $0x10] sm:$0xff]
        %v425 = vld [vmem:[%s373 + $0x18] sm:$0xff]
        %v426 = vld [vmem:[%s373 + $0x20] sm:$0xff]
        %v427 = vld [vmem:[%s373 + $0x28] sm:$0xff]
        %v428 = vld [vmem:[%s373 + $0x30] sm:$0xff]
        %v429 = vld [vmem:[%s373 + $0x38] sm:$0xff]
        %v430 = vld [vmem:[%s373 + $0x40] sm:$0xff]
        %v431 = vld [vmem:[%s373 + $0x48] sm:$0xff]
        %v432 = vld [vmem:[%s373 + $0x50] sm:$0xff]
        %v433 = vld [vmem:[%s373 + $0x58] sm:$0xff]
        %v434 = vld [vmem:[%s373 + $0x60] sm:$0xff]
        %v435 = vld [vmem:[%s373 + $0x68] sm:$0xff]
        %v436 = vld [vmem:[%s373 + $0x70] sm:$0xff]
        %v437 = vld [vmem:[%s373 + $0x78] sm:$0xff]
        %v438 = vld [vmem:[%s373 + $0x80] sm:$0xff]
        %v439 = vld [vmem:[%s373 + $0x88] sm:$0xff]
        %v440 = vld [vmem:[%s373 + $0x90] sm:$0xff]
        %v441 = vld [vmem:[%s373 + $0x98] sm:$0xff]
        %v442 = vld [vmem:[%s373 + $0xa0] sm:$0xff]
        %v443 = vld [vmem:[%s373 + $0xa8] sm:$0xff]
        %v444 = vld [vmem:[%s373 + $0xb0] sm:$0xff]
        %v445 = vld [vmem:[%s373 + $0xb8] sm:$0xff]
        %v446 = vld [vmem:[%s373 + $0xc0] sm:$0xff]
        %v447 = vld [vmem:[%s373 + $0xc8] sm:$0xff]
        %v448 = vld [vmem:[%s373 + $0xd0] sm:$0xff]
        %v449 = vld [vmem:[%s373 + $0xd8] sm:$0xff]
        %v450 = vld [vmem:[%s373 + $0xe0] sm:$0xff]
        %v451 = vld [vmem:[%s373 + $0xe8] sm:$0xff]
        %v452 = vld [vmem:[%s373 + $0xf0] sm:$0xff]
        %v453 = vld [vmem:[%s373 + $0xf8] sm:$0xff]
        %v454 = vld [vmem:[#allocation5] sm:$0xff]
        %v455 = vld [vmem:[#allocation5 + $0x8] sm:$0xff]
        %v456 = vld [vmem:[#allocation5 + $0x10] sm:$0xff]
        %v457 = vld [vmem:[#allocation5 + $0x18] sm:$0xff]
        %v458 = vld [vmem:[#allocation5 + $0x20] sm:$0xff]
        %v459 = vld [vmem:[#allocation5 + $0x28] sm:$0xff]
        %v460 = vld [vmem:[#allocation5 + $0x30] sm:$0xff]
        %v461 = vld [vmem:[#allocation5 + $0x38] sm:$0xff]
        %v462 = vld [vmem:[#allocation5 + $0x40] sm:$0xff]
        %v463 = vld [vmem:[#allocation5 + $0x48] sm:$0xff]
        %v464 = vld [vmem:[#allocation5 + $0x50] sm:$0xff]
        %v465 = vld [vmem:[#allocation5 + $0x58] sm:$0xff]
        %v466 = vld [vmem:[#allocation5 + $0x60] sm:$0xff]
        %v467 = vld [vmem:[#allocation5 + $0x68] sm:$0xff]
        %v468 = vld [vmem:[#allocation5 + $0x70] sm:$0xff]
        %v469 = vld [vmem:[#allocation5 + $0x78] sm:$0xff]
        %470 = vmatprep.subr.mxu0 0.0
        %471 = vmatpush1.msra.mxu0 %v454
        %472 = vmatprep.subr.mxu0 0.0
        %473 = vmatpush1.msra.mxu0 %v455
        %474 = vmatprep.subr.mxu0 0.0
        %475 = vmatpush1.msra.mxu0 %v456
        %476 = vmatprep.subr.mxu0 0.0
        %477 = vmatpush1.msra.mxu0 %v457
        %478 = vmatprep.subr.mxu0 0.0
        %479 = vmatpush1.msra.mxu0 %v458
        %480 = vmatprep.subr.mxu0 0.0
        %481 = vmatpush1.msra.mxu0 %v459
        %482 = vmatprep.subr.mxu0 0.0
        %483 = vmatpush1.msra.mxu0 %v460
        %484 = vmatprep.subr.mxu0 0.0
        %485 = vmatpush1.msra.mxu0 %v461
        %486 = vmatprep.subr.mxu0 0.0
        %487 = vmatpush1.msra.mxu0 %v462
        %488 = vmatprep.subr.mxu0 0.0
        %489 = vmatpush1.msra.mxu0 %v463
        %490 = vmatprep.subr.mxu0 0.0
        %491 = vmatpush1.msra.mxu0 %v464
        %492 = vmatprep.subr.mxu0 0.0
        %493 = vmatpush1.msra.mxu0 %v465
        %494 = vmatprep.subr.mxu0 0.0
        %495 = vmatpush1.msra.mxu0 %v466
        %496 = vmatprep.subr.mxu0 0.0
        %497 = vmatpush1.msra.mxu0 %v467
        %498 = vmatprep.subr.mxu0 0.0
        %499 = vmatpush1.msra.mxu0 %v468
        %500 = vmatprep.subr.mxu0 0.0
        %501 = vmatpush1.msra.mxu0 %v469
        %502 = vmatprep.subr.mxu0 0.0
        %503 = vmatpush1.msra.mxu0 0.0
        %504 = vmatprep.subr.mxu0 0.0
        %505 = vmatpush1.msra.mxu0 0.0
        %506 = vmatprep.subr.mxu0 0.0
        %507 = vmatpush1.msra.mxu0 0.0
        %508 = vmatprep.subr.mxu0 0.0
        %509 = vmatpush1.msra.mxu0 0.0
        %510 = vmatprep.subr.mxu0 0.0
        %511 = vmatpush1.msra.mxu0 0.0
        %512 = vmatprep.subr.mxu0 0.0
        %513 = vmatpush1.msra.mxu0 0.0
        %514 = vmatprep.subr.mxu0 0.0
        %515 = vmatpush1.msra.mxu0 0.0
        %516 = vmatprep.subr.mxu0 0.0
        %517 = vmatpush1.msra.mxu0 0.0
        %518 = vmatprep.subr.mxu0 0.0
        %519 = vmatpush1.msra.mxu0 0.0
        %520 = vmatprep.subr.mxu0 0.0
        %521 = vmatpush1.msra.mxu0 0.0
        %522 = vmatprep.subr.mxu0 0.0
        %523 = vmatpush1.msra.mxu0 0.0
        %524 = vmatprep.subr.mxu0 0.0
        %525 = vmatpush1.msra.mxu0 0.0
        %526 = vmatprep.subr.mxu0 0.0
        %527 = vmatpush1.msra.mxu0 0.0
        %528 = vmatprep.subr.mxu0 0.0
        %529 = vmatpush1.msra.mxu0 0.0
        %530 = vmatprep.subr.mxu0 0.0
        %531 = vmatpush1.msra.mxu0 0.0
        %532 = vmatprep.subr.mxu0 0.0
        %533 = vmatpush1.msra.mxu0 0.0
        %534 = vmatprep.mubr.f32.mxu0 0.0
        %535 = vmatmul.mubr.f32.gmra.mrb[0].mxu0 %v422
        %v536 = vpop.f32.mrb[0].mxu0
        %v537 = vadd.f32 0.0, %v536
        %v538 = vpop.f32.mrb[0].mxu0
        %539 = vmatprep.mubr.f32.mxu0 0.0
        %540 = vmatmul.mubr.f32.gmra.mrb[0].mxu0 %v423
        %v541 = vpop.f32.mrb[0].mxu0
        %v542 = vadd.f32 0.0, %v541
        %v543 = vpop.f32.mrb[0].mxu0
        %544 = vmatprep.mubr.f32.mxu0 0.0
        %545 = vmatmul.mubr.f32.gmra.mrb[0].mxu0 %v424
        %v546 = vpop.f32.mrb[0].mxu0
        %v547 = vadd.f32 0.0, %v546
        %v548 = vpop.f32.mrb[0].mxu0
        %549 = vmatprep.mubr.f32.mxu0 0.0
        %550 = vmatmul.mubr.f32.gmra.mrb[0].mxu0 %v425
        %v551 = vpop.f32.mrb[0].mxu0
        %v552 = vadd.f32 0.0, %v551
        %v553 = vpop.f32.mrb[0].mxu0
        %554 = vmatprep.mubr.f32.mxu0 0.0
        %555 = vmatmul.mubr.f32.gmra.mrb[0].mxu0 %v426
        %v556 = vpop.f32.mrb[0].mxu0
        %v557 = vadd.f32 0.0, %v556
        %v558 = vpop.f32.mrb[0].mxu0
        %559 = vmatprep.mubr.f32.mxu0 0.0
        %560 = vmatmul.mubr.f32.gmra.mrb[0].mxu0 %v427
        %v561 = vpop.f32.mrb[0].mxu0
        %v562 = vadd.f32 0.0, %v561
        %v563 = vpop.f32.mrb[0].mxu0
        %564 = vmatprep.mubr.f32.mxu0 0.0
        %565 = vmatmul.mubr.f32.gmra.mrb[0].mxu0 %v428
        %v566 = vpop.f32.mrb[0].mxu0
        %v567 = vadd.f32 0.0, %v566
        %v568 = vpop.f32.mrb[0].mxu0
        %569 = vmatprep.mubr.f32.mxu0 0.0
        %570 = vmatmul.mubr.f32.gmra.mrb[0].mxu0 %v429
        %v571 = vpop.f32.mrb[0].mxu0
        %v572 = vadd.f32 0.0, %v571
        %v573 = vpop.f32.mrb[0].mxu0
        %574 = vmatprep.mubr.f32.mxu0 0.0
        %575 = vmatmul.mubr.f32.gmra.mrb[0].mxu0 %v430
        %v576 = vpop.f32.mrb[0].mxu0
        %v577 = vadd.f32 0.0, %v576
        %v578 = vpop.f32.mrb[0].mxu0
        %579 = vmatprep.mubr.f32.mxu0 0.0
        %580 = vmatmul.mubr.f32.gmra.mrb[0].mxu0 %v431
        %v581 = vpop.f32.mrb[0].mxu0
        %v582 = vadd.f32 0.0, %v581
        %v583 = vpop.f32.mrb[0].mxu0
        %584 = vmatprep.mubr.f32.mxu0 0.0
        %585 = vmatmul.mubr.f32.gmra.mrb[0].mxu0 %v432
        %v586 = vpop.f32.mrb[0].mxu0
        %v587 = vadd.f32 0.0, %v586
        %v588 = vpop.f32.mrb[0].mxu0
        %589 = vmatprep.mubr.f32.mxu0 0.0
        %590 = vmatmul.mubr.f32.gmra.mrb[0].mxu0 %v433
        %v591 = vpop.f32.mrb[0].mxu0
        %v592 = vadd.f32 0.0, %v591
        %v593 = vpop.f32.mrb[0].mxu0
        %594 = vmatprep.mubr.f32.mxu0 0.0
        %595 = vmatmul.mubr.f32.gmra.mrb[0].mxu0 %v434
        %v596 = vpop.f32.mrb[0].mxu0
        %v597 = vadd.f32 0.0, %v596
        %v598 = vpop.f32.mrb[0].mxu0
        %599 = vmatprep.mubr.f32.mxu0 0.0
        %600 = vmatmul.mubr.f32.gmra.mrb[0].mxu0 %v435
        %v601 = vpop.f32.mrb[0].mxu0
        %v602 = vadd.f32 0.0, %v601
        %v603 = vpop.f32.mrb[0].mxu0
        %604 = vmatprep.mubr.f32.mxu0 0.0
        %605 = vmatmul.mubr.f32.gmra.mrb[0].mxu0 %v436
        %v606 = vpop.f32.mrb[0].mxu0
        %v607 = vadd.f32 0.0, %v606
        %v608 = vpop.f32.mrb[0].mxu0
        %609 = vmatprep.mubr.f32.mxu0 0.0
        %610 = vmatmul.mubr.f32.gmra.mrb[0].mxu0 %v437
        %v611 = vpop.f32.mrb[0].mxu0
        %v612 = vadd.f32 0.0, %v611
        %v613 = vpop.f32.mrb[0].mxu0
        %614 = vmatprep.mubr.f32.mxu0 0.0
        %615 = vmatmul.mubr.f32.gmra.mrb[0].mxu0 %v438
        %v616 = vpop.f32.mrb[0].mxu0
        %v617 = vadd.f32 0.0, %v616
        %v618 = vpop.f32.mrb[0].mxu0
        %619 = vmatprep.mubr.f32.mxu0 0.0
        %620 = vmatmul.mubr.f32.gmra.mrb[0].mxu0 %v439
        %v621 = vpop.f32.mrb[0].mxu0
        %v622 = vadd.f32 0.0, %v621
        %v623 = vpop.f32.mrb[0].mxu0
        %624 = vmatprep.mubr.f32.mxu0 0.0
        %625 = vmatmul.mubr.f32.gmra.mrb[0].mxu0 %v440
        %v626 = vpop.f32.mrb[0].mxu0
        %v627 = vadd.f32 0.0, %v626
        %v628 = vpop.f32.mrb[0].mxu0
        %629 = vmatprep.mubr.f32.mxu0 0.0
        %630 = vmatmul.mubr.f32.gmra.mrb[0].mxu0 %v441
        %v631 = vpop.f32.mrb[0].mxu0
        %v632 = vadd.f32 0.0, %v631
        %v633 = vpop.f32.mrb[0].mxu0
        %634 = vmatprep.mubr.f32.mxu0 0.0
        %635 = vmatmul.mubr.f32.gmra.mrb[0].mxu0 %v442
        %v636 = vpop.f32.mrb[0].mxu0
        %v637 = vadd.f32 0.0, %v636
        %v638 = vpop.f32.mrb[0].mxu0
        %639 = vmatprep.mubr.f32.mxu0 0.0
        %640 = vmatmul.mubr.f32.gmra.mrb[0].mxu0 %v443
        %v641 = vpop.f32.mrb[0].mxu0
        %v642 = vadd.f32 0.0, %v641
        %v643 = vpop.f32.mrb[0].mxu0
        %644 = vmatprep.mubr.f32.mxu0 0.0
        %645 = vmatmul.mubr.f32.gmra.mrb[0].mxu0 %v444
        %v646 = vpop.f32.mrb[0].mxu0
        %v647 = vadd.f32 0.0, %v646
        %v648 = vpop.f32.mrb[0].mxu0
        %649 = vmatprep.mubr.f32.mxu0 0.0
        %650 = vmatmul.mubr.f32.gmra.mrb[0].mxu0 %v445
        %v651 = vpop.f32.mrb[0].mxu0
        %v652 = vadd.f32 0.0, %v651
        %v653 = vpop.f32.mrb[0].mxu0
        %654 = vmatprep.mubr.f32.mxu0 0.0
        %655 = vmatmul.mubr.f32.gmra.mrb[0].mxu0 %v446
        %v656 = vpop.f32.mrb[0].mxu0
        %v657 = vadd.f32 0.0, %v656
        %v658 = vpop.f32.mrb[0].mxu0
        %659 = vmatprep.mubr.f32.mxu0 0.0
        %660 = vmatmul.mubr.f32.gmra.mrb[0].mxu0 %v447
        %v661 = vpop.f32.mrb[0].mxu0
        %v662 = vadd.f32 0.0, %v661
        %v663 = vpop.f32.mrb[0].mxu0
        %664 = vmatprep.mubr.f32.mxu0 0.0
        %665 = vmatmul.mubr.f32.gmra.mrb[0].mxu0 %v448
        %v666 = vpop.f32.mrb[0].mxu0
        %v667 = vadd.f32 0.0, %v666
        %v668 = vpop.f32.mrb[0].mxu0
        %669 = vmatprep.mubr.f32.mxu0 0.0
        %670 = vmatmul.mubr.f32.gmra.mrb[0].mxu0 %v449
        %v671 = vpop.f32.mrb[0].mxu0
        %v672 = vadd.f32 0.0, %v671
        %v673 = vpop.f32.mrb[0].mxu0
        %674 = vmatprep.mubr.f32.mxu0 0.0
        %675 = vmatmul.mubr.f32.gmra.mrb[0].mxu0 %v450
        %v676 = vpop.f32.mrb[0].mxu0
        %v677 = vadd.f32 0.0, %v676
        %v678 = vpop.f32.mrb[0].mxu0
        %679 = vmatprep.mubr.f32.mxu0 0.0
        %680 = vmatmul.mubr.f32.gmra.mrb[0].mxu0 %v451
        %v681 = vpop.f32.mrb[0].mxu0
        %v682 = vadd.f32 0.0, %v681
        %v683 = vpop.f32.mrb[0].mxu0
        %684 = vmatprep.mubr.f32.mxu0 0.0
        %685 = vmatmul.mubr.f32.gmra.mrb[0].mxu0 %v452
        %v686 = vpop.f32.mrb[0].mxu0
        %v687 = vadd.f32 0.0, %v686
        %v688 = vpop.f32.mrb[0].mxu0
        %689 = vmatprep.mubr.f32.mxu0 0.0
        %690 = vmatmul.mubr.f32.gmra.mrb[0].mxu0 %v453
        %v691 = vpop.f32.mrb[0].mxu0
        %v692 = vadd.f32 0.0, %v691
        %v693 = vpop.f32.mrb[0].mxu0
        %694 = vdwg.mxu0
        %v695 = vld [vmem:[%s4] sm:$0x1]
        %v697 = vlaneseq
        %v698 = vshrl.u32 %v697, 7
        %v699 = vsub.s32 0, %v698
        %v700 = vrot.slane %v695, %v699
        %v702 = vmul.f32 %v537, %v700
        %v703 = vmul.f32 %v542, %v700
        %v704 = vmul.f32 %v547, %v700
        %v705 = vmul.f32 %v552, %v700
        %v706 = vmul.f32 %v557, %v700
        %v707 = vmul.f32 %v562, %v700
        %v708 = vmul.f32 %v567, %v700
        %v709 = vmul.f32 %v572, %v700
        %v710 = vmul.f32 %v577, %v700
        %v711 = vmul.f32 %v582, %v700
        %v712 = vmul.f32 %v587, %v700
        %v713 = vmul.f32 %v592, %v700
        %v714 = vmul.f32 %v597, %v700
        %v715 = vmul.f32 %v602, %v700
        %v716 = vmul.f32 %v607, %v700
        %v717 = vmul.f32 %v612, %v700
        %v718 = vmul.f32 %v617, %v700
        %v719 = vmul.f32 %v622, %v700
        %v720 = vmul.f32 %v627, %v700
        %v721 = vmul.f32 %v632, %v700
        %v722 = vmul.f32 %v637, %v700
        %v723 = vmul.f32 %v642, %v700
        %v724 = vmul.f32 %v647, %v700
        %v725 = vmul.f32 %v652, %v700
        %v726 = vmul.f32 %v657, %v700
        %v727 = vmul.f32 %v662, %v700
        %v728 = vmul.f32 %v667, %v700
        %v729 = vmul.f32 %v672, %v700
        %v730 = vmul.f32 %v677, %v700
        %v731 = vmul.f32 %v682, %v700
        %v732 = vmul.f32 %v687, %v700
        %v733 = vmul.f32 %v692, %v700
        %v734 = vld [vmem:[%s5] sm:$0x1]
        %v736 = vlaneseq
        %v737 = vshrl.u32 %v736, 7
        %v738 = vsub.s32 0, %v737
        %v739 = vrot.slane %v734, %v738
        %v741 = vadd.f32 %v702, %v739
        %v742 = vadd.f32 %v703, %v739
        %v743 = vadd.f32 %v704, %v739
        %v744 = vadd.f32 %v705, %v739
        %v745 = vadd.f32 %v706, %v739
        %v746 = vadd.f32 %v707, %v739
        %v747 = vadd.f32 %v708, %v739
        %v748 = vadd.f32 %v709, %v739
        %v749 = vadd.f32 %v710, %v739
        %v750 = vadd.f32 %v711, %v739
        %v751 = vadd.f32 %v712, %v739
        %v752 = vadd.f32 %v713, %v739
        %v753 = vadd.f32 %v714, %v739
        %v754 = vadd.f32 %v715, %v739
        %v755 = vadd.f32 %v716, %v739
        %v756 = vadd.f32 %v717, %v739
        %v757 = vadd.f32 %v718, %v739
        %v758 = vadd.f32 %v719, %v739
        %v759 = vadd.f32 %v720, %v739
        %v760 = vadd.f32 %v721, %v739
        %v761 = vadd.f32 %v722, %v739
        %v762 = vadd.f32 %v723, %v739
        %v763 = vadd.f32 %v724, %v739
        %v764 = vadd.f32 %v725, %v739
        %v765 = vadd.f32 %v726, %v739
        %v766 = vadd.f32 %v727, %v739
        %v767 = vadd.f32 %v728, %v739
        %v768 = vadd.f32 %v729, %v739
        %v769 = vadd.f32 %v730, %v739
        %v770 = vadd.f32 %v731, %v739
        %v771 = vadd.f32 %v732, %v739
        %v772 = vadd.f32 %v733, %v739
        %v773 = vmax.f32 %v741, 0.0
        %v774 = vmax.f32 %v742, 0.0
        %v775 = vmax.f32 %v743, 0.0
        %v776 = vmax.f32 %v744, 0.0
        %v777 = vmax.f32 %v745, 0.0
        %v778 = vmax.f32 %v746, 0.0
        %v779 = vmax.f32 %v747, 0.0
        %v780 = vmax.f32 %v748, 0.0
        %v781 = vmax.f32 %v749, 0.0
        %v782 = vmax.f32 %v750, 0.0
        %v783 = vmax.f32 %v751, 0.0
        %v784 = vmax.f32 %v752, 0.0
        %v785 = vmax.f32 %v753, 0.0
        %v786 = vmax.f32 %v754, 0.0
        %v787 = vmax.f32 %v755, 0.0
        %v788 = vmax.f32 %v756, 0.0
        %v789 = vmax.f32 %v757, 0.0
        %v790 = vmax.f32 %v758, 0.0
        %v791 = vmax.f32 %v759, 0.0
        %v792 = vmax.f32 %v760, 0.0
        %v793 = vmax.f32 %v761, 0.0
        %v794 = vmax.f32 %v762, 0.0
        %v795 = vmax.f32 %v763, 0.0
        %v796 = vmax.f32 %v764, 0.0
        %v797 = vmax.f32 %v765, 0.0
        %v798 = vmax.f32 %v766, 0.0
        %v799 = vmax.f32 %v767, 0.0
        %v800 = vmax.f32 %v768, 0.0
        %v801 = vmax.f32 %v769, 0.0
        %v802 = vmax.f32 %v770, 0.0
        %v803 = vmax.f32 %v771, 0.0
        %v804 = vmax.f32 %v772, 0.0
        %v805 = vlaneseq
        %v806 = vshrl.u32 %v805, 7
        %v807 = vadd.s32 %v806, 8
        %v808 = vadd.s32 %v806, 16
        %v809 = vadd.s32 %v806, 24
        %v810 = vadd.s32 %v806, 32
        %v811 = vadd.s32 %v806, 40
        %v812 = vadd.s32 %v806, 48
        %v813 = vadd.s32 %v806, 56
        %v814 = vadd.s32 %v806, 64
        %v815 = vadd.s32 %v806, 72
        %v816 = vadd.s32 %v806, 80
        %v817 = vadd.s32 %v806, 88
        %v818 = vadd.s32 %v806, 96
        %v819 = vadd.s32 %v806, 104
        %v820 = vadd.s32 %v806, 112
        %v821 = vadd.s32 %v806, 120
        %v822 = vadd.s32 %v806, 128
        %v823 = vadd.s32 %v806, 136
        %v824 = vadd.s32 %v806, 144
        %v825 = vadd.s32 %v806, 152
        %v826 = vadd.s32 %v806, 160
        %v827 = vadd.s32 %v806, 168
        %v828 = vadd.s32 %v806, 176
        %v829 = vadd.s32 %v806, 184
        %v830 = vadd.s32 %v806, 192
        %v831 = vadd.s32 %v806, 200
        %v832 = vadd.s32 %v806, 208
        %v833 = vadd.s32 %v806, 216
        %v834 = vadd.s32 %v806, 224
        %v835 = vadd.s32 %v806, 232
        %v836 = vadd.s32 %v806, 240
        %v837 = vadd.s32 %v806, 248
        %vm838 = vcmp.lt.s32.totalorder %v806, 0
        %v839 = vsub.s32 0, %v806
        %v840 = vsel %vm838, %v839, %v806
        %v841 = vshrl.u32 %v840, 4
        %v842 = vand.u32 %v840, 15
        %v843 = vsub.s32 0, %v842
        %v844 = vsel %vm838, %v843, %v842
        %vm845 = vcmp.lt.s32.totalorder %v807, 0
        %v846 = vsub.s32 0, %v807
        %v847 = vsel %vm845, %v846, %v807
        %v848 = vshrl.u32 %v847, 4
        %v849 = vand.u32 %v847, 15
        %v850 = vsub.s32 0, %v849
        %v851 = vsel %vm845, %v850, %v849
        %vm852 = vcmp.lt.s32.totalorder %v808, 0
        %v853 = vsub.s32 0, %v808
        %v854 = vsel %vm852, %v853, %v808
        %v855 = vshrl.u32 %v854, 4
        %v856 = vand.u32 %v854, 15
        %v857 = vsub.s32 0, %v856
        %v858 = vsel %vm852, %v857, %v856
        %vm859 = vcmp.lt.s32.totalorder %v809, 0
        %v860 = vsub.s32 0, %v809
        %v861 = vsel %vm859, %v860, %v809
        %v862 = vshrl.u32 %v861, 4
        %v863 = vand.u32 %v861, 15
        %v864 = vsub.s32 0, %v863
        %v865 = vsel %vm859, %v864, %v863
        %vm866 = vcmp.lt.s32.totalorder %v810, 0
        %v867 = vsub.s32 0, %v810
        %v868 = vsel %vm866, %v867, %v810
        %v869 = vshrl.u32 %v868, 4
        %v870 = vand.u32 %v868, 15
        %v871 = vsub.s32 0, %v870
        %v872 = vsel %vm866, %v871, %v870
        %vm873 = vcmp.lt.s32.totalorder %v811, 0
        %v874 = vsub.s32 0, %v811
        %v875 = vsel %vm873, %v874, %v811
        %v876 = vshrl.u32 %v875, 4
        %v877 = vand.u32 %v875, 15
        %v878 = vsub.s32 0, %v877
        %v879 = vsel %vm873, %v878, %v877
        %vm880 = vcmp.lt.s32.totalorder %v812, 0
        %v881 = vsub.s32 0, %v812
        %v882 = vsel %vm880, %v881, %v812
        %v883 = vshrl.u32 %v882, 4
        %v884 = vand.u32 %v882, 15
        %v885 = vsub.s32 0, %v884
        %v886 = vsel %vm880, %v885, %v884
        %vm887 = vcmp.lt.s32.totalorder %v813, 0
        %v888 = vsub.s32 0, %v813
        %v889 = vsel %vm887, %v888, %v813
        %v890 = vshrl.u32 %v889, 4
        %v891 = vand.u32 %v889, 15
        %v892 = vsub.s32 0, %v891
        %v893 = vsel %vm887, %v892, %v891
        %vm894 = vcmp.lt.s32.totalorder %v814, 0
        %v895 = vsub.s32 0, %v814
        %v896 = vsel %vm894, %v895, %v814
        %v897 = vshrl.u32 %v896, 4
        %v898 = vand.u32 %v896, 15
        %v899 = vsub.s32 0, %v898
        %v900 = vsel %vm894, %v899, %v898
        %vm901 = vcmp.lt.s32.totalorder %v815, 0
        %v902 = vsub.s32 0, %v815
        %v903 = vsel %vm901, %v902, %v815
        %v904 = vshrl.u32 %v903, 4
        %v905 = vand.u32 %v903, 15
        %v906 = vsub.s32 0, %v905
        %v907 = vsel %vm901, %v906, %v905
        %vm908 = vcmp.lt.s32.totalorder %v816, 0
        %v909 = vsub.s32 0, %v816
        %v910 = vsel %vm908, %v909, %v816
        %v911 = vshrl.u32 %v910, 4
        %v912 = vand.u32 %v910, 15
        %v913 = vsub.s32 0, %v912
        %v914 = vsel %vm908, %v913, %v912
        %vm915 = vcmp.lt.s32.totalorder %v817, 0
        %v916 = vsub.s32 0, %v817
        %v917 = vsel %vm915, %v916, %v817
        %v918 = vshrl.u32 %v917, 4
        %v919 = vand.u32 %v917, 15
        %v920 = vsub.s32 0, %v919
        %v921 = vsel %vm915, %v920, %v919
        %vm922 = vcmp.lt.s32.totalorder %v818, 0
        %v923 = vsub.s32 0, %v818
        %v924 = vsel %vm922, %v923, %v818
        %v925 = vshrl.u32 %v924, 4
        %v926 = vand.u32 %v924, 15
        %v927 = vsub.s32 0, %v926
        %v928 = vsel %vm922, %v927, %v926
        %vm929 = vcmp.lt.s32.totalorder %v819, 0
        %v930 = vsub.s32 0, %v819
        %v931 = vsel %vm929, %v930, %v819
        %v932 = vshrl.u32 %v931, 4
        %v933 = vand.u32 %v931, 15
        %v934 = vsub.s32 0, %v933
        %v935 = vsel %vm929, %v934, %v933
        %vm936 = vcmp.lt.s32.totalorder %v820, 0
        %v937 = vsub.s32 0, %v820
        %v938 = vsel %vm936, %v937, %v820
        %v939 = vshrl.u32 %v938, 4
        %v940 = vand.u32 %v938, 15
        %v941 = vsub.s32 0, %v940
        %v942 = vsel %vm936, %v941, %v940
        %vm943 = vcmp.lt.s32.totalorder %v821, 0
        %v944 = vsub.s32 0, %v821
        %v945 = vsel %vm943, %v944, %v821
        %v946 = vshrl.u32 %v945, 4
        %v947 = vand.u32 %v945, 15
        %v948 = vsub.s32 0, %v947
        %v949 = vsel %vm943, %v948, %v947
        %vm950 = vcmp.lt.s32.totalorder %v822, 0
        %v951 = vsub.s32 0, %v822
        %v952 = vsel %vm950, %v951, %v822
        %v953 = vshrl.u32 %v952, 4
        %v954 = vand.u32 %v952, 15
        %v955 = vsub.s32 0, %v954
        %v956 = vsel %vm950, %v955, %v954
        %vm957 = vcmp.lt.s32.totalorder %v823, 0
        %v958 = vsub.s32 0, %v823
        %v959 = vsel %vm957, %v958, %v823
        %v960 = vshrl.u32 %v959, 4
        %v961 = vand.u32 %v959, 15
        %v962 = vsub.s32 0, %v961
        %v963 = vsel %vm957, %v962, %v961
        %vm964 = vcmp.lt.s32.totalorder %v824, 0
        %v965 = vsub.s32 0, %v824
        %v966 = vsel %vm964, %v965, %v824
        %v967 = vshrl.u32 %v966, 4
        %v968 = vand.u32 %v966, 15
        %v969 = vsub.s32 0, %v968
        %v970 = vsel %vm964, %v969, %v968
        %vm971 = vcmp.lt.s32.totalorder %v825, 0
        %v972 = vsub.s32 0, %v825
        %v973 = vsel %vm971, %v972, %v825
        %v974 = vshrl.u32 %v973, 4
        %v975 = vand.u32 %v973, 15
        %v976 = vsub.s32 0, %v975
        %v977 = vsel %vm971, %v976, %v975
        %vm978 = vcmp.lt.s32.totalorder %v826, 0
        %v979 = vsub.s32 0, %v826
        %v980 = vsel %vm978, %v979, %v826
        %v981 = vshrl.u32 %v980, 4
        %v982 = vand.u32 %v980, 15
        %v983 = vsub.s32 0, %v982
        %v984 = vsel %vm978, %v983, %v982
        %vm985 = vcmp.lt.s32.totalorder %v827, 0
        %v986 = vsub.s32 0, %v827
        %v987 = vsel %vm985, %v986, %v827
        %v988 = vshrl.u32 %v987, 4
        %v989 = vand.u32 %v987, 15
        %v990 = vsub.s32 0, %v989
        %v991 = vsel %vm985, %v990, %v989
        %vm992 = vcmp.lt.s32.totalorder %v828, 0
        %v993 = vsub.s32 0, %v828
        %v994 = vsel %vm992, %v993, %v828
        %v995 = vshrl.u32 %v994, 4
        %v996 = vand.u32 %v994, 15
        %v997 = vsub.s32 0, %v996
        %v998 = vsel %vm992, %v997, %v996
        %vm999 = vcmp.lt.s32.totalorder %v829, 0
        %v1000 = vsub.s32 0, %v829
        %v1001 = vsel %vm999, %v1000, %v829
        %v1002 = vshrl.u32 %v1001, 4
        %v1003 = vand.u32 %v1001, 15
        %v1004 = vsub.s32 0, %v1003
        %v1005 = vsel %vm999, %v1004, %v1003
        %vm1006 = vcmp.lt.s32.totalorder %v830, 0
        %v1007 = vsub.s32 0, %v830
        %v1008 = vsel %vm1006, %v1007, %v830
        %v1009 = vshrl.u32 %v1008, 4
        %v1010 = vand.u32 %v1008, 15
        %v1011 = vsub.s32 0, %v1010
        %v1012 = vsel %vm1006, %v1011, %v1010
        %vm1013 = vcmp.lt.s32.totalorder %v831, 0
        %v1014 = vsub.s32 0, %v831
        %v1015 = vsel %vm1013, %v1014, %v831
        %v1016 = vshrl.u32 %v1015, 4
        %v1017 = vand.u32 %v1015, 15
        %v1018 = vsub.s32 0, %v1017
        %v1019 = vsel %vm1013, %v1018, %v1017
        %vm1020 = vcmp.lt.s32.totalorder %v832, 0
        %v1021 = vsub.s32 0, %v832
        %v1022 = vsel %vm1020, %v1021, %v832
        %v1023 = vshrl.u32 %v1022, 4
        %v1024 = vand.u32 %v1022, 15
        %v1025 = vsub.s32 0, %v1024
        %v1026 = vsel %vm1020, %v1025, %v1024
        %vm1027 = vcmp.lt.s32.totalorder %v833, 0
        %v1028 = vsub.s32 0, %v833
        %v1029 = vsel %vm1027, %v1028, %v833
        %v1030 = vshrl.u32 %v1029, 4
        %v1031 = vand.u32 %v1029, 15
        %v1032 = vsub.s32 0, %v1031
        %v1033 = vsel %vm1027, %v1032, %v1031
        %vm1034 = vcmp.lt.s32.totalorder %v834, 0
        %v1035 = vsub.s32 0, %v834
        %v1036 = vsel %vm1034, %v1035, %v834
        %v1037 = vshrl.u32 %v1036, 4
        %v1038 = vand.u32 %v1036, 15
        %v1039 = vsub.s32 0, %v1038
        %v1040 = vsel %vm1034, %v1039, %v1038
        %vm1041 = vcmp.lt.s32.totalorder %v835, 0
        %v1042 = vsub.s32 0, %v835
        %v1043 = vsel %vm1041, %v1042, %v835
        %v1044 = vshrl.u32 %v1043, 4
        %v1045 = vand.u32 %v1043, 15
        %v1046 = vsub.s32 0, %v1045
        %v1047 = vsel %vm1041, %v1046, %v1045
        %vm1048 = vcmp.lt.s32.totalorder %v836, 0
        %v1049 = vsub.s32 0, %v836
        %v1050 = vsel %vm1048, %v1049, %v836
        %v1051 = vshrl.u32 %v1050, 4
        %v1052 = vand.u32 %v1050, 15
        %v1053 = vsub.s32 0, %v1052
        %v1054 = vsel %vm1048, %v1053, %v1052
        %vm1055 = vcmp.lt.s32.totalorder %v837, 0
        %v1056 = vsub.s32 0, %v837
        %v1057 = vsel %vm1055, %v1056, %v837
        %v1058 = vshrl.u32 %v1057, 4
        %v1059 = vand.u32 %v1057, 15
        %v1060 = vsub.s32 0, %v1059
        %v1061 = vsel %vm1055, %v1060, %v1059
        %vm1062 = vcmp.ne.s32.totalorder %v844, 0
        %vm1063 = vcmp.ne.s32.totalorder %v851, 0
        %vm1064 = vcmp.ne.s32.totalorder %v858, 0
        %vm1065 = vcmp.ne.s32.totalorder %v865, 0
        %vm1066 = vcmp.ne.s32.totalorder %v872, 0
        %vm1067 = vcmp.ne.s32.totalorder %v879, 0
        %vm1068 = vcmp.ne.s32.totalorder %v886, 0
        %vm1069 = vcmp.ne.s32.totalorder %v893, 0
        %vm1070 = vcmp.ne.s32.totalorder %v900, 0
        %vm1071 = vcmp.ne.s32.totalorder %v907, 0
        %vm1072 = vcmp.ne.s32.totalorder %v914, 0
        %vm1073 = vcmp.ne.s32.totalorder %v921, 0
        %vm1074 = vcmp.ne.s32.totalorder %v928, 0
        %vm1075 = vcmp.ne.s32.totalorder %v935, 0
        %vm1076 = vcmp.ne.s32.totalorder %v942, 0
        %vm1077 = vcmp.ne.s32.totalorder %v949, 0
        %vm1078 = vcmp.ne.s32.totalorder %v956, 0
        %vm1079 = vcmp.ne.s32.totalorder %v963, 0
        %vm1080 = vcmp.ne.s32.totalorder %v970, 0
        %vm1081 = vcmp.ne.s32.totalorder %v977, 0
        %vm1082 = vcmp.ne.s32.totalorder %v984, 0
        %vm1083 = vcmp.ne.s32.totalorder %v991, 0
        %vm1084 = vcmp.ne.s32.totalorder %v998, 0
        %vm1085 = vcmp.ne.s32.totalorder %v1005, 0
        %vm1086 = vcmp.ne.s32.totalorder %v1012, 0
        %vm1087 = vcmp.ne.s32.totalorder %v1019, 0
        %vm1088 = vcmp.ne.s32.totalorder %v1026, 0
        %vm1089 = vcmp.ne.s32.totalorder %v1033, 0
        %vm1090 = vcmp.ne.s32.totalorder %v1040, 0
        %vm1091 = vcmp.ne.s32.totalorder %v1047, 0
        %vm1092 = vcmp.ne.s32.totalorder %v1054, 0
        %vm1093 = vcmp.ne.s32.totalorder %v1061, 0
        %vm1094 = vcmp.lt.s32.totalorder %v844, 0
        %vm1095 = vcmp.lt.s32.totalorder %v851, 0
        %vm1096 = vcmp.lt.s32.totalorder %v858, 0
        %vm1097 = vcmp.lt.s32.totalorder %v865, 0
        %vm1098 = vcmp.lt.s32.totalorder %v872, 0
        %vm1099 = vcmp.lt.s32.totalorder %v879, 0
        %vm1100 = vcmp.lt.s32.totalorder %v886, 0
        %vm1101 = vcmp.lt.s32.totalorder %v893, 0
        %vm1102 = vcmp.lt.s32.totalorder %v900, 0
        %vm1103 = vcmp.lt.s32.totalorder %v907, 0
        %vm1104 = vcmp.lt.s32.totalorder %v914, 0
        %vm1105 = vcmp.lt.s32.totalorder %v921, 0
        %vm1106 = vcmp.lt.s32.totalorder %v928, 0
        %vm1107 = vcmp.lt.s32.totalorder %v935, 0
        %vm1108 = vcmp.lt.s32.totalorder %v942, 0
        %vm1109 = vcmp.lt.s32.totalorder %v949, 0
        %vm1110 = vcmp.lt.s32.totalorder %v956, 0
        %vm1111 = vcmp.lt.s32.totalorder %v963, 0
        %vm1112 = vcmp.lt.s32.totalorder %v970, 0
        %vm1113 = vcmp.lt.s32.totalorder %v977, 0
        %vm1114 = vcmp.lt.s32.totalorder %v984, 0
        %vm1115 = vcmp.lt.s32.totalorder %v991, 0
        %vm1116 = vcmp.lt.s32.totalorder %v998, 0
        %vm1117 = vcmp.lt.s32.totalorder %v1005, 0
        %vm1118 = vcmp.lt.s32.totalorder %v1012, 0
        %vm1119 = vcmp.lt.s32.totalorder %v1019, 0
        %vm1120 = vcmp.lt.s32.totalorder %v1026, 0
        %vm1121 = vcmp.lt.s32.totalorder %v1033, 0
        %vm1122 = vcmp.lt.s32.totalorder %v1040, 0
        %vm1123 = vcmp.lt.s32.totalorder %v1047, 0
        %vm1124 = vcmp.lt.s32.totalorder %v1054, 0
        %vm1125 = vcmp.lt.s32.totalorder %v1061, 0
        %vm1126 = vmand %vm1094, %vm1062
        %vm1127 = vmand %vm1095, %vm1063
        %vm1128 = vmand %vm1096, %vm1064
        %vm1129 = vmand %vm1097, %vm1065
        %vm1130 = vmand %vm1098, %vm1066
        %vm1131 = vmand %vm1099, %vm1067
        %vm1132 = vmand %vm1100, %vm1068
        %vm1133 = vmand %vm1101, %vm1069
        %vm1134 = vmand %vm1102, %vm1070
        %vm1135 = vmand %vm1103, %vm1071
        %vm1136 = vmand %vm1104, %vm1072
        %vm1137 = vmand %vm1105, %vm1073
        %vm1138 = vmand %vm1106, %vm1074
        %vm1139 = vmand %vm1107, %vm1075
        %vm1140 = vmand %vm1108, %vm1076
        %vm1141 = vmand %vm1109, %vm1077
        %vm1142 = vmand %vm1110, %vm1078
        %vm1143 = vmand %vm1111, %vm1079
        %vm1144 = vmand %vm1112, %vm1080
        %vm1145 = vmand %vm1113, %vm1081
        %vm1146 = vmand %vm1114, %vm1082
        %vm1147 = vmand %vm1115, %vm1083
        %vm1148 = vmand %vm1116, %vm1084
        %vm1149 = vmand %vm1117, %vm1085
        %vm1150 = vmand %vm1118, %vm1086
        %vm1151 = vmand %vm1119, %vm1087
        %vm1152 = vmand %vm1120, %vm1088
        %vm1153 = vmand %vm1121, %vm1089
        %vm1154 = vmand %vm1122, %vm1090
        %vm1155 = vmand %vm1123, %vm1091
        %vm1156 = vmand %vm1124, %vm1092
        %vm1157 = vmand %vm1125, %vm1093
        %v1158 = vadd.s32 %v844, 16
        %v1159 = vadd.s32 %v851, 16
        %v1160 = vadd.s32 %v858, 16
        %v1161 = vadd.s32 %v865, 16
        %v1162 = vadd.s32 %v872, 16
        %v1163 = vadd.s32 %v879, 16
        %v1164 = vadd.s32 %v886, 16
        %v1165 = vadd.s32 %v893, 16
        %v1166 = vadd.s32 %v900, 16
        %v1167 = vadd.s32 %v907, 16
        %v1168 = vadd.s32 %v914, 16
        %v1169 = vadd.s32 %v921, 16
        %v1170 = vadd.s32 %v928, 16
        %v1171 = vadd.s32 %v935, 16
        %v1172 = vadd.s32 %v942, 16
        %v1173 = vadd.s32 %v949, 16
        %v1174 = vadd.s32 %v956, 16
        %v1175 = vadd.s32 %v963, 16
        %v1176 = vadd.s32 %v970, 16
        %v1177 = vadd.s32 %v977, 16
        %v1178 = vadd.s32 %v984, 16
        %v1179 = vadd.s32 %v991, 16
        %v1180 = vadd.s32 %v998, 16
        %v1181 = vadd.s32 %v1005, 16
        %v1182 = vadd.s32 %v1012, 16
        %v1183 = vadd.s32 %v1019, 16
        %v1184 = vadd.s32 %v1026, 16
        %v1185 = vadd.s32 %v1033, 16
        %v1186 = vadd.s32 %v1040, 16
        %v1187 = vadd.s32 %v1047, 16
        %v1188 = vadd.s32 %v1054, 16
        %v1189 = vadd.s32 %v1061, 16
        %v1190 = vsel %vm1126, %v1158, %v844
        %v1191 = vsel %vm1127, %v1159, %v851
        %v1192 = vsel %vm1128, %v1160, %v858
        %v1193 = vsel %vm1129, %v1161, %v865
        %v1194 = vsel %vm1130, %v1162, %v872
        %v1195 = vsel %vm1131, %v1163, %v879
        %v1196 = vsel %vm1132, %v1164, %v886
        %v1197 = vsel %vm1133, %v1165, %v893
        %v1198 = vsel %vm1134, %v1166, %v900
        %v1199 = vsel %vm1135, %v1167, %v907
        %v1200 = vsel %vm1136, %v1168, %v914
        %v1201 = vsel %vm1137, %v1169, %v921
        %v1202 = vsel %vm1138, %v1170, %v928
        %v1203 = vsel %vm1139, %v1171, %v935
        %v1204 = vsel %vm1140, %v1172, %v942
        %v1205 = vsel %vm1141, %v1173, %v949
        %v1206 = vsel %vm1142, %v1174, %v956
        %v1207 = vsel %vm1143, %v1175, %v963
        %v1208 = vsel %vm1144, %v1176, %v970
        %v1209 = vsel %vm1145, %v1177, %v977
        %v1210 = vsel %vm1146, %v1178, %v984
        %v1211 = vsel %vm1147, %v1179, %v991
        %v1212 = vsel %vm1148, %v1180, %v998
        %v1213 = vsel %vm1149, %v1181, %v1005
        %v1214 = vsel %vm1150, %v1182, %v1012
        %v1215 = vsel %vm1151, %v1183, %v1019
        %v1216 = vsel %vm1152, %v1184, %v1026
        %v1217 = vsel %vm1153, %v1185, %v1033
        %v1218 = vsel %vm1154, %v1186, %v1040
        %v1219 = vsel %vm1155, %v1187, %v1047
        %v1220 = vsel %vm1156, %v1188, %v1054
        %v1221 = vsel %vm1157, %v1189, %v1061
        %v1222 = vadd.s32 %v1190, 4294967295
        %v1223 = vadd.s32 %v1191, 4294967295
        %v1224 = vadd.s32 %v1192, 4294967295
        %v1225 = vadd.s32 %v1193, 4294967295
        %v1226 = vadd.s32 %v1194, 4294967295
        %v1227 = vadd.s32 %v1195, 4294967295
        %v1228 = vadd.s32 %v1196, 4294967295
        %v1229 = vadd.s32 %v1197, 4294967295
        %v1230 = vadd.s32 %v1198, 4294967295
        %v1231 = vadd.s32 %v1199, 4294967295
        %v1232 = vadd.s32 %v1200, 4294967295
        %v1233 = vadd.s32 %v1201, 4294967295
        %v1234 = vadd.s32 %v1202, 4294967295
        %v1235 = vadd.s32 %v1203, 4294967295
        %v1236 = vadd.s32 %v1204, 4294967295
        %v1237 = vadd.s32 %v1205, 4294967295
        %v1238 = vadd.s32 %v1206, 4294967295
        %v1239 = vadd.s32 %v1207, 4294967295
        %v1240 = vadd.s32 %v1208, 4294967295
        %v1241 = vadd.s32 %v1209, 4294967295
        %v1242 = vadd.s32 %v1210, 4294967295
        %v1243 = vadd.s32 %v1211, 4294967295
        %v1244 = vadd.s32 %v1212, 4294967295
        %v1245 = vadd.s32 %v1213, 4294967295
        %v1246 = vadd.s32 %v1214, 4294967295
        %v1247 = vadd.s32 %v1215, 4294967295
        %v1248 = vadd.s32 %v1216, 4294967295
        %v1249 = vadd.s32 %v1217, 4294967295
        %v1250 = vadd.s32 %v1218, 4294967295
        %v1251 = vadd.s32 %v1219, 4294967295
        %v1252 = vadd.s32 %v1220, 4294967295
        %v1253 = vadd.s32 %v1221, 4294967295
        %vm1254 = vcmp.ge.s32.totalorder %v1222, 0
        %vm1255 = vcmp.ge.s32.totalorder %v1223, 0
        %vm1256 = vcmp.ge.s32.totalorder %v1224, 0
        %vm1257 = vcmp.ge.s32.totalorder %v1225, 0
        %vm1258 = vcmp.ge.s32.totalorder %v1226, 0
        %vm1259 = vcmp.ge.s32.totalorder %v1227, 0
        %vm1260 = vcmp.ge.s32.totalorder %v1228, 0
        %vm1261 = vcmp.ge.s32.totalorder %v1229, 0
        %vm1262 = vcmp.ge.s32.totalorder %v1230, 0
        %vm1263 = vcmp.ge.s32.totalorder %v1231, 0
        %vm1264 = vcmp.ge.s32.totalorder %v1232, 0
        %vm1265 = vcmp.ge.s32.totalorder %v1233, 0
        %vm1266 = vcmp.ge.s32.totalorder %v1234, 0
        %vm1267 = vcmp.ge.s32.totalorder %v1235, 0
        %vm1268 = vcmp.ge.s32.totalorder %v1236, 0
        %vm1269 = vcmp.ge.s32.totalorder %v1237, 0
        %vm1270 = vcmp.ge.s32.totalorder %v1238, 0
        %vm1271 = vcmp.ge.s32.totalorder %v1239, 0
        %vm1272 = vcmp.ge.s32.totalorder %v1240, 0
        %vm1273 = vcmp.ge.s32.totalorder %v1241, 0
        %vm1274 = vcmp.ge.s32.totalorder %v1242, 0
        %vm1275 = vcmp.ge.s32.totalorder %v1243, 0
        %vm1276 = vcmp.ge.s32.totalorder %v1244, 0
        %vm1277 = vcmp.ge.s32.totalorder %v1245, 0
        %vm1278 = vcmp.ge.s32.totalorder %v1246, 0
        %vm1279 = vcmp.ge.s32.totalorder %v1247, 0
        %vm1280 = vcmp.ge.s32.totalorder %v1248, 0
        %vm1281 = vcmp.ge.s32.totalorder %v1249, 0
        %vm1282 = vcmp.ge.s32.totalorder %v1250, 0
        %vm1283 = vcmp.ge.s32.totalorder %v1251, 0
        %vm1284 = vcmp.ge.s32.totalorder %v1252, 0
        %vm1285 = vcmp.ge.s32.totalorder %v1253, 0
        %vm1286 = vcmp.lt.s32.totalorder %v1222, 16
        %vm1287 = vcmp.lt.s32.totalorder %v1223, 16
        %vm1288 = vcmp.lt.s32.totalorder %v1224, 16
        %vm1289 = vcmp.lt.s32.totalorder %v1225, 16
        %vm1290 = vcmp.lt.s32.totalorder %v1226, 16
        %vm1291 = vcmp.lt.s32.totalorder %v1227, 16
        %vm1292 = vcmp.lt.s32.totalorder %v1228, 16
        %vm1293 = vcmp.lt.s32.totalorder %v1229, 16
        %vm1294 = vcmp.lt.s32.totalorder %v1230, 16
        %vm1295 = vcmp.lt.s32.totalorder %v1231, 16
        %vm1296 = vcmp.lt.s32.totalorder %v1232, 16
        %vm1297 = vcmp.lt.s32.totalorder %v1233, 16
        %vm1298 = vcmp.lt.s32.totalorder %v1234, 16
        %vm1299 = vcmp.lt.s32.totalorder %v1235, 16
        %vm1300 = vcmp.lt.s32.totalorder %v1236, 16
        %vm1301 = vcmp.lt.s32.totalorder %v1237, 16
        %vm1302 = vcmp.lt.s32.totalorder %v1238, 16
        %vm1303 = vcmp.lt.s32.totalorder %v1239, 16
        %vm1304 = vcmp.lt.s32.totalorder %v1240, 16
        %vm1305 = vcmp.lt.s32.totalorder %v1241, 16
        %vm1306 = vcmp.lt.s32.totalorder %v1242, 16
        %vm1307 = vcmp.lt.s32.totalorder %v1243, 16
        %vm1308 = vcmp.lt.s32.totalorder %v1244, 16
        %vm1309 = vcmp.lt.s32.totalorder %v1245, 16
        %vm1310 = vcmp.lt.s32.totalorder %v1246, 16
        %vm1311 = vcmp.lt.s32.totalorder %v1247, 16
        %vm1312 = vcmp.lt.s32.totalorder %v1248, 16
        %vm1313 = vcmp.lt.s32.totalorder %v1249, 16
        %vm1314 = vcmp.lt.s32.totalorder %v1250, 16
        %vm1315 = vcmp.lt.s32.totalorder %v1251, 16
        %vm1316 = vcmp.lt.s32.totalorder %v1252, 16
        %vm1317 = vcmp.lt.s32.totalorder %v1253, 16
        %vm1318 = vmand %vm1254, %vm1286
        %vm1319 = vmand %vm1255, %vm1287
        %vm1320 = vmand %vm1256, %vm1288
        %vm1321 = vmand %vm1257, %vm1289
        %vm1322 = vmand %vm1258, %vm1290
        %vm1323 = vmand %vm1259, %vm1291
        %vm1324 = vmand %vm1260, %vm1292
        %vm1325 = vmand %vm1261, %vm1293
        %vm1326 = vmand %vm1262, %vm1294
        %vm1327 = vmand %vm1263, %vm1295
        %vm1328 = vmand %vm1264, %vm1296
        %vm1329 = vmand %vm1265, %vm1297
        %vm1330 = vmand %vm1266, %vm1298
        %vm1331 = vmand %vm1267, %vm1299
        %vm1332 = vmand %vm1268, %vm1300
        %vm1333 = vmand %vm1269, %vm1301
        %vm1334 = vmand %vm1270, %vm1302
        %vm1335 = vmand %vm1271, %vm1303
        %vm1336 = vmand %vm1272, %vm1304
        %vm1337 = vmand %vm1273, %vm1305
        %vm1338 = vmand %vm1274, %vm1306
        %vm1339 = vmand %vm1275, %vm1307
        %vm1340 = vmand %vm1276, %vm1308
        %vm1341 = vmand %vm1277, %vm1309
        %vm1342 = vmand %vm1278, %vm1310
        %vm1343 = vmand %vm1279, %vm1311
        %vm1344 = vmand %vm1280, %vm1312
        %vm1345 = vmand %vm1281, %vm1313
        %vm1346 = vmand %vm1282, %vm1314
        %vm1347 = vmand %vm1283, %vm1315
        %vm1348 = vmand %vm1284, %vm1316
        %vm1349 = vmand %vm1285, %vm1317
        %v1350 = vsel %vm1318, 1, 0
        %v1351 = vsel %vm1319, 1, 0
        %v1352 = vsel %vm1320, 1, 0
        %v1353 = vsel %vm1321, 1, 0
        %v1354 = vsel %vm1322, 1, 0
        %v1355 = vsel %vm1323, 1, 0
        %v1356 = vsel %vm1324, 1, 0
        %v1357 = vsel %vm1325, 1, 0
        %v1358 = vsel %vm1326, 1, 0
        %v1359 = vsel %vm1327, 1, 0
        %v1360 = vsel %vm1328, 1, 0
        %v1361 = vsel %vm1329, 1, 0
        %v1362 = vsel %vm1330, 1, 0
        %v1363 = vsel %vm1331, 1, 0
        %v1364 = vsel %vm1332, 1, 0
        %v1365 = vsel %vm1333, 1, 0
        %v1366 = vsel %vm1334, 1, 0
        %v1367 = vsel %vm1335, 1, 0
        %v1368 = vsel %vm1336, 1, 0
        %v1369 = vsel %vm1337, 1, 0
        %v1370 = vsel %vm1338, 1, 0
        %v1371 = vsel %vm1339, 1, 0
        %v1372 = vsel %vm1340, 1, 0
        %v1373 = vsel %vm1341, 1, 0
        %v1374 = vsel %vm1342, 1, 0
        %v1375 = vsel %vm1343, 1, 0
        %v1376 = vsel %vm1344, 1, 0
        %v1377 = vsel %vm1345, 1, 0
        %v1378 = vsel %vm1346, 1, 0
        %v1379 = vsel %vm1347, 1, 0
        %v1380 = vsel %vm1348, 1, 0
        %v1381 = vsel %vm1349, 1, 0
        %vm1382 = vcmp.eq.s32.totalorder %v1350, 1
        %vm1383 = vcmp.eq.s32.totalorder %v1351, 1
        %vm1384 = vcmp.eq.s32.totalorder %v1352, 1
        %vm1385 = vcmp.eq.s32.totalorder %v1353, 1
        %vm1386 = vcmp.eq.s32.totalorder %v1354, 1
        %vm1387 = vcmp.eq.s32.totalorder %v1355, 1
        %vm1388 = vcmp.eq.s32.totalorder %v1356, 1
        %vm1389 = vcmp.eq.s32.totalorder %v1357, 1
        %vm1390 = vcmp.eq.s32.totalorder %v1358, 1
        %vm1391 = vcmp.eq.s32.totalorder %v1359, 1
        %vm1392 = vcmp.eq.s32.totalorder %v1360, 1
        %vm1393 = vcmp.eq.s32.totalorder %v1361, 1
        %vm1394 = vcmp.eq.s32.totalorder %v1362, 1
        %vm1395 = vcmp.eq.s32.totalorder %v1363, 1
        %vm1396 = vcmp.eq.s32.totalorder %v1364, 1
        %vm1397 = vcmp.eq.s32.totalorder %v1365, 1
        %vm1398 = vcmp.eq.s32.totalorder %v1366, 1
        %vm1399 = vcmp.eq.s32.totalorder %v1367, 1
        %vm1400 = vcmp.eq.s32.totalorder %v1368, 1
        %vm1401 = vcmp.eq.s32.totalorder %v1369, 1
        %vm1402 = vcmp.eq.s32.totalorder %v1370, 1
        %vm1403 = vcmp.eq.s32.totalorder %v1371, 1
        %vm1404 = vcmp.eq.s32.totalorder %v1372, 1
        %vm1405 = vcmp.eq.s32.totalorder %v1373, 1
        %vm1406 = vcmp.eq.s32.totalorder %v1374, 1
        %vm1407 = vcmp.eq.s32.totalorder %v1375, 1
        %vm1408 = vcmp.eq.s32.totalorder %v1376, 1
        %vm1409 = vcmp.eq.s32.totalorder %v1377, 1
        %vm1410 = vcmp.eq.s32.totalorder %v1378, 1
        %vm1411 = vcmp.eq.s32.totalorder %v1379, 1
        %vm1412 = vcmp.eq.s32.totalorder %v1380, 1
        %vm1413 = vcmp.eq.s32.totalorder %v1381, 1
        %vm1445 = vcmask 1040384
        %v1446 = vrot.slane 0.0, 7
        %v1447 = vsel %vm1445, %v1446, %v1446
        %v1448 = vrot.slane %v773, 7
        %v1449 = vsel %vm1445, %v1446, %v1448
        %v1450 = vrot.slane %v774, 7
        %v1451 = vsel %vm1445, %v1448, %v1450
        %v1452 = vrot.slane %v775, 7
        %v1453 = vsel %vm1445, %v1450, %v1452
        %v1454 = vrot.slane %v776, 7
        %v1455 = vsel %vm1445, %v1452, %v1454
        %v1456 = vrot.slane %v777, 7
        %v1457 = vsel %vm1445, %v1454, %v1456
        %v1458 = vrot.slane %v778, 7
        %v1459 = vsel %vm1445, %v1456, %v1458
        %v1460 = vrot.slane %v779, 7
        %v1461 = vsel %vm1445, %v1458, %v1460
        %v1462 = vrot.slane %v780, 7
        %v1463 = vsel %vm1445, %v1460, %v1462
        %v1464 = vrot.slane %v781, 7
        %v1465 = vsel %vm1445, %v1462, %v1464
        %v1466 = vrot.slane %v782, 7
        %v1467 = vsel %vm1445, %v1464, %v1466
        %v1468 = vrot.slane %v783, 7
        %v1469 = vsel %vm1445, %v1466, %v1468
        %v1470 = vrot.slane %v784, 7
        %v1471 = vsel %vm1445, %v1468, %v1470
        %v1472 = vrot.slane %v785, 7
        %v1473 = vsel %vm1445, %v1470, %v1472
        %v1474 = vrot.slane %v786, 7
        %v1475 = vsel %vm1445, %v1472, %v1474
        %v1476 = vrot.slane %v787, 7
        %v1477 = vsel %vm1445, %v1474, %v1476
        %v1478 = vrot.slane %v788, 7
        %v1479 = vsel %vm1445, %v1476, %v1478
        %v1480 = vrot.slane %v789, 7
        %v1481 = vsel %vm1445, %v1478, %v1480
        %v1482 = vrot.slane %v790, 7
        %v1483 = vsel %vm1445, %v1480, %v1482
        %v1484 = vrot.slane %v791, 7
        %v1485 = vsel %vm1445, %v1482, %v1484
        %v1486 = vrot.slane %v792, 7
        %v1487 = vsel %vm1445, %v1484, %v1486
        %v1488 = vrot.slane %v793, 7
        %v1489 = vsel %vm1445, %v1486, %v1488
        %v1490 = vrot.slane %v794, 7
        %v1491 = vsel %vm1445, %v1488, %v1490
        %v1492 = vrot.slane %v795, 7
        %v1493 = vsel %vm1445, %v1490, %v1492
        %v1494 = vrot.slane %v796, 7
        %v1495 = vsel %vm1445, %v1492, %v1494
        %v1496 = vrot.slane %v797, 7
        %v1497 = vsel %vm1445, %v1494, %v1496
        %v1498 = vrot.slane %v798, 7
        %v1499 = vsel %vm1445, %v1496, %v1498
        %v1500 = vrot.slane %v799, 7
        %v1501 = vsel %vm1445, %v1498, %v1500
        %v1502 = vrot.slane %v800, 7
        %v1503 = vsel %vm1445, %v1500, %v1502
        %v1504 = vrot.slane %v801, 7
        %v1505 = vsel %vm1445, %v1502, %v1504
        %v1506 = vrot.slane %v802, 7
        %v1507 = vsel %vm1445, %v1504, %v1506
        %v1539 = vsel %vm1382, %v1447, 0.0
        %v1540 = vsel %vm1383, %v1447, 0.0
        %v1541 = vsel %vm1384, %v1449, 0.0
        %v1542 = vsel %vm1385, %v1451, 0.0
        %v1543 = vsel %vm1386, %v1453, 0.0
        %v1544 = vsel %vm1387, %v1455, 0.0
        %v1545 = vsel %vm1388, %v1457, 0.0
        %v1546 = vsel %vm1389, %v1459, 0.0
        %v1547 = vsel %vm1390, %v1461, 0.0
        %v1548 = vsel %vm1391, %v1463, 0.0
        %v1549 = vsel %vm1392, %v1465, 0.0
        %v1550 = vsel %vm1393, %v1467, 0.0
        %v1551 = vsel %vm1394, %v1469, 0.0
        %v1552 = vsel %vm1395, %v1471, 0.0
        %v1553 = vsel %vm1396, %v1473, 0.0
        %v1554 = vsel %vm1397, %v1475, 0.0
        %v1555 = vsel %vm1398, %v1477, 0.0
        %v1556 = vsel %vm1399, %v1479, 0.0
        %v1557 = vsel %vm1400, %v1481, 0.0
        %v1558 = vsel %vm1401, %v1483, 0.0
        %v1559 = vsel %vm1402, %v1485, 0.0
        %v1560 = vsel %vm1403, %v1487, 0.0
        %v1561 = vsel %vm1404, %v1489, 0.0
        %v1562 = vsel %vm1405, %v1491, 0.0
        %v1563 = vsel %vm1406, %v1493, 0.0
        %v1564 = vsel %vm1407, %v1495, 0.0
        %v1565 = vsel %vm1408, %v1497, 0.0
        %v1566 = vsel %vm1409, %v1499, 0.0
        %v1567 = vsel %vm1410, %v1501, 0.0
        %v1568 = vsel %vm1411, %v1503, 0.0
        %v1569 = vsel %vm1412, %v1505, 0.0
        %v1570 = vsel %vm1413, %v1507, 0.0
        %v1571 = vadd.s32 %v1190, 1
        %v1572 = vadd.s32 %v1191, 1
        %v1573 = vadd.s32 %v1192, 1
        %v1574 = vadd.s32 %v1193, 1
        %v1575 = vadd.s32 %v1194, 1
        %v1576 = vadd.s32 %v1195, 1
        %v1577 = vadd.s32 %v1196, 1
        %v1578 = vadd.s32 %v1197, 1
        %v1579 = vadd.s32 %v1198, 1
        %v1580 = vadd.s32 %v1199, 1
        %v1581 = vadd.s32 %v1200, 1
        %v1582 = vadd.s32 %v1201, 1
        %v1583 = vadd.s32 %v1202, 1
        %v1584 = vadd.s32 %v1203, 1
        %v1585 = vadd.s32 %v1204, 1
        %v1586 = vadd.s32 %v1205, 1
        %v1587 = vadd.s32 %v1206, 1
        %v1588 = vadd.s32 %v1207, 1
        %v1589 = vadd.s32 %v1208, 1
        %v1590 = vadd.s32 %v1209, 1
        %v1591 = vadd.s32 %v1210, 1
        %v1592 = vadd.s32 %v1211, 1
        %v1593 = vadd.s32 %v1212, 1
        %v1594 = vadd.s32 %v1213, 1
        %v1595 = vadd.s32 %v1214, 1
        %v1596 = vadd.s32 %v1215, 1
        %v1597 = vadd.s32 %v1216, 1
        %v1598 = vadd.s32 %v1217, 1
        %v1599 = vadd.s32 %v1218, 1
        %v1600 = vadd.s32 %v1219, 1
        %v1601 = vadd.s32 %v1220, 1
        %v1602 = vadd.s32 %v1221, 1
        %vm1603 = vcmp.ge.s32.totalorder %v1571, 0
        %vm1604 = vcmp.ge.s32.totalorder %v1572, 0
        %vm1605 = vcmp.ge.s32.totalorder %v1573, 0
        %vm1606 = vcmp.ge.s32.totalorder %v1574, 0
        %vm1607 = vcmp.ge.s32.totalorder %v1575, 0
        %vm1608 = vcmp.ge.s32.totalorder %v1576, 0
        %vm1609 = vcmp.ge.s32.totalorder %v1577, 0
        %vm1610 = vcmp.ge.s32.totalorder %v1578, 0
        %vm1611 = vcmp.ge.s32.totalorder %v1579, 0
        %vm1612 = vcmp.ge.s32.totalorder %v1580, 0
        %vm1613 = vcmp.ge.s32.totalorder %v1581, 0
        %vm1614 = vcmp.ge.s32.totalorder %v1582, 0
        %vm1615 = vcmp.ge.s32.totalorder %v1583, 0
        %vm1616 = vcmp.ge.s32.totalorder %v1584, 0
        %vm1617 = vcmp.ge.s32.totalorder %v1585, 0
        %vm1618 = vcmp.ge.s32.totalorder %v1586, 0
        %vm1619 = vcmp.ge.s32.totalorder %v1587, 0
        %vm1620 = vcmp.ge.s32.totalorder %v1588, 0
        %vm1621 = vcmp.ge.s32.totalorder %v1589, 0
        %vm1622 = vcmp.ge.s32.totalorder %v1590, 0
        %vm1623 = vcmp.ge.s32.totalorder %v1591, 0
        %vm1624 = vcmp.ge.s32.totalorder %v1592, 0
        %vm1625 = vcmp.ge.s32.totalorder %v1593, 0
        %vm1626 = vcmp.ge.s32.totalorder %v1594, 0
        %vm1627 = vcmp.ge.s32.totalorder %v1595, 0
        %vm1628 = vcmp.ge.s32.totalorder %v1596, 0
        %vm1629 = vcmp.ge.s32.totalorder %v1597, 0
        %vm1630 = vcmp.ge.s32.totalorder %v1598, 0
        %vm1631 = vcmp.ge.s32.totalorder %v1599, 0
        %vm1632 = vcmp.ge.s32.totalorder %v1600, 0
        %vm1633 = vcmp.ge.s32.totalorder %v1601, 0
        %vm1634 = vcmp.ge.s32.totalorder %v1602, 0
        %vm1635 = vcmp.lt.s32.totalorder %v1571, 16
        %vm1636 = vcmp.lt.s32.totalorder %v1572, 16
        %vm1637 = vcmp.lt.s32.totalorder %v1573, 16
        %vm1638 = vcmp.lt.s32.totalorder %v1574, 16
        %vm1639 = vcmp.lt.s32.totalorder %v1575, 16
        %vm1640 = vcmp.lt.s32.totalorder %v1576, 16
        %vm1641 = vcmp.lt.s32.totalorder %v1577, 16
        %vm1642 = vcmp.lt.s32.totalorder %v1578, 16
        %vm1643 = vcmp.lt.s32.totalorder %v1579, 16
        %vm1644 = vcmp.lt.s32.totalorder %v1580, 16
        %vm1645 = vcmp.lt.s32.totalorder %v1581, 16
        %vm1646 = vcmp.lt.s32.totalorder %v1582, 16
        %vm1647 = vcmp.lt.s32.totalorder %v1583, 16
        %vm1648 = vcmp.lt.s32.totalorder %v1584, 16
        %vm1649 = vcmp.lt.s32.totalorder %v1585, 16
        %vm1650 = vcmp.lt.s32.totalorder %v1586, 16
        %vm1651 = vcmp.lt.s32.totalorder %v1587, 16
        %vm1652 = vcmp.lt.s32.totalorder %v1588, 16
        %vm1653 = vcmp.lt.s32.totalorder %v1589, 16
        %vm1654 = vcmp.lt.s32.totalorder %v1590, 16
        %vm1655 = vcmp.lt.s32.totalorder %v1591, 16
        %vm1656 = vcmp.lt.s32.totalorder %v1592, 16
        %vm1657 = vcmp.lt.s32.totalorder %v1593, 16
        %vm1658 = vcmp.lt.s32.totalorder %v1594, 16
        %vm1659 = vcmp.lt.s32.totalorder %v1595, 16
        %vm1660 = vcmp.lt.s32.totalorder %v1596, 16
        %vm1661 = vcmp.lt.s32.totalorder %v1597, 16
        %vm1662 = vcmp.lt.s32.totalorder %v1598, 16
        %vm1663 = vcmp.lt.s32.totalorder %v1599, 16
        %vm1664 = vcmp.lt.s32.totalorder %v1600, 16
        %vm1665 = vcmp.lt.s32.totalorder %v1601, 16
        %vm1666 = vcmp.lt.s32.totalorder %v1602, 16
        %vm1667 = vmand %vm1603, %vm1635
        %vm1668 = vmand %vm1604, %vm1636
        %vm1669 = vmand %vm1605, %vm1637
        %vm1670 = vmand %vm1606, %vm1638
        %vm1671 = vmand %vm1607, %vm1639
        %vm1672 = vmand %vm1608, %vm1640
        %vm1673 = vmand %vm1609, %vm1641
        %vm1674 = vmand %vm1610, %vm1642
        %vm1675 = vmand %vm1611, %vm1643
        %vm1676 = vmand %vm1612, %vm1644
        %vm1677 = vmand %vm1613, %vm1645
        %vm1678 = vmand %vm1614, %vm1646
        %vm1679 = vmand %vm1615, %vm1647
        %vm1680 = vmand %vm1616, %vm1648
        %vm1681 = vmand %vm1617, %vm1649
        %vm1682 = vmand %vm1618, %vm1650
        %vm1683 = vmand %vm1619, %vm1651
        %vm1684 = vmand %vm1620, %vm1652
        %vm1685 = vmand %vm1621, %vm1653
        %vm1686 = vmand %vm1622, %vm1654
        %vm1687 = vmand %vm1623, %vm1655
        %vm1688 = vmand %vm1624, %vm1656
        %vm1689 = vmand %vm1625, %vm1657
        %vm1690 = vmand %vm1626, %vm1658
        %vm1691 = vmand %vm1627, %vm1659
        %vm1692 = vmand %vm1628, %vm1660
        %vm1693 = vmand %vm1629, %vm1661
        %vm1694 = vmand %vm1630, %vm1662
        %vm1695 = vmand %vm1631, %vm1663
        %vm1696 = vmand %vm1632, %vm1664
        %vm1697 = vmand %vm1633, %vm1665
        %vm1698 = vmand %vm1634, %vm1666
        %v1699 = vsel %vm1667, 1, 0
        %v1700 = vsel %vm1668, 1, 0
        %v1701 = vsel %vm1669, 1, 0
        %v1702 = vsel %vm1670, 1, 0
        %v1703 = vsel %vm1671, 1, 0
        %v1704 = vsel %vm1672, 1, 0
        %v1705 = vsel %vm1673, 1, 0
        %v1706 = vsel %vm1674, 1, 0
        %v1707 = vsel %vm1675, 1, 0
        %v1708 = vsel %vm1676, 1, 0
        %v1709 = vsel %vm1677, 1, 0
        %v1710 = vsel %vm1678, 1, 0
        %v1711 = vsel %vm1679, 1, 0
        %v1712 = vsel %vm1680, 1, 0
        %v1713 = vsel %vm1681, 1, 0
        %v1714 = vsel %vm1682, 1, 0
        %v1715 = vsel %vm1683, 1, 0
        %v1716 = vsel %vm1684, 1, 0
        %v1717 = vsel %vm1685, 1, 0
        %v1718 = vsel %vm1686, 1, 0
        %v1719 = vsel %vm1687, 1, 0
        %v1720 = vsel %vm1688, 1, 0
        %v1721 = vsel %vm1689, 1, 0
        %v1722 = vsel %vm1690, 1, 0
        %v1723 = vsel %vm1691, 1, 0
        %v1724 = vsel %vm1692, 1, 0
        %v1725 = vsel %vm1693, 1, 0
        %v1726 = vsel %vm1694, 1, 0
        %v1727 = vsel %vm1695, 1, 0
        %v1728 = vsel %vm1696, 1, 0
        %v1729 = vsel %vm1697, 1, 0
        %v1730 = vsel %vm1698, 1, 0
        %vm1731 = vcmp.eq.s32.totalorder %v1699, 1
        %vm1732 = vcmp.eq.s32.totalorder %v1700, 1
        %vm1733 = vcmp.eq.s32.totalorder %v1701, 1
        %vm1734 = vcmp.eq.s32.totalorder %v1702, 1
        %vm1735 = vcmp.eq.s32.totalorder %v1703, 1
        %vm1736 = vcmp.eq.s32.totalorder %v1704, 1
        %vm1737 = vcmp.eq.s32.totalorder %v1705, 1
        %vm1738 = vcmp.eq.s32.totalorder %v1706, 1
        %vm1739 = vcmp.eq.s32.totalorder %v1707, 1
        %vm1740 = vcmp.eq.s32.totalorder %v1708, 1
        %vm1741 = vcmp.eq.s32.totalorder %v1709, 1
        %vm1742 = vcmp.eq.s32.totalorder %v1710, 1
        %vm1743 = vcmp.eq.s32.totalorder %v1711, 1
        %vm1744 = vcmp.eq.s32.totalorder %v1712, 1
        %vm1745 = vcmp.eq.s32.totalorder %v1713, 1
        %vm1746 = vcmp.eq.s32.totalorder %v1714, 1
        %vm1747 = vcmp.eq.s32.totalorder %v1715, 1
        %vm1748 = vcmp.eq.s32.totalorder %v1716, 1
        %vm1749 = vcmp.eq.s32.totalorder %v1717, 1
        %vm1750 = vcmp.eq.s32.totalorder %v1718, 1
        %vm1751 = vcmp.eq.s32.totalorder %v1719, 1
        %vm1752 = vcmp.eq.s32.totalorder %v1720, 1
        %vm1753 = vcmp.eq.s32.totalorder %v1721, 1
        %vm1754 = vcmp.eq.s32.totalorder %v1722, 1
        %vm1755 = vcmp.eq.s32.totalorder %v1723, 1
        %vm1756 = vcmp.eq.s32.totalorder %v1724, 1
        %vm1757 = vcmp.eq.s32.totalorder %v1725, 1
        %vm1758 = vcmp.eq.s32.totalorder %v1726, 1
        %vm1759 = vcmp.eq.s32.totalorder %v1727, 1
        %vm1760 = vcmp.eq.s32.totalorder %v1728, 1
        %vm1761 = vcmp.eq.s32.totalorder %v1729, 1
        %vm1762 = vcmp.eq.s32.totalorder %v1730, 1
        %vm1764 = vcmask 1046528
        %v1765 = vrot.slane 0.0, 1
        %v1766 = vsel %vm1764, %v1765, %v1765
        %v1767 = vrot.slane %v773, 1
        %v1768 = vsel %vm1764, %v1765, %v1767
        %v1769 = vrot.slane %v774, 1
        %v1770 = vsel %vm1764, %v1767, %v1769
        %v1771 = vrot.slane %v775, 1
        %v1772 = vsel %vm1764, %v1769, %v1771
        %v1773 = vrot.slane %v776, 1
        %v1774 = vsel %vm1764, %v1771, %v1773
        %v1775 = vrot.slane %v777, 1
        %v1776 = vsel %vm1764, %v1773, %v1775
        %v1777 = vrot.slane %v778, 1
        %v1778 = vsel %vm1764, %v1775, %v1777
        %v1779 = vrot.slane %v779, 1
        %v1780 = vsel %vm1764, %v1777, %v1779
        %v1781 = vrot.slane %v780, 1
        %v1782 = vsel %vm1764, %v1779, %v1781
        %v1783 = vrot.slane %v781, 1
        %v1784 = vsel %vm1764, %v1781, %v1783
        %v1785 = vrot.slane %v782, 1
        %v1786 = vsel %vm1764, %v1783, %v1785
        %v1787 = vrot.slane %v783, 1
        %v1788 = vsel %vm1764, %v1785, %v1787
        %v1789 = vrot.slane %v784, 1
        %v1790 = vsel %vm1764, %v1787, %v1789
        %v1791 = vrot.slane %v785, 1
        %v1792 = vsel %vm1764, %v1789, %v1791
        %v1793 = vrot.slane %v786, 1
        %v1794 = vsel %vm1764, %v1791, %v1793
        %v1795 = vrot.slane %v787, 1
        %v1796 = vsel %vm1764, %v1793, %v1795
        %v1797 = vrot.slane %v788, 1
        %v1798 = vsel %vm1764, %v1795, %v1797
        %v1799 = vrot.slane %v789, 1
        %v1800 = vsel %vm1764, %v1797, %v1799
        %v1801 = vrot.slane %v790, 1
        %v1802 = vsel %vm1764, %v1799, %v1801
        %v1803 = vrot.slane %v791, 1
        %v1804 = vsel %vm1764, %v1801, %v1803
        %v1805 = vrot.slane %v792, 1
        %v1806 = vsel %vm1764, %v1803, %v1805
        %v1807 = vrot.slane %v793, 1
        %v1808 = vsel %vm1764, %v1805, %v1807
        %v1809 = vrot.slane %v794, 1
        %v1810 = vsel %vm1764, %v1807, %v1809
        %v1811 = vrot.slane %v795, 1
        %v1812 = vsel %vm1764, %v1809, %v1811
        %v1813 = vrot.slane %v796, 1
        %v1814 = vsel %vm1764, %v1811, %v1813
        %v1815 = vrot.slane %v797, 1
        %v1816 = vsel %vm1764, %v1813, %v1815
        %v1817 = vrot.slane %v798, 1
        %v1818 = vsel %vm1764, %v1815, %v1817
        %v1819 = vrot.slane %v799, 1
        %v1820 = vsel %vm1764, %v1817, %v1819
        %v1821 = vrot.slane %v800, 1
        %v1822 = vsel %vm1764, %v1819, %v1821
        %v1823 = vrot.slane %v801, 1
        %v1824 = vsel %vm1764, %v1821, %v1823
        %v1825 = vrot.slane %v802, 1
        %v1826 = vsel %vm1764, %v1823, %v1825
        %v1827 = vrot.slane %v803, 1
        %v1828 = vsel %vm1764, %v1825, %v1827
        %v1861 = vsel %vm1731, %v1766, 0.0
        %v1862 = vsel %vm1732, %v1768, 0.0
        %v1863 = vsel %vm1733, %v1770, 0.0
        %v1864 = vsel %vm1734, %v1772, 0.0
        %v1865 = vsel %vm1735, %v1774, 0.0
        %v1866 = vsel %vm1736, %v1776, 0.0
        %v1867 = vsel %vm1737, %v1778, 0.0
        %v1868 = vsel %vm1738, %v1780, 0.0
        %v1869 = vsel %vm1739, %v1782, 0.0
        %v1870 = vsel %vm1740, %v1784, 0.0
        %v1871 = vsel %vm1741, %v1786, 0.0
        %v1872 = vsel %vm1742, %v1788, 0.0
        %v1873 = vsel %vm1743, %v1790, 0.0
        %v1874 = vsel %vm1744, %v1792, 0.0
        %v1875 = vsel %vm1745, %v1794, 0.0
        %v1876 = vsel %vm1746, %v1796, 0.0
        %v1877 = vsel %vm1747, %v1798, 0.0
        %v1878 = vsel %vm1748, %v1800, 0.0
        %v1879 = vsel %vm1749, %v1802, 0.0
        %v1880 = vsel %vm1750, %v1804, 0.0
        %v1881 = vsel %vm1751, %v1806, 0.0
        %v1882 = vsel %vm1752, %v1808, 0.0
        %v1883 = vsel %vm1753, %v1810, 0.0
        %v1884 = vsel %vm1754, %v1812, 0.0
        %v1885 = vsel %vm1755, %v1814, 0.0
        %v1886 = vsel %vm1756, %v1816, 0.0
        %v1887 = vsel %vm1757, %v1818, 0.0
        %v1888 = vsel %vm1758, %v1820, 0.0
        %v1889 = vsel %vm1759, %v1822, 0.0
        %v1890 = vsel %vm1760, %v1824, 0.0
        %v1891 = vsel %vm1761, %v1826, 0.0
        %v1892 = vsel %vm1762, %v1828, 0.0
        %v1893 = vld [vmem:[#allocation7] sm:$0xff]
        %v1894 = vld [vmem:[#allocation7 + $0x8] sm:$0xff]
        %v1895 = vld [vmem:[#allocation7 + $0x10] sm:$0xff]
        %v1896 = vld [vmem:[#allocation7 + $0x18] sm:$0xff]
        %v1897 = vld [vmem:[#allocation7 + $0x20] sm:$0xff]
        %v1898 = vld [vmem:[#allocation7 + $0x28] sm:$0xff]
        %v1899 = vld [vmem:[#allocation7 + $0x30] sm:$0xff]
        %v1900 = vld [vmem:[#allocation7 + $0x38] sm:$0xff]
        %v1901 = vld [vmem:[#allocation7 + $0x40] sm:$0xff]
        %v1902 = vld [vmem:[#allocation7 + $0x48] sm:$0xff]
        %v1903 = vld [vmem:[#allocation7 + $0x50] sm:$0xff]
        %v1904 = vld [vmem:[#allocation7 + $0x58] sm:$0xff]
        %v1905 = vld [vmem:[#allocation7 + $0x60] sm:$0xff]
        %v1906 = vld [vmem:[#allocation7 + $0x68] sm:$0xff]
        %v1907 = vld [vmem:[#allocation7 + $0x70] sm:$0xff]
        %v1908 = vld [vmem:[#allocation7 + $0x78] sm:$0xff]
        %v1909 = vld [vmem:[#allocation7 + $0x80] sm:$0xff]
        %v1910 = vld [vmem:[#allocation7 + $0x88] sm:$0xff]
        %v1911 = vld [vmem:[#allocation7 + $0x90] sm:$0xff]
        %v1912 = vld [vmem:[#allocation7 + $0x98] sm:$0xff]
        %v1913 = vld [vmem:[#allocation7 + $0xa0] sm:$0xff]
        %v1914 = vld [vmem:[#allocation7 + $0xa8] sm:$0xff]
        %v1915 = vld [vmem:[#allocation7 + $0xb0] sm:$0xff]
        %v1916 = vld [vmem:[#allocation7 + $0xb8] sm:$0xff]
        %v1917 = vld [vmem:[#allocation7 + $0xc0] sm:$0xff]
        %v1918 = vld [vmem:[#allocation7 + $0xc8] sm:$0xff]
        %v1919 = vld [vmem:[#allocation7 + $0xd0] sm:$0xff]
        %v1920 = vld [vmem:[#allocation7 + $0xd8] sm:$0xff]
        %v1921 = vld [vmem:[#allocation7 + $0xe0] sm:$0xff]
        %v1922 = vld [vmem:[#allocation7 + $0xe8] sm:$0xff]
        %v1923 = vld [vmem:[#allocation7 + $0xf0] sm:$0xff]
        %v1924 = vld [vmem:[#allocation7 + $0xf8] sm:$0xff]
        %v1925 = vld [vmem:[#allocation7 + $0x100] sm:$0xff]
        %v1926 = vld [vmem:[#allocation7 + $0x108] sm:$0xff]
        %v1927 = vld [vmem:[#allocation7 + $0x110] sm:$0xff]
        %v1928 = vld [vmem:[#allocation7 + $0x118] sm:$0xff]
        %v1929 = vld [vmem:[#allocation7 + $0x120] sm:$0xff]
        %v1930 = vld [vmem:[#allocation7 + $0x128] sm:$0xff]
        %v1931 = vld [vmem:[#allocation7 + $0x130] sm:$0xff]
        %v1932 = vld [vmem:[#allocation7 + $0x138] sm:$0xff]
        %v1933 = vld [vmem:[#allocation7 + $0x140] sm:$0xff]
        %v1934 = vld [vmem:[#allocation7 + $0x148] sm:$0xff]
        %v1935 = vld [vmem:[#allocation7 + $0x150] sm:$0xff]
        %v1936 = vld [vmem:[#allocation7 + $0x158] sm:$0xff]
        %v1937 = vld [vmem:[#allocation7 + $0x160] sm:$0xff]
        %v1938 = vld [vmem:[#allocation7 + $0x168] sm:$0xff]
        %v1939 = vld [vmem:[#allocation7 + $0x170] sm:$0xff]
        %v1940 = vld [vmem:[#allocation7 + $0x178] sm:$0xff]
        %v1942 = vrot.slane %v803, 7
        %v1943 = vsel %vm1445, %v1506, %v1942
        %v1944 = vrot.slane %v804, 7
        %v1945 = vsel %vm1445, %v1942, %v1944
        %v1948 = vsel %vm1382, %v1449, 0.0
        %v1949 = vsel %vm1383, %v1451, 0.0
        %v1950 = vsel %vm1384, %v1453, 0.0
        %v1951 = vsel %vm1385, %v1455, 0.0
        %v1952 = vsel %vm1386, %v1457, 0.0
        %v1953 = vsel %vm1387, %v1459, 0.0
        %v1954 = vsel %vm1388, %v1461, 0.0
        %v1955 = vsel %vm1389, %v1463, 0.0
        %v1956 = vsel %vm1390, %v1465, 0.0
        %v1957 = vsel %vm1391, %v1467, 0.0
        %v1958 = vsel %vm1392, %v1469, 0.0
        %v1959 = vsel %vm1393, %v1471, 0.0
        %v1960 = vsel %vm1394, %v1473, 0.0
        %v1961 = vsel %vm1395, %v1475, 0.0
        %v1962 = vsel %vm1396, %v1477, 0.0
        %v1963 = vsel %vm1397, %v1479, 0.0
        %v1964 = vsel %vm1398, %v1481, 0.0
        %v1965 = vsel %vm1399, %v1483, 0.0
        %v1966 = vsel %vm1400, %v1485, 0.0
        %v1967 = vsel %vm1401, %v1487, 0.0
        %v1968 = vsel %vm1402, %v1489, 0.0
        %v1969 = vsel %vm1403, %v1491, 0.0
        %v1970 = vsel %vm1404, %v1493, 0.0
        %v1971 = vsel %vm1405, %v1495, 0.0
        %v1972 = vsel %vm1406, %v1497, 0.0
        %v1973 = vsel %vm1407, %v1499, 0.0
        %v1974 = vsel %vm1408, %v1501, 0.0
        %v1975 = vsel %vm1409, %v1503, 0.0
        %v1976 = vsel %vm1410, %v1505, 0.0
        %v1977 = vsel %vm1411, %v1507, 0.0
        %v1978 = vsel %vm1412, %v1943, 0.0
        %v1979 = vsel %vm1413, %v1945, 0.0
        %v1980 = vrot.slane %v804, 1
        %v1981 = vsel %vm1764, %v1827, %v1980
        %v1982 = vsel %vm1764, %v1980, %v1765
        %v1985 = vsel %vm1731, %v1770, 0.0
        %v1986 = vsel %vm1732, %v1772, 0.0
        %v1987 = vsel %vm1733, %v1774, 0.0
        %v1988 = vsel %vm1734, %v1776, 0.0
        %v1989 = vsel %vm1735, %v1778, 0.0
        %v1990 = vsel %vm1736, %v1780, 0.0
        %v1991 = vsel %vm1737, %v1782, 0.0
        %v1992 = vsel %vm1738, %v1784, 0.0
        %v1993 = vsel %vm1739, %v1786, 0.0
        %v1994 = vsel %vm1740, %v1788, 0.0
        %v1995 = vsel %vm1741, %v1790, 0.0
        %v1996 = vsel %vm1742, %v1792, 0.0
        %v1997 = vsel %vm1743, %v1794, 0.0
        %v1998 = vsel %vm1744, %v1796, 0.0
        %v1999 = vsel %vm1745, %v1798, 0.0
        %v2000 = vsel %vm1746, %v1800, 0.0
        %v2001 = vsel %vm1747, %v1802, 0.0
        %v2002 = vsel %vm1748, %v1804, 0.0
        %v2003 = vsel %vm1749, %v1806, 0.0
        %v2004 = vsel %vm1750, %v1808, 0.0
        %v2005 = vsel %vm1751, %v1810, 0.0
        %v2006 = vsel %vm1752, %v1812, 0.0
        %v2007 = vsel %vm1753, %v1814, 0.0
        %v2008 = vsel %vm1754, %v1816, 0.0
        %v2009 = vsel %vm1755, %v1818, 0.0
        %v2010 = vsel %vm1756, %v1820, 0.0
        %v2011 = vsel %vm1757, %v1822, 0.0
        %v2012 = vsel %vm1758, %v1824, 0.0
        %v2013 = vsel %vm1759, %v1826, 0.0
        %v2014 = vsel %vm1760, %v1828, 0.0
        %v2015 = vsel %vm1761, %v1981, 0.0
        %v2016 = vsel %vm1762, %v1982, 0.0
        %s2017 = scalar_lea.vmem [#allocation7], 384
        %v2018 = vld [vmem:[%s2017] sm:$0xff]
        %v2019 = vld [vmem:[%s2017 + $0x8] sm:$0xff]
        %v2020 = vld [vmem:[%s2017 + $0x10] sm:$0xff]
        %v2021 = vld [vmem:[%s2017 + $0x18] sm:$0xff]
        %v2022 = vld [vmem:[%s2017 + $0x20] sm:$0xff]
        %v2023 = vld [vmem:[%s2017 + $0x28] sm:$0xff]
        %v2024 = vld [vmem:[%s2017 + $0x30] sm:$0xff]
        %v2025 = vld [vmem:[%s2017 + $0x38] sm:$0xff]
        %v2026 = vld [vmem:[%s2017 + $0x40] sm:$0xff]
        %v2027 = vld [vmem:[%s2017 + $0x48] sm:$0xff]
        %v2028 = vld [vmem:[%s2017 + $0x50] sm:$0xff]
        %v2029 = vld [vmem:[%s2017 + $0x58] sm:$0xff]
        %v2030 = vld [vmem:[%s2017 + $0x60] sm:$0xff]
        %v2031 = vld [vmem:[%s2017 + $0x68] sm:$0xff]
        %v2032 = vld [vmem:[%s2017 + $0x70] sm:$0xff]
        %v2033 = vld [vmem:[%s2017 + $0x78] sm:$0xff]
        %v2034 = vld [vmem:[%s2017 + $0x80] sm:$0xff]
        %v2035 = vld [vmem:[%s2017 + $0x88] sm:$0xff]
        %v2036 = vld [vmem:[%s2017 + $0x90] sm:$0xff]
        %v2037 = vld [vmem:[%s2017 + $0x98] sm:$0xff]
        %v2038 = vld [vmem:[%s2017 + $0xa0] sm:$0xff]
        %v2039 = vld [vmem:[%s2017 + $0xa8] sm:$0xff]
        %v2040 = vld [vmem:[%s2017 + $0xb0] sm:$0xff]
        %v2041 = vld [vmem:[%s2017 + $0xb8] sm:$0xff]
        %v2042 = vld [vmem:[%s2017 + $0xc0] sm:$0xff]
        %v2043 = vld [vmem:[%s2017 + $0xc8] sm:$0xff]
        %v2044 = vld [vmem:[%s2017 + $0xd0] sm:$0xff]
        %v2045 = vld [vmem:[%s2017 + $0xd8] sm:$0xff]
        %v2046 = vld [vmem:[%s2017 + $0xe0] sm:$0xff]
        %v2047 = vld [vmem:[%s2017 + $0xe8] sm:$0xff]
        %v2048 = vld [vmem:[%s2017 + $0xf0] sm:$0xff]
        %v2049 = vld [vmem:[%s2017 + $0xf8] sm:$0xff]
        %v2050 = vld [vmem:[%s2017 + $0x100] sm:$0xff]
        %v2051 = vld [vmem:[%s2017 + $0x108] sm:$0xff]
        %v2052 = vld [vmem:[%s2017 + $0x110] sm:$0xff]
        %v2053 = vld [vmem:[%s2017 + $0x118] sm:$0xff]
        %v2054 = vld [vmem:[%s2017 + $0x120] sm:$0xff]
        %v2055 = vld [vmem:[%s2017 + $0x128] sm:$0xff]
        %v2056 = vld [vmem:[%s2017 + $0x130] sm:$0xff]
        %v2057 = vld [vmem:[%s2017 + $0x138] sm:$0xff]
        %v2058 = vld [vmem:[%s2017 + $0x140] sm:$0xff]
        %v2059 = vld [vmem:[%s2017 + $0x148] sm:$0xff]
        %v2060 = vld [vmem:[%s2017 + $0x150] sm:$0xff]
        %v2061 = vld [vmem:[%s2017 + $0x158] sm:$0xff]
        %v2062 = vld [vmem:[%s2017 + $0x160] sm:$0xff]
        %v2063 = vld [vmem:[%s2017 + $0x168] sm:$0xff]
        %v2064 = vld [vmem:[%s2017 + $0x170] sm:$0xff]
        %v2065 = vld [vmem:[%s2017 + $0x178] sm:$0xff]
        %2066 = vmatprep.subr.mxu0 0.0
        %2067 = vmatpush1.msra.mxu0 %v2018
        %2068 = vmatprep.subr.mxu0 0.0
        %2069 = vmatpush1.msra.mxu0 %v2019
        %2070 = vmatprep.subr.mxu0 0.0
        %2071 = vmatpush1.msra.mxu0 %v2020
        %2072 = vmatprep.subr.mxu0 0.0
        %2073 = vmatpush1.msra.mxu0 %v2021
        %2074 = vmatprep.subr.mxu0 0.0
        %2075 = vmatpush1.msra.mxu0 %v2022
        %2076 = vmatprep.subr.mxu0 0.0
        %2077 = vmatpush1.msra.mxu0 %v2023
        %2078 = vmatprep.subr.mxu0 0.0
        %2079 = vmatpush1.msra.mxu0 %v2024
        %2080 = vmatprep.subr.mxu0 0.0
        %2081 = vmatpush1.msra.mxu0 %v2025
        %2082 = vmatprep.subr.mxu0 0.0
        %2083 = vmatpush1.msra.mxu0 %v2026
        %2084 = vmatprep.subr.mxu0 0.0
        %2085 = vmatpush1.msra.mxu0 %v2027
        %2086 = vmatprep.subr.mxu0 0.0
        %2087 = vmatpush1.msra.mxu0 %v2028
        %2088 = vmatprep.subr.mxu0 0.0
        %2089 = vmatpush1.msra.mxu0 %v2029
        %2090 = vmatprep.subr.mxu0 0.0
        %2091 = vmatpush1.msra.mxu0 %v2030
        %2092 = vmatprep.subr.mxu0 0.0
        %2093 = vmatpush1.msra.mxu0 %v2031
        %2094 = vmatprep.subr.mxu0 0.0
        %2095 = vmatpush1.msra.mxu0 %v2032
        %2096 = vmatprep.subr.mxu0 0.0
        %2097 = vmatpush1.msra.mxu0 %v2033
        %2098 = vmatprep.subr.mxu0 0.0
        %2099 = vmatpush1.msra.mxu0 %v2034
        %2100 = vmatprep.subr.mxu0 0.0
        %2101 = vmatpush1.msra.mxu0 %v2035
        %2102 = vmatprep.subr.mxu0 0.0
        %2103 = vmatpush1.msra.mxu0 %v2036
        %2104 = vmatprep.subr.mxu0 0.0
        %2105 = vmatpush1.msra.mxu0 %v2037
        %2106 = vmatprep.subr.mxu0 0.0
        %2107 = vmatpush1.msra.mxu0 %v2038
        %2108 = vmatprep.subr.mxu0 0.0
        %2109 = vmatpush1.msra.mxu0 %v2039
        %2110 = vmatprep.subr.mxu0 0.0
        %2111 = vmatpush1.msra.mxu0 %v2040
        %2112 = vmatprep.subr.mxu0 0.0
        %2113 = vmatpush1.msra.mxu0 %v2041
        %2114 = vmatprep.subr.mxu0 0.0
        %2115 = vmatpush1.msra.mxu0 %v2042
        %2116 = vmatprep.subr.mxu0 0.0
        %2117 = vmatpush1.msra.mxu0 %v2043
        %2118 = vmatprep.subr.mxu0 0.0
        %2119 = vmatpush1.msra.mxu0 %v2044
        %2120 = vmatprep.subr.mxu0 0.0
        %2121 = vmatpush1.msra.mxu0 %v2045
        %2122 = vmatprep.subr.mxu0 0.0
        %2123 = vmatpush1.msra.mxu0 %v2046
        %2124 = vmatprep.subr.mxu0 0.0
        %2125 = vmatpush1.msra.mxu0 %v2047
        %2126 = vmatprep.subr.mxu0 0.0
        %2127 = vmatpush1.msra.mxu0 %v2048
        %2128 = vmatprep.subr.mxu0 0.0
        %2129 = vmatpush1.msra.mxu0 %v2049
        %2130 = vmatprep.mubr.f32.mxu0 %v773
        %2131 = vmatmul.mubr.f32.gmra.mrb[0].mxu0 %v1948
        %v2132 = vpop.f32.mrb[0].mxu0
        %v2133 = vadd.f32 0.0, %v2132
        %v2134 = vpop.f32.mrb[0].mxu0
        %2135 = vmatprep.mubr.f32.mxu0 %v774
        %2136 = vmatmul.mubr.f32.gmra.mrb[0].mxu0 %v1949
        %v2137 = vpop.f32.mrb[0].mxu0
        %v2138 = vadd.f32 0.0, %v2137
        %v2139 = vpop.f32.mrb[0].mxu0
        %2140 = vmatprep.mubr.f32.mxu0 %v775
        %2141 = vmatmul.mubr.f32.gmra.mrb[0].mxu0 %v1950
        %v2142 = vpop.f32.mrb[0].mxu0
        %v2143 = vadd.f32 0.0, %v2142
        %v2144 = vpop.f32.mrb[0].mxu0
        %2145 = vmatprep.mubr.f32.mxu0 %v776
        %2146 = vmatmul.mubr.f32.gmra.mrb[0].mxu0 %v1951
        %v2147 = vpop.f32.mrb[0].mxu0
        %v2148 = vadd.f32 0.0, %v2147
        %v2149 = vpop.f32.mrb[0].mxu0
        %2150 = vmatprep.mubr.f32.mxu0 %v777
        %2151 = vmatmul.mubr.f32.gmra.mrb[0].mxu0 %v1952
        %v2152 = vpop.f32.mrb[0].mxu0
        %v2153 = vadd.f32 0.0, %v2152
        %v2154 = vpop.f32.mrb[0].mxu0
        %2155 = vmatprep.mubr.f32.mxu0 %v778
        %2156 = vmatmul.mubr.f32.gmra.mrb[0].mxu0 %v1953
        %v2157 = vpop.f32.mrb[0].mxu0
        %v2158 = vadd.f32 0.0, %v2157
        %v2159 = vpop.f32.mrb[0].mxu0
        %2160 = vmatprep.mubr.f32.mxu0 %v779
        %2161 = vmatmul.mubr.f32.gmra.mrb[0].mxu0 %v1954
        %v2162 = vpop.f32.mrb[0].mxu0
        %v2163 = vadd.f32 0.0, %v2162
        %v2164 = vpop.f32.mrb[0].mxu0
        %2165 = vmatprep.mubr.f32.mxu0 %v780
        %2166 = vmatmul.mubr.f32.gmra.mrb[0].mxu0 %v1955
        %v2167 = vpop.f32.mrb[0].mxu0
        %v2168 = vadd.f32 0.0, %v2167
        %v2169 = vpop.f32.mrb[0].mxu0
        %2170 = vmatprep.mubr.f32.mxu0 %v781
        %2171 = vmatmul.mubr.f32.gmra.mrb[0].mxu0 %v1956
        %v2172 = vpop.f32.mrb[0].mxu0
        %v2173 = vadd.f32 0.0, %v2172
        %v2174 = vpop.f32.mrb[0].mxu0
        %2175 = vmatprep.mubr.f32.mxu0 %v782
        %2176 = vmatmul.mubr.f32.gmra.mrb[0].mxu0 %v1957
        %v2177 = vpop.f32.mrb[0].mxu0
        %v2178 = vadd.f32 0.0, %v2177
        %v2179 = vpop.f32.mrb[0].mxu0
        %2180 = vmatprep.mubr.f32.mxu0 %v783
        %2181 = vmatmul.mubr.f32.gmra.mrb[0].mxu0 %v1958
        %v2182 = vpop.f32.mrb[0].mxu0
        %v2183 = vadd.f32 0.0, %v2182
        %v2184 = vpop.f32.mrb[0].mxu0
        %2185 = vmatprep.mubr.f32.mxu0 %v784
        %2186 = vmatmul.mubr.f32.gmra.mrb[0].mxu0 %v1959
        %v2187 = vpop.f32.mrb[0].mxu0
        %v2188 = vadd.f32 0.0, %v2187
        %v2189 = vpop.f32.mrb[0].mxu0
        %2190 = vmatprep.mubr.f32.mxu0 %v785
        %2191 = vmatmul.mubr.f32.gmra.mrb[0].mxu0 %v1960
        %v2192 = vpop.f32.mrb[0].mxu0
        %v2193 = vadd.f32 0.0, %v2192
        %v2194 = vpop.f32.mrb[0].mxu0
        %2195 = vmatprep.mubr.f32.mxu0 %v786
        %2196 = vmatmul.mubr.f32.gmra.mrb[0].mxu0 %v1961
        %v2197 = vpop.f32.mrb[0].mxu0
        %v2198 = vadd.f32 0.0, %v2197
        %v2199 = vpop.f32.mrb[0].mxu0
        %2200 = vmatprep.mubr.f32.mxu0 %v787
        %2201 = vmatmul.mubr.f32.gmra.mrb[0].mxu0 %v1962
        %v2202 = vpop.f32.mrb[0].mxu0
        %v2203 = vadd.f32 0.0, %v2202
        %v2204 = vpop.f32.mrb[0].mxu0
        %2205 = vmatprep.mubr.f32.mxu0 %v788
        %2206 = vmatmul.mubr.f32.gmra.mrb[0].mxu0 %v1963
        %v2207 = vpop.f32.mrb[0].mxu0
        %v2208 = vadd.f32 0.0, %v2207
        %v2209 = vpop.f32.mrb[0].mxu0
        %2210 = vmatprep.mubr.f32.mxu0 %v789
        %2211 = vmatmul.mubr.f32.gmra.mrb[0].mxu0 %v1964
        %v2212 = vpop.f32.mrb[0].mxu0
        %v2213 = vadd.f32 0.0, %v2212
        %v2214 = vpop.f32.mrb[0].mxu0
        %2215 = vmatprep.mubr.f32.mxu0 %v790
        %2216 = vmatmul.mubr.f32.gmra.mrb[0].mxu0 %v1965
        %v2217 = vpop.f32.mrb[0].mxu0
        %v2218 = vadd.f32 0.0, %v2217
        %v2219 = vpop.f32.mrb[0].mxu0
        %2220 = vmatprep.mubr.f32.mxu0 %v791
        %2221 = vmatmul.mubr.f32.gmra.mrb[0].mxu0 %v1966
        %v2222 = vpop.f32.mrb[0].mxu0
        %v2223 = vadd.f32 0.0, %v2222
        %v2224 = vpop.f32.mrb[0].mxu0
        %2225 = vmatprep.mubr.f32.mxu0 %v792
        %2226 = vmatmul.mubr.f32.gmra.mrb[0].mxu0 %v1967
        %v2227 = vpop.f32.mrb[0].mxu0
        %v2228 = vadd.f32 0.0, %v2227
        %v2229 = vpop.f32.mrb[0].mxu0
        %2230 = vmatprep.mubr.f32.mxu0 %v793
        %2231 = vmatmul.mubr.f32.gmra.mrb[0].mxu0 %v1968
        %v2232 = vpop.f32.mrb[0].mxu0
        %v2233 = vadd.f32 0.0, %v2232
        %v2234 = vpop.f32.mrb[0].mxu0
        %2235 = vmatprep.mubr.f32.mxu0 %v794
        %2236 = vmatmul.mubr.f32.gmra.mrb[0].mxu0 %v1969
        %v2237 = vpop.f32.mrb[0].mxu0
        %v2238 = vadd.f32 0.0, %v2237
        %v2239 = vpop.f32.mrb[0].mxu0
        %2240 = vmatprep.mubr.f32.mxu0 %v795
        %2241 = vmatmul.mubr.f32.gmra.mrb[0].mxu0 %v1970
        %v2242 = vpop.f32.mrb[0].mxu0
        %v2243 = vadd.f32 0.0, %v2242
        %v2244 = vpop.f32.mrb[0].mxu0
        %2245 = vmatprep.mubr.f32.mxu0 %v796
        %2246 = vmatmul.mubr.f32.gmra.mrb[0].mxu0 %v1971
        %v2247 = vpop.f32.mrb[0].mxu0
        %v2248 = vadd.f32 0.0, %v2247
        %v2249 = vpop.f32.mrb[0].mxu0
        %2250 = vmatprep.mubr.f32.mxu0 %v797
        %2251 = vmatmul.mubr.f32.gmra.mrb[0].mxu0 %v1972
        %v2252 = vpop.f32.mrb[0].mxu0
        %v2253 = vadd.f32 0.0, %v2252
        %v2254 = vpop.f32.mrb[0].mxu0
        %2255 = vmatprep.mubr.f32.mxu0 %v798
        %2256 = vmatmul.mubr.f32.gmra.mrb[0].mxu0 %v1973
        %v2257 = vpop.f32.mrb[0].mxu0
        %v2258 = vadd.f32 0.0, %v2257
        %v2259 = vpop.f32.mrb[0].mxu0
        %2260 = vmatprep.mubr.f32.mxu0 %v799
        %2261 = vmatmul.mubr.f32.gmra.mrb[0].mxu0 %v1974
        %v2262 = vpop.f32.mrb[0].mxu0
        %v2263 = vadd.f32 0.0, %v2262
        %v2264 = vpop.f32.mrb[0].mxu0
        %2265 = vmatprep.mubr.f32.mxu0 %v800
        %2266 = vmatmul.mubr.f32.gmra.mrb[0].mxu0 %v1975
        %v2267 = vpop.f32.mrb[0].mxu0
        %v2268 = vadd.f32 0.0, %v2267
        %v2269 = vpop.f32.mrb[0].mxu0
        %2270 = vmatprep.mubr.f32.mxu0 %v801
        %2271 = vmatmul.mubr.f32.gmra.mrb[0].mxu0 %v1976
        %v2272 = vpop.f32.mrb[0].mxu0
        %v2273 = vadd.f32 0.0, %v2272
        %v2274 = vpop.f32.mrb[0].mxu0
        %2275 = vmatprep.mubr.f32.mxu0 %v802
        %2276 = vmatmul.mubr.f32.gmra.mrb[0].mxu0 %v1977
        %v2277 = vpop.f32.mrb[0].mxu0
        %v2278 = vadd.f32 0.0, %v2277
        %v2279 = vpop.f32.mrb[0].mxu0
        %2280 = vmatprep.mubr.f32.mxu0 %v803
        %2281 = vmatmul.mubr.f32.gmra.mrb[0].mxu0 %v1978
        %v2282 = vpop.f32.mrb[0].mxu0
        %v2283 = vadd.f32 0.0, %v2282
        %v2284 = vpop.f32.mrb[0].mxu0
        %2285 = vmatprep.mubr.f32.mxu0 %v804
        %2286 = vmatmul.mubr.f32.gmra.mrb[0].mxu0 %v1979
        %v2287 = vpop.f32.mrb[0].mxu0
        %v2288 = vadd.f32 0.0, %v2287
        %v2289 = vpop.f32.mrb[0].mxu0
        %2290 = vdwg.mxu0
        %2291 = vmatprep.subr.mxu0 0.0
        %2292 = vmatpush1.msra.mxu0 %v2050
        %2293 = vmatprep.subr.mxu0 0.0
        %2294 = vmatpush1.msra.mxu0 %v2051
        %2295 = vmatprep.subr.mxu0 0.0
        %2296 = vmatpush1.msra.mxu0 %v2052
        %2297 = vmatprep.subr.mxu0 0.0
        %2298 = vmatpush1.msra.mxu0 %v2053
        %2299 = vmatprep.subr.mxu0 0.0
        %2300 = vmatpush1.msra.mxu0 %v2054
        %2301 = vmatprep.subr.mxu0 0.0
        %2302 = vmatpush1.msra.mxu0 %v2055
        %2303 = vmatprep.subr.mxu0 0.0
        %2304 = vmatpush1.msra.mxu0 %v2056
        %2305 = vmatprep.subr.mxu0 0.0
        %2306 = vmatpush1.msra.mxu0 %v2057
        %2307 = vmatprep.subr.mxu0 0.0
        %2308 = vmatpush1.msra.mxu0 %v2058
        %2309 = vmatprep.subr.mxu0 0.0
        %2310 = vmatpush1.msra.mxu0 %v2059
        %2311 = vmatprep.subr.mxu0 0.0
        %2312 = vmatpush1.msra.mxu0 %v2060
        %2313 = vmatprep.subr.mxu0 0.0
        %2314 = vmatpush1.msra.mxu0 %v2061
        %2315 = vmatprep.subr.mxu0 0.0
        %2316 = vmatpush1.msra.mxu0 %v2062
        %2317 = vmatprep.subr.mxu0 0.0
        %2318 = vmatpush1.msra.mxu0 %v2063
        %2319 = vmatprep.subr.mxu0 0.0
        %2320 = vmatpush1.msra.mxu0 %v2064
        %2321 = vmatprep.subr.mxu0 0.0
        %2322 = vmatpush1.msra.mxu0 %v2065
        %2323 = vmatprep.subr.mxu0 0.0
        %2324 = vmatpush1.msra.mxu0 0.0
        %2325 = vmatprep.subr.mxu0 0.0
        %2326 = vmatpush1.msra.mxu0 0.0
        %2327 = vmatprep.subr.mxu0 0.0
        %2328 = vmatpush1.msra.mxu0 0.0
        %2329 = vmatprep.subr.mxu0 0.0
        %2330 = vmatpush1.msra.mxu0 0.0
        %2331 = vmatprep.subr.mxu0 0.0
        %2332 = vmatpush1.msra.mxu0 0.0
        %2333 = vmatprep.subr.mxu0 0.0
        %2334 = vmatpush1.msra.mxu0 0.0
        %2335 = vmatprep.subr.mxu0 0.0
        %2336 = vmatpush1.msra.mxu0 0.0
        %2337 = vmatprep.subr.mxu0 0.0
        %2338 = vmatpush1.msra.mxu0 0.0
        %2339 = vmatprep.subr.mxu0 0.0
        %2340 = vmatpush1.msra.mxu0 0.0
        %2341 = vmatprep.subr.mxu0 0.0
        %2342 = vmatpush1.msra.mxu0 0.0
        %2343 = vmatprep.subr.mxu0 0.0
        %2344 = vmatpush1.msra.mxu0 0.0
        %2345 = vmatprep.subr.mxu0 0.0
        %2346 = vmatpush1.msra.mxu0 0.0
        %2347 = vmatprep.subr.mxu0 0.0
        %2348 = vmatpush1.msra.mxu0 0.0
        %2349 = vmatprep.subr.mxu0 0.0
        %2350 = vmatpush1.msra.mxu0 0.0
        %2351 = vmatprep.subr.mxu0 0.0
        %2352 = vmatpush1.msra.mxu0 0.0
        %2353 = vmatprep.subr.mxu0 0.0
        %2354 = vmatpush1.msra.mxu0 0.0
        %2355 = vmatprep.mubr.f32.mxu0 0.0
        %2356 = vmatmul.mubr.f32.gmra.mrb[0].mxu0 %v1985
        %v2357 = vpop.f32.mrb[0].mxu0
        %v2358 = vadd.f32 %v2133, %v2357
        %v2359 = vpop.f32.mrb[0].mxu0
        %2360 = vmatprep.mubr.f32.mxu0 0.0
        %2361 = vmatmul.mubr.f32.gmra.mrb[0].mxu0 %v1986
        %v2362 = vpop.f32.mrb[0].mxu0
        %v2363 = vadd.f32 %v2138, %v2362
        %v2364 = vpop.f32.mrb[0].mxu0
        %2365 = vmatprep.mubr.f32.mxu0 0.0
        %2366 = vmatmul.mubr.f32.gmra.mrb[0].mxu0 %v1987
        %v2367 = vpop.f32.mrb[0].mxu0
        %v2368 = vadd.f32 %v2143, %v2367
        %v2369 = vpop.f32.mrb[0].mxu0
        %2370 = vmatprep.mubr.f32.mxu0 0.0
        %2371 = vmatmul.mubr.f32.gmra.mrb[0].mxu0 %v1988
        %v2372 = vpop.f32.mrb[0].mxu0
        %v2373 = vadd.f32 %v2148, %v2372
        %v2374 = vpop.f32.mrb[0].mxu0
        %2375 = vmatprep.mubr.f32.mxu0 0.0
        %2376 = vmatmul.mubr.f32.gmra.mrb[0].mxu0 %v1989
        %v2377 = vpop.f32.mrb[0].mxu0
        %v2378 = vadd.f32 %v2153, %v2377
        %v2379 = vpop.f32.mrb[0].mxu0
        %2380 = vmatprep.mubr.f32.mxu0 0.0
        %2381 = vmatmul.mubr.f32.gmra.mrb[0].mxu0 %v1990
        %v2382 = vpop.f32.mrb[0].mxu0
        %v2383 = vadd.f32 %v2158, %v2382
        %v2384 = vpop.f32.mrb[0].mxu0
        %2385 = vmatprep.mubr.f32.mxu0 0.0
        %2386 = vmatmul.mubr.f32.gmra.mrb[0].mxu0 %v1991
        %v2387 = vpop.f32.mrb[0].mxu0
        %v2388 = vadd.f32 %v2163, %v2387
        %v2389 = vpop.f32.mrb[0].mxu0
        %2390 = vmatprep.mubr.f32.mxu0 0.0
        %2391 = vmatmul.mubr.f32.gmra.mrb[0].mxu0 %v1992
        %v2392 = vpop.f32.mrb[0].mxu0
        %v2393 = vadd.f32 %v2168, %v2392
        %v2394 = vpop.f32.mrb[0].mxu0
        %2395 = vmatprep.mubr.f32.mxu0 0.0
        %2396 = vmatmul.mubr.f32.gmra.mrb[0].mxu0 %v1993
        %v2397 = vpop.f32.mrb[0].mxu0
        %v2398 = vadd.f32 %v2173, %v2397
        %v2399 = vpop.f32.mrb[0].mxu0
        %2400 = vmatprep.mubr.f32.mxu0 0.0
        %2401 = vmatmul.mubr.f32.gmra.mrb[0].mxu0 %v1994
        %v2402 = vpop.f32.mrb[0].mxu0
        %v2403 = vadd.f32 %v2178, %v2402
        %v2404 = vpop.f32.mrb[0].mxu0
        %2405 = vmatprep.mubr.f32.mxu0 0.0
        %2406 = vmatmul.mubr.f32.gmra.mrb[0].mxu0 %v1995
        %v2407 = vpop.f32.mrb[0].mxu0
        %v2408 = vadd.f32 %v2183, %v2407
        %v2409 = vpop.f32.mrb[0].mxu0
        %2410 = vmatprep.mubr.f32.mxu0 0.0
        %2411 = vmatmul.mubr.f32.gmra.mrb[0].mxu0 %v1996
        %v2412 = vpop.f32.mrb[0].mxu0
        %v2413 = vadd.f32 %v2188, %v2412
        %v2414 = vpop.f32.mrb[0].mxu0
        %2415 = vmatprep.mubr.f32.mxu0 0.0
        %2416 = vmatmul.mubr.f32.gmra.mrb[0].mxu0 %v1997
        %v2417 = vpop.f32.mrb[0].mxu0
        %v2418 = vadd.f32 %v2193, %v2417
        %v2419 = vpop.f32.mrb[0].mxu0
        %2420 = vmatprep.mubr.f32.mxu0 0.0
        %2421 = vmatmul.mubr.f32.gmra.mrb[0].mxu0 %v1998
        %v2422 = vpop.f32.mrb[0].mxu0
        %v2423 = vadd.f32 %v2198, %v2422
        %v2424 = vpop.f32.mrb[0].mxu0
        %2425 = vmatprep.mubr.f32.mxu0 0.0
        %2426 = vmatmul.mubr.f32.gmra.mrb[0].mxu0 %v1999
        %v2427 = vpop.f32.mrb[0].mxu0
        %v2428 = vadd.f32 %v2203, %v2427
        %v2429 = vpop.f32.mrb[0].mxu0
        %2430 = vmatprep.mubr.f32.mxu0 0.0
        %2431 = vmatmul.mubr.f32.gmra.mrb[0].mxu0 %v2000
        %v2432 = vpop.f32.mrb[0].mxu0
        %v2433 = vadd.f32 %v2208, %v2432
        %v2434 = vpop.f32.mrb[0].mxu0
        %2435 = vmatprep.mubr.f32.mxu0 0.0
        %2436 = vmatmul.mubr.f32.gmra.mrb[0].mxu0 %v2001
        %v2437 = vpop.f32.mrb[0].mxu0
        %v2438 = vadd.f32 %v2213, %v2437
        %v2439 = vpop.f32.mrb[0].mxu0
        %2440 = vmatprep.mubr.f32.mxu0 0.0
        %2441 = vmatmul.mubr.f32.gmra.mrb[0].mxu0 %v2002
        %v2442 = vpop.f32.mrb[0].mxu0
        %v2443 = vadd.f32 %v2218, %v2442
        %v2444 = vpop.f32.mrb[0].mxu0
        %2445 = vmatprep.mubr.f32.mxu0 0.0
        %2446 = vmatmul.mubr.f32.gmra.mrb[0].mxu0 %v2003
        %v2447 = vpop.f32.mrb[0].mxu0
        %v2448 = vadd.f32 %v2223, %v2447
        %v2449 = vpop.f32.mrb[0].mxu0
        %2450 = vmatprep.mubr.f32.mxu0 0.0
        %2451 = vmatmul.mubr.f32.gmra.mrb[0].mxu0 %v2004
        %v2452 = vpop.f32.mrb[0].mxu0
        %v2453 = vadd.f32 %v2228, %v2452
        %v2454 = vpop.f32.mrb[0].mxu0
        %2455 = vmatprep.mubr.f32.mxu0 0.0
        %2456 = vmatmul.mubr.f32.gmra.mrb[0].mxu0 %v2005
        %v2457 = vpop.f32.mrb[0].mxu0
        %v2458 = vadd.f32 %v2233, %v2457
        %v2459 = vpop.f32.mrb[0].mxu0
        %2460 = vmatprep.mubr.f32.mxu0 0.0
        %2461 = vmatmul.mubr.f32.gmra.mrb[0].mxu0 %v2006
        %v2462 = vpop.f32.mrb[0].mxu0
        %v2463 = vadd.f32 %v2238, %v2462
        %v2464 = vpop.f32.mrb[0].mxu0
        %2465 = vmatprep.mubr.f32.mxu0 0.0
        %2466 = vmatmul.mubr.f32.gmra.mrb[0].mxu0 %v2007
        %v2467 = vpop.f32.mrb[0].mxu0
        %v2468 = vadd.f32 %v2243, %v2467
        %v2469 = vpop.f32.mrb[0].mxu0
        %2470 = vmatprep.mubr.f32.mxu0 0.0
        %2471 = vmatmul.mubr.f32.gmra.mrb[0].mxu0 %v2008
        %v2472 = vpop.f32.mrb[0].mxu0
        %v2473 = vadd.f32 %v2248, %v2472
        %v2474 = vpop.f32.mrb[0].mxu0
        %2475 = vmatprep.mubr.f32.mxu0 0.0
        %2476 = vmatmul.mubr.f32.gmra.mrb[0].mxu0 %v2009
        %v2477 = vpop.f32.mrb[0].mxu0
        %v2478 = vadd.f32 %v2253, %v2477
        %v2479 = vpop.f32.mrb[0].mxu0
        %2480 = vmatprep.mubr.f32.mxu0 0.0
        %2481 = vmatmul.mubr.f32.gmra.mrb[0].mxu0 %v2010
        %v2482 = vpop.f32.mrb[0].mxu0
        %v2483 = vadd.f32 %v2258, %v2482
        %v2484 = vpop.f32.mrb[0].mxu0
        %2485 = vmatprep.mubr.f32.mxu0 0.0
        %2486 = vmatmul.mubr.f32.gmra.mrb[0].mxu0 %v2011
        %v2487 = vpop.f32.mrb[0].mxu0
        %v2488 = vadd.f32 %v2263, %v2487
        %v2489 = vpop.f32.mrb[0].mxu0
        %2490 = vmatprep.mubr.f32.mxu0 0.0
        %2491 = vmatmul.mubr.f32.gmra.mrb[0].mxu0 %v2012
        %v2492 = vpop.f32.mrb[0].mxu0
        %v2493 = vadd.f32 %v2268, %v2492
        %v2494 = vpop.f32.mrb[0].mxu0
        %2495 = vmatprep.mubr.f32.mxu0 0.0
        %2496 = vmatmul.mubr.f32.gmra.mrb[0].mxu0 %v2013
        %v2497 = vpop.f32.mrb[0].mxu0
        %v2498 = vadd.f32 %v2273, %v2497
        %v2499 = vpop.f32.mrb[0].mxu0
        %2500 = vmatprep.mubr.f32.mxu0 0.0
        %2501 = vmatmul.mubr.f32.gmra.mrb[0].mxu0 %v2014
        %v2502 = vpop.f32.mrb[0].mxu0
        %v2503 = vadd.f32 %v2278, %v2502
        %v2504 = vpop.f32.mrb[0].mxu0
        %2505 = vmatprep.mubr.f32.mxu0 0.0
        %2506 = vmatmul.mubr.f32.gmra.mrb[0].mxu0 %v2015
        %v2507 = vpop.f32.mrb[0].mxu0
        %v2508 = vadd.f32 %v2283, %v2507
        %v2509 = vpop.f32.mrb[0].mxu0
        %2510 = vmatprep.mubr.f32.mxu0 0.0
        %2511 = vmatmul.mubr.f32.gmra.mrb[0].mxu0 %v2016
        %v2512 = vpop.f32.mrb[0].mxu0
        %v2513 = vadd.f32 %v2288, %v2512
        %v2514 = vpop.f32.mrb[0].mxu0
        %2515 = vdwg.mxu0
        %2516 = vmatprep.subr.mxu0 0.0
        %2517 = vmatpush1.msra.mxu0 %v1893
        %2518 = vmatprep.subr.mxu0 0.0
        %2519 = vmatpush1.msra.mxu0 %v1894
        %2520 = vmatprep.subr.mxu0 0.0
        %2521 = vmatpush1.msra.mxu0 %v1895
        %2522 = vmatprep.subr.mxu0 0.0
        %2523 = vmatpush1.msra.mxu0 %v1896
        %2524 = vmatprep.subr.mxu0 0.0
        %2525 = vmatpush1.msra.mxu0 %v1897
        %2526 = vmatprep.subr.mxu0 0.0
        %2527 = vmatpush1.msra.mxu0 %v1898
        %2528 = vmatprep.subr.mxu0 0.0
        %2529 = vmatpush1.msra.mxu0 %v1899
        %2530 = vmatprep.subr.mxu0 0.0
        %2531 = vmatpush1.msra.mxu0 %v1900
        %2532 = vmatprep.subr.mxu0 0.0
        %2533 = vmatpush1.msra.mxu0 %v1901
        %2534 = vmatprep.subr.mxu0 0.0
        %2535 = vmatpush1.msra.mxu0 %v1902
        %2536 = vmatprep.subr.mxu0 0.0
        %2537 = vmatpush1.msra.mxu0 %v1903
        %2538 = vmatprep.subr.mxu0 0.0
        %2539 = vmatpush1.msra.mxu0 %v1904
        %2540 = vmatprep.subr.mxu0 0.0
        %2541 = vmatpush1.msra.mxu0 %v1905
        %2542 = vmatprep.subr.mxu0 0.0
        %2543 = vmatpush1.msra.mxu0 %v1906
        %2544 = vmatprep.subr.mxu0 0.0
        %2545 = vmatpush1.msra.mxu0 %v1907
        %2546 = vmatprep.subr.mxu0 0.0
        %2547 = vmatpush1.msra.mxu0 %v1908
        %2548 = vmatprep.subr.mxu0 0.0
        %2549 = vmatpush1.msra.mxu0 %v1909
        %2550 = vmatprep.subr.mxu0 0.0
        %2551 = vmatpush1.msra.mxu0 %v1910
        %2552 = vmatprep.subr.mxu0 0.0
        %2553 = vmatpush1.msra.mxu0 %v1911
        %2554 = vmatprep.subr.mxu0 0.0
        %2555 = vmatpush1.msra.mxu0 %v1912
        %2556 = vmatprep.subr.mxu0 0.0
        %2557 = vmatpush1.msra.mxu0 %v1913
        %2558 = vmatprep.subr.mxu0 0.0
        %2559 = vmatpush1.msra.mxu0 %v1914
        %2560 = vmatprep.subr.mxu0 0.0
        %2561 = vmatpush1.msra.mxu0 %v1915
        %2562 = vmatprep.subr.mxu0 0.0
        %2563 = vmatpush1.msra.mxu0 %v1916
        %2564 = vmatprep.subr.mxu0 0.0
        %2565 = vmatpush1.msra.mxu0 %v1917
        %2566 = vmatprep.subr.mxu0 0.0
        %2567 = vmatpush1.msra.mxu0 %v1918
        %2568 = vmatprep.subr.mxu0 0.0
        %2569 = vmatpush1.msra.mxu0 %v1919
        %2570 = vmatprep.subr.mxu0 0.0
        %2571 = vmatpush1.msra.mxu0 %v1920
        %2572 = vmatprep.subr.mxu0 0.0
        %2573 = vmatpush1.msra.mxu0 %v1921
        %2574 = vmatprep.subr.mxu0 0.0
        %2575 = vmatpush1.msra.mxu0 %v1922
        %2576 = vmatprep.subr.mxu0 0.0
        %2577 = vmatpush1.msra.mxu0 %v1923
        %2578 = vmatprep.subr.mxu0 0.0
        %2579 = vmatpush1.msra.mxu0 %v1924
        %2580 = vmatprep.mubr.f32.mxu0 0.0
        %2581 = vmatmul.mubr.f32.gmra.mrb[0].mxu0 %v1539
        %v2582 = vpop.f32.mrb[0].mxu0
        %v2583 = vadd.f32 %v2358, %v2582
        %v2584 = vpop.f32.mrb[0].mxu0
        %2585 = vmatprep.mubr.f32.mxu0 0.0
        %2586 = vmatmul.mubr.f32.gmra.mrb[0].mxu0 %v1540
        %v2587 = vpop.f32.mrb[0].mxu0
        %v2588 = vadd.f32 %v2363, %v2587
        %v2589 = vpop.f32.mrb[0].mxu0
        %2590 = vmatprep.mubr.f32.mxu0 %v773
        %2591 = vmatmul.mubr.f32.gmra.mrb[0].mxu0 %v1541
        %v2592 = vpop.f32.mrb[0].mxu0
        %v2593 = vadd.f32 %v2368, %v2592
        %v2594 = vpop.f32.mrb[0].mxu0
        %2595 = vmatprep.mubr.f32.mxu0 %v774
        %2596 = vmatmul.mubr.f32.gmra.mrb[0].mxu0 %v1542
        %v2597 = vpop.f32.mrb[0].mxu0
        %v2598 = vadd.f32 %v2373, %v2597
        %v2599 = vpop.f32.mrb[0].mxu0
        %2600 = vmatprep.mubr.f32.mxu0 %v775
        %2601 = vmatmul.mubr.f32.gmra.mrb[0].mxu0 %v1543
        %v2602 = vpop.f32.mrb[0].mxu0
        %v2603 = vadd.f32 %v2378, %v2602
        %v2604 = vpop.f32.mrb[0].mxu0
        %2605 = vmatprep.mubr.f32.mxu0 %v776
        %2606 = vmatmul.mubr.f32.gmra.mrb[0].mxu0 %v1544
        %v2607 = vpop.f32.mrb[0].mxu0
        %v2608 = vadd.f32 %v2383, %v2607
        %v2609 = vpop.f32.mrb[0].mxu0
        %2610 = vmatprep.mubr.f32.mxu0 %v777
        %2611 = vmatmul.mubr.f32.gmra.mrb[0].mxu0 %v1545
        %v2612 = vpop.f32.mrb[0].mxu0
        %v2613 = vadd.f32 %v2388, %v2612
        %v2614 = vpop.f32.mrb[0].mxu0
        %2615 = vmatprep.mubr.f32.mxu0 %v778
        %2616 = vmatmul.mubr.f32.gmra.mrb[0].mxu0 %v1546
        %v2617 = vpop.f32.mrb[0].mxu0
        %v2618 = vadd.f32 %v2393, %v2617
        %v2619 = vpop.f32.mrb[0].mxu0
        %2620 = vmatprep.mubr.f32.mxu0 %v779
        %2621 = vmatmul.mubr.f32.gmra.mrb[0].mxu0 %v1547
        %v2622 = vpop.f32.mrb[0].mxu0
        %v2623 = vadd.f32 %v2398, %v2622
        %v2624 = vpop.f32.mrb[0].mxu0
        %2625 = vmatprep.mubr.f32.mxu0 %v780
        %2626 = vmatmul.mubr.f32.gmra.mrb[0].mxu0 %v1548
        %v2627 = vpop.f32.mrb[0].mxu0
        %v2628 = vadd.f32 %v2403, %v2627
        %v2629 = vpop.f32.mrb[0].mxu0
        %2630 = vmatprep.mubr.f32.mxu0 %v781
        %2631 = vmatmul.mubr.f32.gmra.mrb[0].mxu0 %v1549
        %v2632 = vpop.f32.mrb[0].mxu0
        %v2633 = vadd.f32 %v2408, %v2632
        %v2634 = vpop.f32.mrb[0].mxu0
        %2635 = vmatprep.mubr.f32.mxu0 %v782
        %2636 = vmatmul.mubr.f32.gmra.mrb[0].mxu0 %v1550
        %v2637 = vpop.f32.mrb[0].mxu0
        %v2638 = vadd.f32 %v2413, %v2637
        %v2639 = vpop.f32.mrb[0].mxu0
        %2640 = vmatprep.mubr.f32.mxu0 %v783
        %2641 = vmatmul.mubr.f32.gmra.mrb[0].mxu0 %v1551
        %v2642 = vpop.f32.mrb[0].mxu0
        %v2643 = vadd.f32 %v2418, %v2642
        %v2644 = vpop.f32.mrb[0].mxu0
        %2645 = vmatprep.mubr.f32.mxu0 %v784
        %2646 = vmatmul.mubr.f32.gmra.mrb[0].mxu0 %v1552
        %v2647 = vpop.f32.mrb[0].mxu0
        %v2648 = vadd.f32 %v2423, %v2647
        %v2649 = vpop.f32.mrb[0].mxu0
        %2650 = vmatprep.mubr.f32.mxu0 %v785
        %2651 = vmatmul.mubr.f32.gmra.mrb[0].mxu0 %v1553
        %v2652 = vpop.f32.mrb[0].mxu0
        %v2653 = vadd.f32 %v2428, %v2652
        %v2654 = vpop.f32.mrb[0].mxu0
        %2655 = vmatprep.mubr.f32.mxu0 %v786
        %2656 = vmatmul.mubr.f32.gmra.mrb[0].mxu0 %v1554
        %v2657 = vpop.f32.mrb[0].mxu0
        %v2658 = vadd.f32 %v2433, %v2657
        %v2659 = vpop.f32.mrb[0].mxu0
        %2660 = vmatprep.mubr.f32.mxu0 %v787
        %2661 = vmatmul.mubr.f32.gmra.mrb[0].mxu0 %v1555
        %v2662 = vpop.f32.mrb[0].mxu0
        %v2663 = vadd.f32 %v2438, %v2662
        %v2664 = vpop.f32.mrb[0].mxu0
        %2665 = vmatprep.mubr.f32.mxu0 %v788
        %2666 = vmatmul.mubr.f32.gmra.mrb[0].mxu0 %v1556
        %v2667 = vpop.f32.mrb[0].mxu0
        %v2668 = vadd.f32 %v2443, %v2667
        %v2669 = vpop.f32.mrb[0].mxu0
        %2670 = vmatprep.mubr.f32.mxu0 %v789
        %2671 = vmatmul.mubr.f32.gmra.mrb[0].mxu0 %v1557
        %v2672 = vpop.f32.mrb[0].mxu0
        %v2673 = vadd.f32 %v2448, %v2672
        %v2674 = vpop.f32.mrb[0].mxu0
        %2675 = vmatprep.mubr.f32.mxu0 %v790
        %2676 = vmatmul.mubr.f32.gmra.mrb[0].mxu0 %v1558
        %v2677 = vpop.f32.mrb[0].mxu0
        %v2678 = vadd.f32 %v2453, %v2677
        %v2679 = vpop.f32.mrb[0].mxu0
        %2680 = vmatprep.mubr.f32.mxu0 %v791
        %2681 = vmatmul.mubr.f32.gmra.mrb[0].mxu0 %v1559
        %v2682 = vpop.f32.mrb[0].mxu0
        %v2683 = vadd.f32 %v2458, %v2682
        %v2684 = vpop.f32.mrb[0].mxu0
        %2685 = vmatprep.mubr.f32.mxu0 %v792
        %2686 = vmatmul.mubr.f32.gmra.mrb[0].mxu0 %v1560
        %v2687 = vpop.f32.mrb[0].mxu0
        %v2688 = vadd.f32 %v2463, %v2687
        %v2689 = vpop.f32.mrb[0].mxu0
        %2690 = vmatprep.mubr.f32.mxu0 %v793
        %2691 = vmatmul.mubr.f32.gmra.mrb[0].mxu0 %v1561
        %v2692 = vpop.f32.mrb[0].mxu0
        %v2693 = vadd.f32 %v2468, %v2692
        %v2694 = vpop.f32.mrb[0].mxu0
        %2695 = vmatprep.mubr.f32.mxu0 %v794
        %2696 = vmatmul.mubr.f32.gmra.mrb[0].mxu0 %v1562
        %v2697 = vpop.f32.mrb[0].mxu0
        %v2698 = vadd.f32 %v2473, %v2697
        %v2699 = vpop.f32.mrb[0].mxu0
        %2700 = vmatprep.mubr.f32.mxu0 %v795
        %2701 = vmatmul.mubr.f32.gmra.mrb[0].mxu0 %v1563
        %v2702 = vpop.f32.mrb[0].mxu0
        %v2703 = vadd.f32 %v2478, %v2702
        %v2704 = vpop.f32.mrb[0].mxu0
        %2705 = vmatprep.mubr.f32.mxu0 %v796
        %2706 = vmatmul.mubr.f32.gmra.mrb[0].mxu0 %v1564
        %v2707 = vpop.f32.mrb[0].mxu0
        %v2708 = vadd.f32 %v2483, %v2707
        %v2709 = vpop.f32.mrb[0].mxu0
        %2710 = vmatprep.mubr.f32.mxu0 %v797
        %2711 = vmatmul.mubr.f32.gmra.mrb[0].mxu0 %v1565
        %v2712 = vpop.f32.mrb[0].mxu0
        %v2713 = vadd.f32 %v2488, %v2712
        %v2714 = vpop.f32.mrb[0].mxu0
        %2715 = vmatprep.mubr.f32.mxu0 %v798
        %2716 = vmatmul.mubr.f32.gmra.mrb[0].mxu0 %v1566
        %v2717 = vpop.f32.mrb[0].mxu0
        %v2718 = vadd.f32 %v2493, %v2717
        %v2719 = vpop.f32.mrb[0].mxu0
        %2720 = vmatprep.mubr.f32.mxu0 %v799
        %2721 = vmatmul.mubr.f32.gmra.mrb[0].mxu0 %v1567
        %v2722 = vpop.f32.mrb[0].mxu0
        %v2723 = vadd.f32 %v2498, %v2722
        %v2724 = vpop.f32.mrb[0].mxu0
        %2725 = vmatprep.mubr.f32.mxu0 %v800
        %2726 = vmatmul.mubr.f32.gmra.mrb[0].mxu0 %v1568
        %v2727 = vpop.f32.mrb[0].mxu0
        %v2728 = vadd.f32 %v2503, %v2727
        %v2729 = vpop.f32.mrb[0].mxu0
        %2730 = vmatprep.mubr.f32.mxu0 %v801
        %2731 = vmatmul.mubr.f32.gmra.mrb[0].mxu0 %v1569
        %v2732 = vpop.f32.mrb[0].mxu0
        %v2733 = vadd.f32 %v2508, %v2732
        %v2734 = vpop.f32.mrb[0].mxu0
        %2735 = vmatprep.mubr.f32.mxu0 %v802
        %2736 = vmatmul.mubr.f32.gmra.mrb[0].mxu0 %v1570
        %v2737 = vpop.f32.mrb[0].mxu0
        %v2738 = vadd.f32 %v2513, %v2737
        %v2739 = vpop.f32.mrb[0].mxu0
        %2740 = vdwg.mxu0
        %2741 = vmatprep.subr.mxu0 0.0
        %2742 = vmatpush1.msra.mxu0 %v1925
        %2743 = vmatprep.subr.mxu0 0.0
        %2744 = vmatpush1.msra.mxu0 %v1926
        %2745 = vmatprep.subr.mxu0 0.0
        %2746 = vmatpush1.msra.mxu0 %v1927
        %2747 = vmatprep.subr.mxu0 0.0
        %2748 = vmatpush1.msra.mxu0 %v1928
        %2749 = vmatprep.subr.mxu0 0.0
        %2750 = vmatpush1.msra.mxu0 %v1929
        %2751 = vmatprep.subr.mxu0 0.0
        %2752 = vmatpush1.msra.mxu0 %v1930
        %2753 = vmatprep.subr.mxu0 0.0
        %2754 = vmatpush1.msra.mxu0 %v1931
        %2755 = vmatprep.subr.mxu0 0.0
        %2756 = vmatpush1.msra.mxu0 %v1932
        %2757 = vmatprep.subr.mxu0 0.0
        %2758 = vmatpush1.msra.mxu0 %v1933
        %2759 = vmatprep.subr.mxu0 0.0
        %2760 = vmatpush1.msra.mxu0 %v1934
        %2761 = vmatprep.subr.mxu0 0.0
        %2762 = vmatpush1.msra.mxu0 %v1935
        %2763 = vmatprep.subr.mxu0 0.0
        %2764 = vmatpush1.msra.mxu0 %v1936
        %2765 = vmatprep.subr.mxu0 0.0
        %2766 = vmatpush1.msra.mxu0 %v1937
        %2767 = vmatprep.subr.mxu0 0.0
        %2768 = vmatpush1.msra.mxu0 %v1938
        %2769 = vmatprep.subr.mxu0 0.0
        %2770 = vmatpush1.msra.mxu0 %v1939
        %2771 = vmatprep.subr.mxu0 0.0
        %2772 = vmatpush1.msra.mxu0 %v1940
        %2773 = vmatprep.subr.mxu0 0.0
        %2774 = vmatpush1.msra.mxu0 0.0
        %2775 = vmatprep.subr.mxu0 0.0
        %2776 = vmatpush1.msra.mxu0 0.0
        %2777 = vmatprep.subr.mxu0 0.0
        %2778 = vmatpush1.msra.mxu0 0.0
        %2779 = vmatprep.subr.mxu0 0.0
        %2780 = vmatpush1.msra.mxu0 0.0
        %2781 = vmatprep.subr.mxu0 0.0
        %2782 = vmatpush1.msra.mxu0 0.0
        %2783 = vmatprep.subr.mxu0 0.0
        %2784 = vmatpush1.msra.mxu0 0.0
        %2785 = vmatprep.subr.mxu0 0.0
        %2786 = vmatpush1.msra.mxu0 0.0
        %2787 = vmatprep.subr.mxu0 0.0
        %2788 = vmatpush1.msra.mxu0 0.0
        %2789 = vmatprep.subr.mxu0 0.0
        %2790 = vmatpush1.msra.mxu0 0.0
        %2791 = vmatprep.subr.mxu0 0.0
        %2792 = vmatpush1.msra.mxu0 0.0
        %2793 = vmatprep.subr.mxu0 0.0
        %2794 = vmatpush1.msra.mxu0 0.0
        %2795 = vmatprep.subr.mxu0 0.0
        %2796 = vmatpush1.msra.mxu0 0.0
        %2797 = vmatprep.subr.mxu0 0.0
        %2798 = vmatpush1.msra.mxu0 0.0
        %2799 = vmatprep.subr.mxu0 0.0
        %2800 = vmatpush1.msra.mxu0 0.0
        %2801 = vmatprep.subr.mxu0 0.0
        %2802 = vmatpush1.msra.mxu0 0.0
        %2803 = vmatprep.subr.mxu0 0.0
        %2804 = vmatpush1.msra.mxu0 0.0
        %2805 = vmatprep.mubr.f32.mxu0 0.0
        %2806 = vmatmul.mubr.f32.gmra.mrb[0].mxu0 %v1861
        %v2807 = vpop.f32.mrb[0].mxu0
        %v2808 = vadd.f32 %v2583, %v2807
        %v2809 = vpop.f32.mrb[0].mxu0
        %2810 = vmatprep.mubr.f32.mxu0 0.0
        %2811 = vmatmul.mubr.f32.gmra.mrb[0].mxu0 %v1862
        %v2812 = vpop.f32.mrb[0].mxu0
        %v2813 = vadd.f32 %v2588, %v2812
        %v2814 = vpop.f32.mrb[0].mxu0
        %2815 = vmatprep.mubr.f32.mxu0 0.0
        %2816 = vmatmul.mubr.f32.gmra.mrb[0].mxu0 %v1863
        %v2817 = vpop.f32.mrb[0].mxu0
        %v2818 = vadd.f32 %v2593, %v2817
        %v2819 = vpop.f32.mrb[0].mxu0
        %2820 = vmatprep.mubr.f32.mxu0 0.0
        %2821 = vmatmul.mubr.f32.gmra.mrb[0].mxu0 %v1864
        %v2822 = vpop.f32.mrb[0].mxu0
        %v2823 = vadd.f32 %v2598, %v2822
        %v2824 = vpop.f32.mrb[0].mxu0
        %2825 = vmatprep.mubr.f32.mxu0 0.0
        %2826 = vmatmul.mubr.f32.gmra.mrb[0].mxu0 %v1865
        %v2827 = vpop.f32.mrb[0].mxu0
        %v2828 = vadd.f32 %v2603, %v2827
        %v2829 = vpop.f32.mrb[0].mxu0
        %2830 = vmatprep.mubr.f32.mxu0 0.0
        %2831 = vmatmul.mubr.f32.gmra.mrb[0].mxu0 %v1866
        %v2832 = vpop.f32.mrb[0].mxu0
        %v2833 = vadd.f32 %v2608, %v2832
        %v2834 = vpop.f32.mrb[0].mxu0
        %2835 = vmatprep.mubr.f32.mxu0 0.0
        %2836 = vmatmul.mubr.f32.gmra.mrb[0].mxu0 %v1867
        %v2837 = vpop.f32.mrb[0].mxu0
        %v2838 = vadd.f32 %v2613, %v2837
        %v2839 = vpop.f32.mrb[0].mxu0
        %2840 = vmatprep.mubr.f32.mxu0 0.0
        %2841 = vmatmul.mubr.f32.gmra.mrb[0].mxu0 %v1868
        %v2842 = vpop.f32.mrb[0].mxu0
        %v2843 = vadd.f32 %v2618, %v2842
        %v2844 = vpop.f32.mrb[0].mxu0
        %2845 = vmatprep.mubr.f32.mxu0 0.0
        %2846 = vmatmul.mubr.f32.gmra.mrb[0].mxu0 %v1869
        %v2847 = vpop.f32.mrb[0].mxu0
        %v2848 = vadd.f32 %v2623, %v2847
        %v2849 = vpop.f32.mrb[0].mxu0
        %2850 = vmatprep.mubr.f32.mxu0 0.0
        %2851 = vmatmul.mubr.f32.gmra.mrb[0].mxu0 %v1870
        %v2852 = vpop.f32.mrb[0].mxu0
        %v2853 = vadd.f32 %v2628, %v2852
        %v2854 = vpop.f32.mrb[0].mxu0
        %2855 = vmatprep.mubr.f32.mxu0 0.0
        %2856 = vmatmul.mubr.f32.gmra.mrb[0].mxu0 %v1871
        %v2857 = vpop.f32.mrb[0].mxu0
        %v2858 = vadd.f32 %v2633, %v2857
        %v2859 = vpop.f32.mrb[0].mxu0
        %2860 = vmatprep.mubr.f32.mxu0 0.0
        %2861 = vmatmul.mubr.f32.gmra.mrb[0].mxu0 %v1872
        %v2862 = vpop.f32.mrb[0].mxu0
        %v2863 = vadd.f32 %v2638, %v2862
        %v2864 = vpop.f32.mrb[0].mxu0
        %2865 = vmatprep.mubr.f32.mxu0 0.0
        %2866 = vmatmul.mubr.f32.gmra.mrb[0].mxu0 %v1873
        %v2867 = vpop.f32.mrb[0].mxu0
        %v2868 = vadd.f32 %v2643, %v2867
        %v2869 = vpop.f32.mrb[0].mxu0
        %2870 = vmatprep.mubr.f32.mxu0 0.0
        %2871 = vmatmul.mubr.f32.gmra.mrb[0].mxu0 %v1874
        %v2872 = vpop.f32.mrb[0].mxu0
        %v2873 = vadd.f32 %v2648, %v2872
        %v2874 = vpop.f32.mrb[0].mxu0
        %2875 = vmatprep.mubr.f32.mxu0 0.0
        %2876 = vmatmul.mubr.f32.gmra.mrb[0].mxu0 %v1875
        %v2877 = vpop.f32.mrb[0].mxu0
        %v2878 = vadd.f32 %v2653, %v2877
        %v2879 = vpop.f32.mrb[0].mxu0
        %2880 = vmatprep.mubr.f32.mxu0 0.0
        %2881 = vmatmul.mubr.f32.gmra.mrb[0].mxu0 %v1876
        %v2882 = vpop.f32.mrb[0].mxu0
        %v2883 = vadd.f32 %v2658, %v2882
        %v2884 = vpop.f32.mrb[0].mxu0
        %2885 = vmatprep.mubr.f32.mxu0 0.0
        %2886 = vmatmul.mubr.f32.gmra.mrb[0].mxu0 %v1877
        %v2887 = vpop.f32.mrb[0].mxu0
        %v2888 = vadd.f32 %v2663, %v2887
        %v2889 = vpop.f32.mrb[0].mxu0
        %2890 = vmatprep.mubr.f32.mxu0 0.0
        %2891 = vmatmul.mubr.f32.gmra.mrb[0].mxu0 %v1878
        %v2892 = vpop.f32.mrb[0].mxu0
        %v2893 = vadd.f32 %v2668, %v2892
        %v2894 = vpop.f32.mrb[0].mxu0
        %2895 = vmatprep.mubr.f32.mxu0 0.0
        %2896 = vmatmul.mubr.f32.gmra.mrb[0].mxu0 %v1879
        %v2897 = vpop.f32.mrb[0].mxu0
        %v2898 = vadd.f32 %v2673, %v2897
        %v2899 = vpop.f32.mrb[0].mxu0
        %2900 = vmatprep.mubr.f32.mxu0 0.0
        %2901 = vmatmul.mubr.f32.gmra.mrb[0].mxu0 %v1880
        %v2902 = vpop.f32.mrb[0].mxu0
        %v2903 = vadd.f32 %v2678, %v2902
        %v2904 = vpop.f32.mrb[0].mxu0
        %2905 = vmatprep.mubr.f32.mxu0 0.0
        %2906 = vmatmul.mubr.f32.gmra.mrb[0].mxu0 %v1881
        %v2907 = vpop.f32.mrb[0].mxu0
        %v2908 = vadd.f32 %v2683, %v2907
        %v2909 = vpop.f32.mrb[0].mxu0
        %2910 = vmatprep.mubr.f32.mxu0 0.0
        %2911 = vmatmul.mubr.f32.gmra.mrb[0].mxu0 %v1882
        %v2912 = vpop.f32.mrb[0].mxu0
        %v2913 = vadd.f32 %v2688, %v2912
        %v2914 = vpop.f32.mrb[0].mxu0
        %2915 = vmatprep.mubr.f32.mxu0 0.0
        %2916 = vmatmul.mubr.f32.gmra.mrb[0].mxu0 %v1883
        %v2917 = vpop.f32.mrb[0].mxu0
        %v2918 = vadd.f32 %v2693, %v2917
        %v2919 = vpop.f32.mrb[0].mxu0
        %2920 = vmatprep.mubr.f32.mxu0 0.0
        %2921 = vmatmul.mubr.f32.gmra.mrb[0].mxu0 %v1884
        %v2922 = vpop.f32.mrb[0].mxu0
        %v2923 = vadd.f32 %v2698, %v2922
        %v2924 = vpop.f32.mrb[0].mxu0
        %2925 = vmatprep.mubr.f32.mxu0 0.0
        %2926 = vmatmul.mubr.f32.gmra.mrb[0].mxu0 %v1885
        %v2927 = vpop.f32.mrb[0].mxu0
        %v2928 = vadd.f32 %v2703, %v2927
        %v2929 = vpop.f32.mrb[0].mxu0
        %2930 = vmatprep.mubr.f32.mxu0 0.0
        %2931 = vmatmul.mubr.f32.gmra.mrb[0].mxu0 %v1886
        %v2932 = vpop.f32.mrb[0].mxu0
        %v2933 = vadd.f32 %v2708, %v2932
        %v2934 = vpop.f32.mrb[0].mxu0
        %2935 = vmatprep.mubr.f32.mxu0 0.0
        %2936 = vmatmul.mubr.f32.gmra.mrb[0].mxu0 %v1887
        %v2937 = vpop.f32.mrb[0].mxu0
        %v2938 = vadd.f32 %v2713, %v2937
        %v2939 = vpop.f32.mrb[0].mxu0
        %2940 = vmatprep.mubr.f32.mxu0 0.0
        %2941 = vmatmul.mubr.f32.gmra.mrb[0].mxu0 %v1888
        %v2942 = vpop.f32.mrb[0].mxu0
        %v2943 = vadd.f32 %v2718, %v2942
        %v2944 = vpop.f32.mrb[0].mxu0
        %2945 = vmatprep.mubr.f32.mxu0 0.0
        %2946 = vmatmul.mubr.f32.gmra.mrb[0].mxu0 %v1889
        %v2947 = vpop.f32.mrb[0].mxu0
        %v2948 = vadd.f32 %v2723, %v2947
        %v2949 = vpop.f32.mrb[0].mxu0
        %2950 = vmatprep.mubr.f32.mxu0 0.0
        %2951 = vmatmul.mubr.f32.gmra.mrb[0].mxu0 %v1890
        %v2952 = vpop.f32.mrb[0].mxu0
        %v2953 = vadd.f32 %v2728, %v2952
        %v2954 = vpop.f32.mrb[0].mxu0
        %2955 = vmatprep.mubr.f32.mxu0 0.0
        %2956 = vmatmul.mubr.f32.gmra.mrb[0].mxu0 %v1891
        %v2957 = vpop.f32.mrb[0].mxu0
        %v2958 = vadd.f32 %v2733, %v2957
        %v2959 = vpop.f32.mrb[0].mxu0
        %2960 = vmatprep.mubr.f32.mxu0 0.0
        %2961 = vmatmul.mubr.f32.gmra.mrb[0].mxu0 %v1892
        %v2962 = vpop.f32.mrb[0].mxu0
        %v2963 = vadd.f32 %v2738, %v2962
        %v2964 = vpop.f32.mrb[0].mxu0
        %2965 = vdwg.mxu0
        %v2966 = vsel %vm1445, %v1944, %v1446
        %v2968 = vsel %vm1382, %v1453, 0.0
        %v2969 = vsel %vm1383, %v1455, 0.0
        %v2970 = vsel %vm1384, %v1457, 0.0
        %v2971 = vsel %vm1385, %v1459, 0.0
        %v2972 = vsel %vm1386, %v1461, 0.0
        %v2973 = vsel %vm1387, %v1463, 0.0
        %v2974 = vsel %vm1388, %v1465, 0.0
        %v2975 = vsel %vm1389, %v1467, 0.0
        %v2976 = vsel %vm1390, %v1469, 0.0
        %v2977 = vsel %vm1391, %v1471, 0.0
        %v2978 = vsel %vm1392, %v1473, 0.0
        %v2979 = vsel %vm1393, %v1475, 0.0
        %v2980 = vsel %vm1394, %v1477, 0.0
        %v2981 = vsel %vm1395, %v1479, 0.0
        %v2982 = vsel %vm1396, %v1481, 0.0
        %v2983 = vsel %vm1397, %v1483, 0.0
        %v2984 = vsel %vm1398, %v1485, 0.0
        %v2985 = vsel %vm1399, %v1487, 0.0
        %v2986 = vsel %vm1400, %v1489, 0.0
        %v2987 = vsel %vm1401, %v1491, 0.0
        %v2988 = vsel %vm1402, %v1493, 0.0
        %v2989 = vsel %vm1403, %v1495, 0.0
        %v2990 = vsel %vm1404, %v1497, 0.0
        %v2991 = vsel %vm1405, %v1499, 0.0
        %v2992 = vsel %vm1406, %v1501, 0.0
        %v2993 = vsel %vm1407, %v1503, 0.0
        %v2994 = vsel %vm1408, %v1505, 0.0
        %v2995 = vsel %vm1409, %v1507, 0.0
        %v2996 = vsel %vm1410, %v1943, 0.0
        %v2997 = vsel %vm1411, %v1945, 0.0
        %v2998 = vsel %vm1412, %v2966, 0.0
        %v2999 = vsel %vm1413, %v1447, 0.0
        %v3000 = vsel %vm1731, %v1774, 0.0
        %v3001 = vsel %vm1732, %v1776, 0.0
        %v3002 = vsel %vm1733, %v1778, 0.0
        %v3003 = vsel %vm1734, %v1780, 0.0
        %v3004 = vsel %vm1735, %v1782, 0.0
        %v3005 = vsel %vm1736, %v1784, 0.0
        %v3006 = vsel %vm1737, %v1786, 0.0
        %v3007 = vsel %vm1738, %v1788, 0.0
        %v3008 = vsel %vm1739, %v1790, 0.0
        %v3009 = vsel %vm1740, %v1792, 0.0
        %v3010 = vsel %vm1741, %v1794, 0.0
        %v3011 = vsel %vm1742, %v1796, 0.0
        %v3012 = vsel %vm1743, %v1798, 0.0
        %v3013 = vsel %vm1744, %v1800, 0.0
        %v3014 = vsel %vm1745, %v1802, 0.0
        %v3015 = vsel %vm1746, %v1804, 0.0
        %v3016 = vsel %vm1747, %v1806, 0.0
        %v3017 = vsel %vm1748, %v1808, 0.0
        %v3018 = vsel %vm1749, %v1810, 0.0
        %v3019 = vsel %vm1750, %v1812, 0.0
        %v3020 = vsel %vm1751, %v1814, 0.0
        %v3021 = vsel %vm1752, %v1816, 0.0
        %v3022 = vsel %vm1753, %v1818, 0.0
        %v3023 = vsel %vm1754, %v1820, 0.0
        %v3024 = vsel %vm1755, %v1822, 0.0
        %v3025 = vsel %vm1756, %v1824, 0.0
        %v3026 = vsel %vm1757, %v1826, 0.0
        %v3027 = vsel %vm1758, %v1828, 0.0
        %v3028 = vsel %vm1759, %v1981, 0.0
        %v3029 = vsel %vm1760, %v1982, 0.0
        %v3030 = vsel %vm1761, %v1766, 0.0
        %v3031 = vsel %vm1762, %v1766, 0.0
        %s3032 = scalar_lea.vmem [#allocation7], 768
        %v3033 = vld [vmem:[%s3032] sm:$0xff]
        %v3034 = vld [vmem:[%s3032 + $0x8] sm:$0xff]
        %v3035 = vld [vmem:[%s3032 + $0x10] sm:$0xff]
        %v3036 = vld [vmem:[%s3032 + $0x18] sm:$0xff]
        %v3037 = vld [vmem:[%s3032 + $0x20] sm:$0xff]
        %v3038 = vld [vmem:[%s3032 + $0x28] sm:$0xff]
        %v3039 = vld [vmem:[%s3032 + $0x30] sm:$0xff]
        %v3040 = vld [vmem:[%s3032 + $0x38] sm:$0xff]
        %v3041 = vld [vmem:[%s3032 + $0x40] sm:$0xff]
        %v3042 = vld [vmem:[%s3032 + $0x48] sm:$0xff]
        %v3043 = vld [vmem:[%s3032 + $0x50] sm:$0xff]
        %v3044 = vld [vmem:[%s3032 + $0x58] sm:$0xff]
        %v3045 = vld [vmem:[%s3032 + $0x60] sm:$0xff]
        %v3046 = vld [vmem:[%s3032 + $0x68] sm:$0xff]
        %v3047 = vld [vmem:[%s3032 + $0x70] sm:$0xff]
        %v3048 = vld [vmem:[%s3032 + $0x78] sm:$0xff]
        %v3049 = vld [vmem:[%s3032 + $0x80] sm:$0xff]
        %v3050 = vld [vmem:[%s3032 + $0x88] sm:$0xff]
        %v3051 = vld [vmem:[%s3032 + $0x90] sm:$0xff]
        %v3052 = vld [vmem:[%s3032 + $0x98] sm:$0xff]
        %v3053 = vld [vmem:[%s3032 + $0xa0] sm:$0xff]
        %v3054 = vld [vmem:[%s3032 + $0xa8] sm:$0xff]
        %v3055 = vld [vmem:[%s3032 + $0xb0] sm:$0xff]
        %v3056 = vld [vmem:[%s3032 + $0xb8] sm:$0xff]
        %v3057 = vld [vmem:[%s3032 + $0xc0] sm:$0xff]
        %v3058 = vld [vmem:[%s3032 + $0xc8] sm:$0xff]
        %v3059 = vld [vmem:[%s3032 + $0xd0] sm:$0xff]
        %v3060 = vld [vmem:[%s3032 + $0xd8] sm:$0xff]
        %v3061 = vld [vmem:[%s3032 + $0xe0] sm:$0xff]
        %v3062 = vld [vmem:[%s3032 + $0xe8] sm:$0xff]
        %v3063 = vld [vmem:[%s3032 + $0xf0] sm:$0xff]
        %v3064 = vld [vmem:[%s3032 + $0xf8] sm:$0xff]
        %v3065 = vld [vmem:[%s3032 + $0x100] sm:$0xff]
        %v3066 = vld [vmem:[%s3032 + $0x108] sm:$0xff]
        %v3067 = vld [vmem:[%s3032 + $0x110] sm:$0xff]
        %v3068 = vld [vmem:[%s3032 + $0x118] sm:$0xff]
        %v3069 = vld [vmem:[%s3032 + $0x120] sm:$0xff]
        %v3070 = vld [vmem:[%s3032 + $0x128] sm:$0xff]
        %v3071 = vld [vmem:[%s3032 + $0x130] sm:$0xff]
        %v3072 = vld [vmem:[%s3032 + $0x138] sm:$0xff]
        %v3073 = vld [vmem:[%s3032 + $0x140] sm:$0xff]
        %v3074 = vld [vmem:[%s3032 + $0x148] sm:$0xff]
        %v3075 = vld [vmem:[%s3032 + $0x150] sm:$0xff]
        %v3076 = vld [vmem:[%s3032 + $0x158] sm:$0xff]
        %v3077 = vld [vmem:[%s3032 + $0x160] sm:$0xff]
        %v3078 = vld [vmem:[%s3032 + $0x168] sm:$0xff]
        %v3079 = vld [vmem:[%s3032 + $0x170] sm:$0xff]
        %v3080 = vld [vmem:[%s3032 + $0x178] sm:$0xff]
        %3081 = vmatprep.subr.mxu0 0.0
        %3082 = vmatpush1.msra.mxu0 %v3033
        %3083 = vmatprep.subr.mxu0 0.0
        %3084 = vmatpush1.msra.mxu0 %v3034
        %3085 = vmatprep.subr.mxu0 0.0
        %3086 = vmatpush1.msra.mxu0 %v3035
        %3087 = vmatprep.subr.mxu0 0.0
        %3088 = vmatpush1.msra.mxu0 %v3036
        %3089 = vmatprep.subr.mxu0 0.0
        %3090 = vmatpush1.msra.mxu0 %v3037
        %3091 = vmatprep.subr.mxu0 0.0
        %3092 = vmatpush1.msra.mxu0 %v3038
        %3093 = vmatprep.subr.mxu0 0.0
        %3094 = vmatpush1.msra.mxu0 %v3039
        %3095 = vmatprep.subr.mxu0 0.0
        %3096 = vmatpush1.msra.mxu0 %v3040
        %3097 = vmatprep.subr.mxu0 0.0
        %3098 = vmatpush1.msra.mxu0 %v3041
        %3099 = vmatprep.subr.mxu0 0.0
        %3100 = vmatpush1.msra.mxu0 %v3042
        %3101 = vmatprep.subr.mxu0 0.0
        %3102 = vmatpush1.msra.mxu0 %v3043
        %3103 = vmatprep.subr.mxu0 0.0
        %3104 = vmatpush1.msra.mxu0 %v3044
        %3105 = vmatprep.subr.mxu0 0.0
        %3106 = vmatpush1.msra.mxu0 %v3045
        %3107 = vmatprep.subr.mxu0 0.0
        %3108 = vmatpush1.msra.mxu0 %v3046
        %3109 = vmatprep.subr.mxu0 0.0
        %3110 = vmatpush1.msra.mxu0 %v3047
        %3111 = vmatprep.subr.mxu0 0.0
        %3112 = vmatpush1.msra.mxu0 %v3048
        %3113 = vmatprep.subr.mxu0 0.0
        %3114 = vmatpush1.msra.mxu0 %v3049
        %3115 = vmatprep.subr.mxu0 0.0
        %3116 = vmatpush1.msra.mxu0 %v3050
        %3117 = vmatprep.subr.mxu0 0.0
        %3118 = vmatpush1.msra.mxu0 %v3051
        %3119 = vmatprep.subr.mxu0 0.0
        %3120 = vmatpush1.msra.mxu0 %v3052
        %3121 = vmatprep.subr.mxu0 0.0
        %3122 = vmatpush1.msra.mxu0 %v3053
        %3123 = vmatprep.subr.mxu0 0.0
        %3124 = vmatpush1.msra.mxu0 %v3054
        %3125 = vmatprep.subr.mxu0 0.0
        %3126 = vmatpush1.msra.mxu0 %v3055
        %3127 = vmatprep.subr.mxu0 0.0
        %3128 = vmatpush1.msra.mxu0 %v3056
        %3129 = vmatprep.subr.mxu0 0.0
        %3130 = vmatpush1.msra.mxu0 %v3057
        %3131 = vmatprep.subr.mxu0 0.0
        %3132 = vmatpush1.msra.mxu0 %v3058
        %3133 = vmatprep.subr.mxu0 0.0
        %3134 = vmatpush1.msra.mxu0 %v3059
        %3135 = vmatprep.subr.mxu0 0.0
        %3136 = vmatpush1.msra.mxu0 %v3060
        %3137 = vmatprep.subr.mxu0 0.0
        %3138 = vmatpush1.msra.mxu0 %v3061
        %3139 = vmatprep.subr.mxu0 0.0
        %3140 = vmatpush1.msra.mxu0 %v3062
        %3141 = vmatprep.subr.mxu0 0.0
        %3142 = vmatpush1.msra.mxu0 %v3063
        %3143 = vmatprep.subr.mxu0 0.0
        %3144 = vmatpush1.msra.mxu0 %v3064
        %3145 = vmatprep.mubr.f32.mxu0 %v775
        %3146 = vmatmul.mubr.f32.gmra.mrb[0].mxu0 %v2968
        %v3147 = vpop.f32.mrb[0].mxu0
        %v3148 = vadd.f32 0.0, %v3147
        %v3149 = vpop.f32.mrb[0].mxu0
        %3150 = vmatprep.mubr.f32.mxu0 %v776
        %3151 = vmatmul.mubr.f32.gmra.mrb[0].mxu0 %v2969
        %v3152 = vpop.f32.mrb[0].mxu0
        %v3153 = vadd.f32 0.0, %v3152
        %v3154 = vpop.f32.mrb[0].mxu0
        %3155 = vmatprep.mubr.f32.mxu0 %v777
        %3156 = vmatmul.mubr.f32.gmra.mrb[0].mxu0 %v2970
        %v3157 = vpop.f32.mrb[0].mxu0
        %v3158 = vadd.f32 0.0, %v3157
        %v3159 = vpop.f32.mrb[0].mxu0
        %3160 = vmatprep.mubr.f32.mxu0 %v778
        %3161 = vmatmul.mubr.f32.gmra.mrb[0].mxu0 %v2971
        %v3162 = vpop.f32.mrb[0].mxu0
        %v3163 = vadd.f32 0.0, %v3162
        %v3164 = vpop.f32.mrb[0].mxu0
        %3165 = vmatprep.mubr.f32.mxu0 %v779
        %3166 = vmatmul.mubr.f32.gmra.mrb[0].mxu0 %v2972
        %v3167 = vpop.f32.mrb[0].mxu0
        %v3168 = vadd.f32 0.0, %v3167
        %v3169 = vpop.f32.mrb[0].mxu0
        %3170 = vmatprep.mubr.f32.mxu0 %v780
        %3171 = vmatmul.mubr.f32.gmra.mrb[0].mxu0 %v2973
        %v3172 = vpop.f32.mrb[0].mxu0
        %v3173 = vadd.f32 0.0, %v3172
        %v3174 = vpop.f32.mrb[0].mxu0
        %3175 = vmatprep.mubr.f32.mxu0 %v781
        %3176 = vmatmul.mubr.f32.gmra.mrb[0].mxu0 %v2974
        %v3177 = vpop.f32.mrb[0].mxu0
        %v3178 = vadd.f32 0.0, %v3177
        %v3179 = vpop.f32.mrb[0].mxu0
        %3180 = vmatprep.mubr.f32.mxu0 %v782
        %3181 = vmatmul.mubr.f32.gmra.mrb[0].mxu0 %v2975
        %v3182 = vpop.f32.mrb[0].mxu0
        %v3183 = vadd.f32 0.0, %v3182
        %v3184 = vpop.f32.mrb[0].mxu0
        %3185 = vmatprep.mubr.f32.mxu0 %v783
        %3186 = vmatmul.mubr.f32.gmra.mrb[0].mxu0 %v2976
        %v3187 = vpop.f32.mrb[0].mxu0
        %v3188 = vadd.f32 0.0, %v3187
        %v3189 = vpop.f32.mrb[0].mxu0
        %3190 = vmatprep.mubr.f32.mxu0 %v784
        %3191 = vmatmul.mubr.f32.gmra.mrb[0].mxu0 %v2977
        %v3192 = vpop.f32.mrb[0].mxu0
        %v3193 = vadd.f32 0.0, %v3192
        %v3194 = vpop.f32.mrb[0].mxu0
        %3195 = vmatprep.mubr.f32.mxu0 %v785
        %3196 = vmatmul.mubr.f32.gmra.mrb[0].mxu0 %v2978
        %v3197 = vpop.f32.mrb[0].mxu0
        %v3198 = vadd.f32 0.0, %v3197
        %v3199 = vpop.f32.mrb[0].mxu0
        %3200 = vmatprep.mubr.f32.mxu0 %v786
        %3201 = vmatmul.mubr.f32.gmra.mrb[0].mxu0 %v2979
        %v3202 = vpop.f32.mrb[0].mxu0
        %v3203 = vadd.f32 0.0, %v3202
        %v3204 = vpop.f32.mrb[0].mxu0
        %3205 = vmatprep.mubr.f32.mxu0 %v787
        %3206 = vmatmul.mubr.f32.gmra.mrb[0].mxu0 %v2980
        %v3207 = vpop.f32.mrb[0].mxu0
        %v3208 = vadd.f32 0.0, %v3207
        %v3209 = vpop.f32.mrb[0].mxu0
        %3210 = vmatprep.mubr.f32.mxu0 %v788
        %3211 = vmatmul.mubr.f32.gmra.mrb[0].mxu0 %v2981
        %v3212 = vpop.f32.mrb[0].mxu0
        %v3213 = vadd.f32 0.0, %v3212
        %v3214 = vpop.f32.mrb[0].mxu0
        %3215 = vmatprep.mubr.f32.mxu0 %v789
        %3216 = vmatmul.mubr.f32.gmra.mrb[0].mxu0 %v2982
        %v3217 = vpop.f32.mrb[0].mxu0
        %v3218 = vadd.f32 0.0, %v3217
        %v3219 = vpop.f32.mrb[0].mxu0
        %3220 = vmatprep.mubr.f32.mxu0 %v790
        %3221 = vmatmul.mubr.f32.gmra.mrb[0].mxu0 %v2983
        %v3222 = vpop.f32.mrb[0].mxu0
        %v3223 = vadd.f32 0.0, %v3222
        %v3224 = vpop.f32.mrb[0].mxu0
        %3225 = vmatprep.mubr.f32.mxu0 %v791
        %3226 = vmatmul.mubr.f32.gmra.mrb[0].mxu0 %v2984
        %v3227 = vpop.f32.mrb[0].mxu0
        %v3228 = vadd.f32 0.0, %v3227
        %v3229 = vpop.f32.mrb[0].mxu0
        %3230 = vmatprep.mubr.f32.mxu0 %v792
        %3231 = vmatmul.mubr.f32.gmra.mrb[0].mxu0 %v2985
        %v3232 = vpop.f32.mrb[0].mxu0
        %v3233 = vadd.f32 0.0, %v3232
        %v3234 = vpop.f32.mrb[0].mxu0
        %3235 = vmatprep.mubr.f32.mxu0 %v793
        %3236 = vmatmul.mubr.f32.gmra.mrb[0].mxu0 %v2986
        %v3237 = vpop.f32.mrb[0].mxu0
        %v3238 = vadd.f32 0.0, %v3237
        %v3239 = vpop.f32.mrb[0].mxu0
        %3240 = vmatprep.mubr.f32.mxu0 %v794
        %3241 = vmatmul.mubr.f32.gmra.mrb[0].mxu0 %v2987
        %v3242 = vpop.f32.mrb[0].mxu0
        %v3243 = vadd.f32 0.0, %v3242
        %v3244 = vpop.f32.mrb[0].mxu0
        %3245 = vmatprep.mubr.f32.mxu0 %v795
        %3246 = vmatmul.mubr.f32.gmra.mrb[0].mxu0 %v2988
        %v3247 = vpop.f32.mrb[0].mxu0
        %v3248 = vadd.f32 0.0, %v3247
        %v3249 = vpop.f32.mrb[0].mxu0
        %3250 = vmatprep.mubr.f32.mxu0 %v796
        %3251 = vmatmul.mubr.f32.gmra.mrb[0].mxu0 %v2989
        %v3252 = vpop.f32.mrb[0].mxu0
        %v3253 = vadd.f32 0.0, %v3252
        %v3254 = vpop.f32.mrb[0].mxu0
        %3255 = vmatprep.mubr.f32.mxu0 %v797
        %3256 = vmatmul.mubr.f32.gmra.mrb[0].mxu0 %v2990
        %v3257 = vpop.f32.mrb[0].mxu0
        %v3258 = vadd.f32 0.0, %v3257
        %v3259 = vpop.f32.mrb[0].mxu0
        %3260 = vmatprep.mubr.f32.mxu0 %v798
        %3261 = vmatmul.mubr.f32.gmra.mrb[0].mxu0 %v2991
        %v3262 = vpop.f32.mrb[0].mxu0
        %v3263 = vadd.f32 0.0, %v3262
        %v3264 = vpop.f32.mrb[0].mxu0
        %3265 = vmatprep.mubr.f32.mxu0 %v799
        %3266 = vmatmul.mubr.f32.gmra.mrb[0].mxu0 %v2992
        %v3267 = vpop.f32.mrb[0].mxu0
        %v3268 = vadd.f32 0.0, %v3267
        %v3269 = vpop.f32.mrb[0].mxu0
        %3270 = vmatprep.mubr.f32.mxu0 %v800
        %3271 = vmatmul.mubr.f32.gmra.mrb[0].mxu0 %v2993
        %v3272 = vpop.f32.mrb[0].mxu0
        %v3273 = vadd.f32 0.0, %v3272
        %v3274 = vpop.f32.mrb[0].mxu0
        %3275 = vmatprep.mubr.f32.mxu0 %v801
        %3276 = vmatmul.mubr.f32.gmra.mrb[0].mxu0 %v2994
        %v3277 = vpop.f32.mrb[0].mxu0
        %v3278 = vadd.f32 0.0, %v3277
        %v3279 = vpop.f32.mrb[0].mxu0
        %3280 = vmatprep.mubr.f32.mxu0 %v802
        %3281 = vmatmul.mubr.f32.gmra.mrb[0].mxu0 %v2995
        %v3282 = vpop.f32.mrb[0].mxu0
        %v3283 = vadd.f32 0.0, %v3282
        %v3284 = vpop.f32.mrb[0].mxu0
        %3285 = vmatprep.mubr.f32.mxu0 %v803
        %3286 = vmatmul.mubr.f32.gmra.mrb[0].mxu0 %v2996
        %v3287 = vpop.f32.mrb[0].mxu0
        %v3288 = vadd.f32 0.0, %v3287
        %v3289 = vpop.f32.mrb[0].mxu0
        %3290 = vmatprep.mubr.f32.mxu0 %v804
        %3291 = vmatmul.mubr.f32.gmra.mrb[0].mxu0 %v2997
        %v3292 = vpop.f32.mrb[0].mxu0
        %v3293 = vadd.f32 0.0, %v3292
        %v3294 = vpop.f32.mrb[0].mxu0
        %3295 = vmatprep.mubr.f32.mxu0 0.0
        %3296 = vmatmul.mubr.f32.gmra.mrb[0].mxu0 %v2998
        %v3297 = vpop.f32.mrb[0].mxu0
        %v3298 = vadd.f32 0.0, %v3297
        %v3299 = vpop.f32.mrb[0].mxu0
        %3300 = vmatprep.mubr.f32.mxu0 0.0
        %3301 = vmatmul.mubr.f32.gmra.mrb[0].mxu0 %v2999
        %v3302 = vpop.f32.mrb[0].mxu0
        %v3303 = vadd.f32 0.0, %v3302
        %v3304 = vpop.f32.mrb[0].mxu0
        %3305 = vdwg.mxu0
        %3306 = vmatprep.subr.mxu0 0.0
        %3307 = vmatpush1.msra.mxu0 %v3065
        %3308 = vmatprep.subr.mxu0 0.0
        %3309 = vmatpush1.msra.mxu0 %v3066
        %3310 = vmatprep.subr.mxu0 0.0
        %3311 = vmatpush1.msra.mxu0 %v3067
        %3312 = vmatprep.subr.mxu0 0.0
        %3313 = vmatpush1.msra.mxu0 %v3068
        %3314 = vmatprep.subr.mxu0 0.0
        %3315 = vmatpush1.msra.mxu0 %v3069
        %3316 = vmatprep.subr.mxu0 0.0
        %3317 = vmatpush1.msra.mxu0 %v3070
        %3318 = vmatprep.subr.mxu0 0.0
        %3319 = vmatpush1.msra.mxu0 %v3071
        %3320 = vmatprep.subr.mxu0 0.0
        %3321 = vmatpush1.msra.mxu0 %v3072
        %3322 = vmatprep.subr.mxu0 0.0
        %3323 = vmatpush1.msra.mxu0 %v3073
        %3324 = vmatprep.subr.mxu0 0.0
        %3325 = vmatpush1.msra.mxu0 %v3074
        %3326 = vmatprep.subr.mxu0 0.0
        %3327 = vmatpush1.msra.mxu0 %v3075
        %3328 = vmatprep.subr.mxu0 0.0
        %3329 = vmatpush1.msra.mxu0 %v3076
        %3330 = vmatprep.subr.mxu0 0.0
        %3331 = vmatpush1.msra.mxu0 %v3077
        %3332 = vmatprep.subr.mxu0 0.0
        %3333 = vmatpush1.msra.mxu0 %v3078
        %3334 = vmatprep.subr.mxu0 0.0
        %3335 = vmatpush1.msra.mxu0 %v3079
        %3336 = vmatprep.subr.mxu0 0.0
        %3337 = vmatpush1.msra.mxu0 %v3080
        %3338 = vmatprep.subr.mxu0 0.0
        %3339 = vmatpush1.msra.mxu0 0.0
        %3340 = vmatprep.subr.mxu0 0.0
        %3341 = vmatpush1.msra.mxu0 0.0
        %3342 = vmatprep.subr.mxu0 0.0
        %3343 = vmatpush1.msra.mxu0 0.0
        %3344 = vmatprep.subr.mxu0 0.0
        %3345 = vmatpush1.msra.mxu0 0.0
        %3346 = vmatprep.subr.mxu0 0.0
        %3347 = vmatpush1.msra.mxu0 0.0
        %3348 = vmatprep.subr.mxu0 0.0
        %3349 = vmatpush1.msra.mxu0 0.0
        %3350 = vmatprep.subr.mxu0 0.0
        %3351 = vmatpush1.msra.mxu0 0.0
        %3352 = vmatprep.subr.mxu0 0.0
        %3353 = vmatpush1.msra.mxu0 0.0
        %3354 = vmatprep.subr.mxu0 0.0
        %3355 = vmatpush1.msra.mxu0 0.0
        %3356 = vmatprep.subr.mxu0 0.0
        %3357 = vmatpush1.msra.mxu0 0.0
        %3358 = vmatprep.subr.mxu0 0.0
        %3359 = vmatpush1.msra.mxu0 0.0
        %3360 = vmatprep.subr.mxu0 0.0
        %3361 = vmatpush1.msra.mxu0 0.0
        %3362 = vmatprep.subr.mxu0 0.0
        %3363 = vmatpush1.msra.mxu0 0.0
        %3364 = vmatprep.subr.mxu0 0.0
        %3365 = vmatpush1.msra.mxu0 0.0
        %3366 = vmatprep.subr.mxu0 0.0
        %3367 = vmatpush1.msra.mxu0 0.0
        %3368 = vmatprep.subr.mxu0 0.0
        %3369 = vmatpush1.msra.mxu0 0.0
        %3370 = vmatprep.mubr.f32.mxu0 0.0
        %3371 = vmatmul.mubr.f32.gmra.mrb[0].mxu0 %v3000
        %v3372 = vpop.f32.mrb[0].mxu0
        %v3373 = vadd.f32 %v3148, %v3372
        %v3374 = vpop.f32.mrb[0].mxu0
        %3375 = vmatprep.mubr.f32.mxu0 0.0
        %3376 = vmatmul.mubr.f32.gmra.mrb[0].mxu0 %v3001
        %v3377 = vpop.f32.mrb[0].mxu0
        %v3378 = vadd.f32 %v3153, %v3377
        %v3379 = vpop.f32.mrb[0].mxu0
        %3380 = vmatprep.mubr.f32.mxu0 0.0
        %3381 = vmatmul.mubr.f32.gmra.mrb[0].mxu0 %v3002
        %v3382 = vpop.f32.mrb[0].mxu0
        %v3383 = vadd.f32 %v3158, %v3382
        %v3384 = vpop.f32.mrb[0].mxu0
        %3385 = vmatprep.mubr.f32.mxu0 0.0
        %3386 = vmatmul.mubr.f32.gmra.mrb[0].mxu0 %v3003
        %v3387 = vpop.f32.mrb[0].mxu0
        %v3388 = vadd.f32 %v3163, %v3387
        %v3389 = vpop.f32.mrb[0].mxu0
        %3390 = vmatprep.mubr.f32.mxu0 0.0
        %3391 = vmatmul.mubr.f32.gmra.mrb[0].mxu0 %v3004
        %v3392 = vpop.f32.mrb[0].mxu0
        %v3393 = vadd.f32 %v3168, %v3392
        %v3394 = vpop.f32.mrb[0].mxu0
        %3395 = vmatprep.mubr.f32.mxu0 0.0
        %3396 = vmatmul.mubr.f32.gmra.mrb[0].mxu0 %v3005
        %v3397 = vpop.f32.mrb[0].mxu0
        %v3398 = vadd.f32 %v3173, %v3397
        %v3399 = vpop.f32.mrb[0].mxu0
        %3400 = vmatprep.mubr.f32.mxu0 0.0
        %3401 = vmatmul.mubr.f32.gmra.mrb[0].mxu0 %v3006
        %v3402 = vpop.f32.mrb[0].mxu0
        %v3403 = vadd.f32 %v3178, %v3402
        %v3404 = vpop.f32.mrb[0].mxu0
        %3405 = vmatprep.mubr.f32.mxu0 0.0
        %3406 = vmatmul.mubr.f32.gmra.mrb[0].mxu0 %v3007
        %v3407 = vpop.f32.mrb[0].mxu0
        %v3408 = vadd.f32 %v3183, %v3407
        %v3409 = vpop.f32.mrb[0].mxu0
        %3410 = vmatprep.mubr.f32.mxu0 0.0
        %3411 = vmatmul.mubr.f32.gmra.mrb[0].mxu0 %v3008
        %v3412 = vpop.f32.mrb[0].mxu0
        %v3413 = vadd.f32 %v3188, %v3412
        %v3414 = vpop.f32.mrb[0].mxu0
        %3415 = vmatprep.mubr.f32.mxu0 0.0
        %3416 = vmatmul.mubr.f32.gmra.mrb[0].mxu0 %v3009
        %v3417 = vpop.f32.mrb[0].mxu0
        %v3418 = vadd.f32 %v3193, %v3417
        %v3419 = vpop.f32.mrb[0].mxu0
        %3420 = vmatprep.mubr.f32.mxu0 0.0
        %3421 = vmatmul.mubr.f32.gmra.mrb[0].mxu0 %v3010
        %v3422 = vpop.f32.mrb[0].mxu0
        %v3423 = vadd.f32 %v3198, %v3422
        %v3424 = vpop.f32.mrb[0].mxu0
        %3425 = vmatprep.mubr.f32.mxu0 0.0
        %3426 = vmatmul.mubr.f32.gmra.mrb[0].mxu0 %v3011
        %v3427 = vpop.f32.mrb[0].mxu0
        %v3428 = vadd.f32 %v3203, %v3427
        %v3429 = vpop.f32.mrb[0].mxu0
        %3430 = vmatprep.mubr.f32.mxu0 0.0
        %3431 = vmatmul.mubr.f32.gmra.mrb[0].mxu0 %v3012
        %v3432 = vpop.f32.mrb[0].mxu0
        %v3433 = vadd.f32 %v3208, %v3432
        %v3434 = vpop.f32.mrb[0].mxu0
        %3435 = vmatprep.mubr.f32.mxu0 0.0
        %3436 = vmatmul.mubr.f32.gmra.mrb[0].mxu0 %v3013
        %v3437 = vpop.f32.mrb[0].mxu0
        %v3438 = vadd.f32 %v3213, %v3437
        %v3439 = vpop.f32.mrb[0].mxu0
        %3440 = vmatprep.mubr.f32.mxu0 0.0
        %3441 = vmatmul.mubr.f32.gmra.mrb[0].mxu0 %v3014
        %v3442 = vpop.f32.mrb[0].mxu0
        %v3443 = vadd.f32 %v3218, %v3442
        %v3444 = vpop.f32.mrb[0].mxu0
        %3445 = vmatprep.mubr.f32.mxu0 0.0
        %3446 = vmatmul.mubr.f32.gmra.mrb[0].mxu0 %v3015
        %v3447 = vpop.f32.mrb[0].mxu0
        %v3448 = vadd.f32 %v3223, %v3447
        %v3449 = vpop.f32.mrb[0].mxu0
        %3450 = vmatprep.mubr.f32.mxu0 0.0
        %3451 = vmatmul.mubr.f32.gmra.mrb[0].mxu0 %v3016
        %v3452 = vpop.f32.mrb[0].mxu0
        %v3453 = vadd.f32 %v3228, %v3452
        %v3454 = vpop.f32.mrb[0].mxu0
        %3455 = vmatprep.mubr.f32.mxu0 0.0
        %3456 = vmatmul.mubr.f32.gmra.mrb[0].mxu0 %v3017
        %v3457 = vpop.f32.mrb[0].mxu0
        %v3458 = vadd.f32 %v3233, %v3457
        %v3459 = vpop.f32.mrb[0].mxu0
        %3460 = vmatprep.mubr.f32.mxu0 0.0
        %3461 = vmatmul.mubr.f32.gmra.mrb[0].mxu0 %v3018
        %v3462 = vpop.f32.mrb[0].mxu0
        %v3463 = vadd.f32 %v3238, %v3462
        %v3464 = vpop.f32.mrb[0].mxu0
        %3465 = vmatprep.mubr.f32.mxu0 0.0
        %3466 = vmatmul.mubr.f32.gmra.mrb[0].mxu0 %v3019
        %v3467 = vpop.f32.mrb[0].mxu0
        %v3468 = vadd.f32 %v3243, %v3467
        %v3469 = vpop.f32.mrb[0].mxu0
        %3470 = vmatprep.mubr.f32.mxu0 0.0
        %3471 = vmatmul.mubr.f32.gmra.mrb[0].mxu0 %v3020
        %v3472 = vpop.f32.mrb[0].mxu0
        %v3473 = vadd.f32 %v3248, %v3472
        %v3474 = vpop.f32.mrb[0].mxu0
        %3475 = vmatprep.mubr.f32.mxu0 0.0
        %3476 = vmatmul.mubr.f32.gmra.mrb[0].mxu0 %v3021
        %v3477 = vpop.f32.mrb[0].mxu0
        %v3478 = vadd.f32 %v3253, %v3477
        %v3479 = vpop.f32.mrb[0].mxu0
        %3480 = vmatprep.mubr.f32.mxu0 0.0
        %3481 = vmatmul.mubr.f32.gmra.mrb[0].mxu0 %v3022
        %v3482 = vpop.f32.mrb[0].mxu0
        %v3483 = vadd.f32 %v3258, %v3482
        %v3484 = vpop.f32.mrb[0].mxu0
        %3485 = vmatprep.mubr.f32.mxu0 0.0
        %3486 = vmatmul.mubr.f32.gmra.mrb[0].mxu0 %v3023
        %v3487 = vpop.f32.mrb[0].mxu0
        %v3488 = vadd.f32 %v3263, %v3487
        %v3489 = vpop.f32.mrb[0].mxu0
        %3490 = vmatprep.mubr.f32.mxu0 0.0
        %3491 = vmatmul.mubr.f32.gmra.mrb[0].mxu0 %v3024
        %v3492 = vpop.f32.mrb[0].mxu0
        %v3493 = vadd.f32 %v3268, %v3492
        %v3494 = vpop.f32.mrb[0].mxu0
        %3495 = vmatprep.mubr.f32.mxu0 0.0
        %3496 = vmatmul.mubr.f32.gmra.mrb[0].mxu0 %v3025
        %v3497 = vpop.f32.mrb[0].mxu0
        %v3498 = vadd.f32 %v3273, %v3497
        %v3499 = vpop.f32.mrb[0].mxu0
        %3500 = vmatprep.mubr.f32.mxu0 0.0
        %3501 = vmatmul.mubr.f32.gmra.mrb[0].mxu0 %v3026
        %v3502 = vpop.f32.mrb[0].mxu0
        %v3503 = vadd.f32 %v3278, %v3502
        %v3504 = vpop.f32.mrb[0].mxu0
        %3505 = vmatprep.mubr.f32.mxu0 0.0
        %3506 = vmatmul.mubr.f32.gmra.mrb[0].mxu0 %v3027
        %v3507 = vpop.f32.mrb[0].mxu0
        %v3508 = vadd.f32 %v3283, %v3507
        %v3509 = vpop.f32.mrb[0].mxu0
        %3510 = vmatprep.mubr.f32.mxu0 0.0
        %3511 = vmatmul.mubr.f32.gmra.mrb[0].mxu0 %v3028
        %v3512 = vpop.f32.mrb[0].mxu0
        %v3513 = vadd.f32 %v3288, %v3512
        %v3514 = vpop.f32.mrb[0].mxu0
        %3515 = vmatprep.mubr.f32.mxu0 0.0
        %3516 = vmatmul.mubr.f32.gmra.mrb[0].mxu0 %v3029
        %v3517 = vpop.f32.mrb[0].mxu0
        %v3518 = vadd.f32 %v3293, %v3517
        %v3519 = vpop.f32.mrb[0].mxu0
        %3520 = vmatprep.mubr.f32.mxu0 0.0
        %3521 = vmatmul.mubr.f32.gmra.mrb[0].mxu0 %v3030
        %v3522 = vpop.f32.mrb[0].mxu0
        %v3523 = vadd.f32 %v3298, %v3522
        %v3524 = vpop.f32.mrb[0].mxu0
        %3525 = vmatprep.mubr.f32.mxu0 0.0
        %3526 = vmatmul.mubr.f32.gmra.mrb[0].mxu0 %v3031
        %v3527 = vpop.f32.mrb[0].mxu0
        %v3528 = vadd.f32 %v3303, %v3527
        %v3529 = vpop.f32.mrb[0].mxu0
        %3530 = vdwg.mxu0
        %v3531 = vadd.f32 %v2808, %v3373
        %v3532 = vadd.f32 %v2813, %v3378
        %v3533 = vadd.f32 %v2818, %v3383
        %v3534 = vadd.f32 %v2823, %v3388
        %v3535 = vadd.f32 %v2828, %v3393
        %v3536 = vadd.f32 %v2833, %v3398
        %v3537 = vadd.f32 %v2838, %v3403
        %v3538 = vadd.f32 %v2843, %v3408
        %v3539 = vadd.f32 %v2848, %v3413
        %v3540 = vadd.f32 %v2853, %v3418
        %v3541 = vadd.f32 %v2858, %v3423
        %v3542 = vadd.f32 %v2863, %v3428
        %v3543 = vadd.f32 %v2868, %v3433
        %v3544 = vadd.f32 %v2873, %v3438
        %v3545 = vadd.f32 %v2878, %v3443
        %v3546 = vadd.f32 %v2883, %v3448
        %v3547 = vadd.f32 %v2888, %v3453
        %v3548 = vadd.f32 %v2893, %v3458
        %v3549 = vadd.f32 %v2898, %v3463
        %v3550 = vadd.f32 %v2903, %v3468
        %v3551 = vadd.f32 %v2908, %v3473
        %v3552 = vadd.f32 %v2913, %v3478
        %v3553 = vadd.f32 %v2918, %v3483
        %v3554 = vadd.f32 %v2923, %v3488
        %v3555 = vadd.f32 %v2928, %v3493
        %v3556 = vadd.f32 %v2933, %v3498
        %v3557 = vadd.f32 %v2938, %v3503
        %v3558 = vadd.f32 %v2943, %v3508
        %v3559 = vadd.f32 %v2948, %v3513
        %v3560 = vadd.f32 %v2953, %v3518
        %v3561 = vadd.f32 %v2958, %v3523
        %v3562 = vadd.f32 %v2963, %v3528
        %v3563 = vld [vmem:[%s6] sm:$0x1]
        %v3565 = vlaneseq
        %v3566 = vshrl.u32 %v3565, 7
        %v3567 = vsub.s32 0, %v3566
        %v3568 = vrot.slane %v3563, %v3567
        %v3570 = vmul.f32 %v3531, %v3568
        %v3571 = vmul.f32 %v3532, %v3568
        %v3572 = vmul.f32 %v3533, %v3568
        %v3573 = vmul.f32 %v3534, %v3568
        %v3574 = vmul.f32 %v3535, %v3568
        %v3575 = vmul.f32 %v3536, %v3568
        %v3576 = vmul.f32 %v3537, %v3568
        %v3577 = vmul.f32 %v3538, %v3568
        %v3578 = vmul.f32 %v3539, %v3568
        %v3579 = vmul.f32 %v3540, %v3568
        %v3580 = vmul.f32 %v3541, %v3568
        %v3581 = vmul.f32 %v3542, %v3568
        %v3582 = vmul.f32 %v3543, %v3568
        %v3583 = vmul.f32 %v3544, %v3568
        %v3584 = vmul.f32 %v3545, %v3568
        %v3585 = vmul.f32 %v3546, %v3568
        %v3586 = vmul.f32 %v3547, %v3568
        %v3587 = vmul.f32 %v3548, %v3568
        %v3588 = vmul.f32 %v3549, %v3568
        %v3589 = vmul.f32 %v3550, %v3568
        %v3590 = vmul.f32 %v3551, %v3568
        %v3591 = vmul.f32 %v3552, %v3568
        %v3592 = vmul.f32 %v3553, %v3568
        %v3593 = vmul.f32 %v3554, %v3568
        %v3594 = vmul.f32 %v3555, %v3568
        %v3595 = vmul.f32 %v3556, %v3568
        %v3596 = vmul.f32 %v3557, %v3568
        %v3597 = vmul.f32 %v3558, %v3568
        %v3598 = vmul.f32 %v3559, %v3568
        %v3599 = vmul.f32 %v3560, %v3568
        %v3600 = vmul.f32 %v3561, %v3568
        %v3601 = vmul.f32 %v3562, %v3568
        %v3602 = vld [vmem:[%s7] sm:$0x1]
        %v3604 = vlaneseq
        %v3605 = vshrl.u32 %v3604, 7
        %v3606 = vsub.s32 0, %v3605
        %v3607 = vrot.slane %v3602, %v3606
        %v3609 = vadd.f32 %v3570, %v3607
        %v3610 = vadd.f32 %v3571, %v3607
        %v3611 = vadd.f32 %v3572, %v3607
        %v3612 = vadd.f32 %v3573, %v3607
        %v3613 = vadd.f32 %v3574, %v3607
        %v3614 = vadd.f32 %v3575, %v3607
        %v3615 = vadd.f32 %v3576, %v3607
        %v3616 = vadd.f32 %v3577, %v3607
        %v3617 = vadd.f32 %v3578, %v3607
        %v3618 = vadd.f32 %v3579, %v3607
        %v3619 = vadd.f32 %v3580, %v3607
        %v3620 = vadd.f32 %v3581, %v3607
        %v3621 = vadd.f32 %v3582, %v3607
        %v3622 = vadd.f32 %v3583, %v3607
        %v3623 = vadd.f32 %v3584, %v3607
        %v3624 = vadd.f32 %v3585, %v3607
        %v3625 = vadd.f32 %v3586, %v3607
        %v3626 = vadd.f32 %v3587, %v3607
        %v3627 = vadd.f32 %v3588, %v3607
        %v3628 = vadd.f32 %v3589, %v3607
        %v3629 = vadd.f32 %v3590, %v3607
        %v3630 = vadd.f32 %v3591, %v3607
        %v3631 = vadd.f32 %v3592, %v3607
        %v3632 = vadd.f32 %v3593, %v3607
        %v3633 = vadd.f32 %v3594, %v3607
        %v3634 = vadd.f32 %v3595, %v3607
        %v3635 = vadd.f32 %v3596, %v3607
        %v3636 = vadd.f32 %v3597, %v3607
        %v3637 = vadd.f32 %v3598, %v3607
        %v3638 = vadd.f32 %v3599, %v3607
        %v3639 = vadd.f32 %v3600, %v3607
        %v3640 = vadd.f32 %v3601, %v3607
        %v3641 = vmax.f32 %v3609, 0.0
        %v3642 = vmax.f32 %v3610, 0.0
        %v3643 = vmax.f32 %v3611, 0.0
        %v3644 = vmax.f32 %v3612, 0.0
        %v3645 = vmax.f32 %v3613, 0.0
        %v3646 = vmax.f32 %v3614, 0.0
        %v3647 = vmax.f32 %v3615, 0.0
        %v3648 = vmax.f32 %v3616, 0.0
        %v3649 = vmax.f32 %v3617, 0.0
        %v3650 = vmax.f32 %v3618, 0.0
        %v3651 = vmax.f32 %v3619, 0.0
        %v3652 = vmax.f32 %v3620, 0.0
        %v3653 = vmax.f32 %v3621, 0.0
        %v3654 = vmax.f32 %v3622, 0.0
        %v3655 = vmax.f32 %v3623, 0.0
        %v3656 = vmax.f32 %v3624, 0.0
        %v3657 = vmax.f32 %v3625, 0.0
        %v3658 = vmax.f32 %v3626, 0.0
        %v3659 = vmax.f32 %v3627, 0.0
        %v3660 = vmax.f32 %v3628, 0.0
        %v3661 = vmax.f32 %v3629, 0.0
        %v3662 = vmax.f32 %v3630, 0.0
        %v3663 = vmax.f32 %v3631, 0.0
        %v3664 = vmax.f32 %v3632, 0.0
        %v3665 = vmax.f32 %v3633, 0.0
        %v3666 = vmax.f32 %v3634, 0.0
        %v3667 = vmax.f32 %v3635, 0.0
        %v3668 = vmax.f32 %v3636, 0.0
        %v3669 = vmax.f32 %v3637, 0.0
        %v3670 = vmax.f32 %v3638, 0.0
        %v3671 = vmax.f32 %v3639, 0.0
        %v3672 = vmax.f32 %v3640, 0.0
        %v3673 = vld [vmem:[#allocation8] sm:$0xff]
        %v3674 = vld [vmem:[#allocation8 + $0x8] sm:$0xff]
        %v3675 = vld [vmem:[#allocation8 + $0x10] sm:$0xff]
        %v3676 = vld [vmem:[#allocation8 + $0x18] sm:$0xff]
        %v3677 = vld [vmem:[#allocation8 + $0x20] sm:$0xff]
        %v3678 = vld [vmem:[#allocation8 + $0x28] sm:$0xff]
        %v3679 = vld [vmem:[#allocation8 + $0x30] sm:$0xff]
        %v3680 = vld [vmem:[#allocation8 + $0x38] sm:$0xff]
        %v3681 = vld [vmem:[#allocation8 + $0x40] sm:$0xff]
        %v3682 = vld [vmem:[#allocation8 + $0x48] sm:$0xff]
        %v3683 = vld [vmem:[#allocation8 + $0x50] sm:$0xff]
        %v3684 = vld [vmem:[#allocation8 + $0x58] sm:$0xff]
        %v3685 = vld [vmem:[#allocation8 + $0x60] sm:$0xff]
        %v3686 = vld [vmem:[#allocation8 + $0x68] sm:$0xff]
        %v3687 = vld [vmem:[#allocation8 + $0x70] sm:$0xff]
        %v3688 = vld [vmem:[#allocation8 + $0x78] sm:$0xff]
        %3689 = vmatprep.subr.mxu0 0.0
        %3690 = vmatpush1.msra.mxu0 %v3673
        %3691 = vmatprep.subr.mxu0 0.0
        %3692 = vmatpush1.msra.mxu0 %v3674
        %3693 = vmatprep.subr.mxu0 0.0
        %3694 = vmatpush1.msra.mxu0 %v3675
        %3695 = vmatprep.subr.mxu0 0.0
        %3696 = vmatpush1.msra.mxu0 %v3676
        %3697 = vmatprep.subr.mxu0 0.0
        %3698 = vmatpush1.msra.mxu0 %v3677
        %3699 = vmatprep.subr.mxu0 0.0
        %3700 = vmatpush1.msra.mxu0 %v3678
        %3701 = vmatprep.subr.mxu0 0.0
        %3702 = vmatpush1.msra.mxu0 %v3679
        %3703 = vmatprep.subr.mxu0 0.0
        %3704 = vmatpush1.msra.mxu0 %v3680
        %3705 = vmatprep.subr.mxu0 0.0
        %3706 = vmatpush1.msra.mxu0 %v3681
        %3707 = vmatprep.subr.mxu0 0.0
        %3708 = vmatpush1.msra.mxu0 %v3682
        %3709 = vmatprep.subr.mxu0 0.0
        %3710 = vmatpush1.msra.mxu0 %v3683
        %3711 = vmatprep.subr.mxu0 0.0
        %3712 = vmatpush1.msra.mxu0 %v3684
        %3713 = vmatprep.subr.mxu0 0.0
        %3714 = vmatpush1.msra.mxu0 %v3685
        %3715 = vmatprep.subr.mxu0 0.0
        %3716 = vmatpush1.msra.mxu0 %v3686
        %3717 = vmatprep.subr.mxu0 0.0
        %3718 = vmatpush1.msra.mxu0 %v3687
        %3719 = vmatprep.subr.mxu0 0.0
        %3720 = vmatpush1.msra.mxu0 %v3688
        %3721 = vmatprep.subr.mxu0 0.0
        %3722 = vmatpush1.msra.mxu0 0.0
        %3723 = vmatprep.subr.mxu0 0.0
        %3724 = vmatpush1.msra.mxu0 0.0
        %3725 = vmatprep.subr.mxu0 0.0
        %3726 = vmatpush1.msra.mxu0 0.0
        %3727 = vmatprep.subr.mxu0 0.0
        %3728 = vmatpush1.msra.mxu0 0.0
        %3729 = vmatprep.subr.mxu0 0.0
        %3730 = vmatpush1.msra.mxu0 0.0
        %3731 = vmatprep.subr.mxu0 0.0
        %3732 = vmatpush1.msra.mxu0 0.0
        %3733 = vmatprep.subr.mxu0 0.0
        %3734 = vmatpush1.msra.mxu0 0.0
        %3735 = vmatprep.subr.mxu0 0.0
        %3736 = vmatpush1.msra.mxu0 0.0
        %3737 = vmatprep.subr.mxu0 0.0
        %3738 = vmatpush1.msra.mxu0 0.0
        %3739 = vmatprep.subr.mxu0 0.0
        %3740 = vmatpush1.msra.mxu0 0.0
        %3741 = vmatprep.subr.mxu0 0.0
        %3742 = vmatpush1.msra.mxu0 0.0
        %3743 = vmatprep.subr.mxu0 0.0
        %3744 = vmatpush1.msra.mxu0 0.0
        %3745 = vmatprep.subr.mxu0 0.0
        %3746 = vmatpush1.msra.mxu0 0.0
        %3747 = vmatprep.subr.mxu0 0.0
        %3748 = vmatpush1.msra.mxu0 0.0
        %3749 = vmatprep.subr.mxu0 0.0
        %3750 = vmatpush1.msra.mxu0 0.0
        %3751 = vmatprep.subr.mxu0 0.0
        %3752 = vmatpush1.msra.mxu0 0.0
        %3753 = vmatprep.mubr.f32.mxu0 0.0
        %3754 = vmatmul.mubr.f32.gmra.mrb[0].mxu0 %v3641
        %v3755 = vpop.f32.mrb[0].mxu0
        %v3756 = vadd.f32 0.0, %v3755
        %v3757 = vpop.f32.mrb[0].mxu0
        %3758 = vmatprep.mubr.f32.mxu0 0.0
        %3759 = vmatmul.mubr.f32.gmra.mrb[0].mxu0 %v3642
        %v3760 = vpop.f32.mrb[0].mxu0
        %v3761 = vadd.f32 0.0, %v3760
        %v3762 = vpop.f32.mrb[0].mxu0
        %3763 = vmatprep.mubr.f32.mxu0 0.0
        %3764 = vmatmul.mubr.f32.gmra.mrb[0].mxu0 %v3643
        %v3765 = vpop.f32.mrb[0].mxu0
        %v3766 = vadd.f32 0.0, %v3765
        %v3767 = vpop.f32.mrb[0].mxu0
        %3768 = vmatprep.mubr.f32.mxu0 0.0
        %3769 = vmatmul.mubr.f32.gmra.mrb[0].mxu0 %v3644
        %v3770 = vpop.f32.mrb[0].mxu0
        %v3771 = vadd.f32 0.0, %v3770
        %v3772 = vpop.f32.mrb[0].mxu0
        %3773 = vmatprep.mubr.f32.mxu0 0.0
        %3774 = vmatmul.mubr.f32.gmra.mrb[0].mxu0 %v3645
        %v3775 = vpop.f32.mrb[0].mxu0
        %v3776 = vadd.f32 0.0, %v3775
        %v3777 = vpop.f32.mrb[0].mxu0
        %3778 = vmatprep.mubr.f32.mxu0 0.0
        %3779 = vmatmul.mubr.f32.gmra.mrb[0].mxu0 %v3646
        %v3780 = vpop.f32.mrb[0].mxu0
        %v3781 = vadd.f32 0.0, %v3780
        %v3782 = vpop.f32.mrb[0].mxu0
        %3783 = vmatprep.mubr.f32.mxu0 0.0
        %3784 = vmatmul.mubr.f32.gmra.mrb[0].mxu0 %v3647
        %v3785 = vpop.f32.mrb[0].mxu0
        %v3786 = vadd.f32 0.0, %v3785
        %v3787 = vpop.f32.mrb[0].mxu0
        %3788 = vmatprep.mubr.f32.mxu0 0.0
        %3789 = vmatmul.mubr.f32.gmra.mrb[0].mxu0 %v3648
        %v3790 = vpop.f32.mrb[0].mxu0
        %v3791 = vadd.f32 0.0, %v3790
        %v3792 = vpop.f32.mrb[0].mxu0
        %3793 = vmatprep.mubr.f32.mxu0 0.0
        %3794 = vmatmul.mubr.f32.gmra.mrb[0].mxu0 %v3649
        %v3795 = vpop.f32.mrb[0].mxu0
        %v3796 = vadd.f32 0.0, %v3795
        %v3797 = vpop.f32.mrb[0].mxu0
        %3798 = vmatprep.mubr.f32.mxu0 0.0
        %3799 = vmatmul.mubr.f32.gmra.mrb[0].mxu0 %v3650
        %v3800 = vpop.f32.mrb[0].mxu0
        %v3801 = vadd.f32 0.0, %v3800
        %v3802 = vpop.f32.mrb[0].mxu0
        %3803 = vmatprep.mubr.f32.mxu0 0.0
        %3804 = vmatmul.mubr.f32.gmra.mrb[0].mxu0 %v3651
        %v3805 = vpop.f32.mrb[0].mxu0
        %v3806 = vadd.f32 0.0, %v3805
        %v3807 = vpop.f32.mrb[0].mxu0
        %3808 = vmatprep.mubr.f32.mxu0 0.0
        %3809 = vmatmul.mubr.f32.gmra.mrb[0].mxu0 %v3652
        %v3810 = vpop.f32.mrb[0].mxu0
        %v3811 = vadd.f32 0.0, %v3810
        %v3812 = vpop.f32.mrb[0].mxu0
        %3813 = vmatprep.mubr.f32.mxu0 0.0
        %3814 = vmatmul.mubr.f32.gmra.mrb[0].mxu0 %v3653
        %v3815 = vpop.f32.mrb[0].mxu0
        %v3816 = vadd.f32 0.0, %v3815
        %v3817 = vpop.f32.mrb[0].mxu0
        %3818 = vmatprep.mubr.f32.mxu0 0.0
        %3819 = vmatmul.mubr.f32.gmra.mrb[0].mxu0 %v3654
        %v3820 = vpop.f32.mrb[0].mxu0
        %v3821 = vadd.f32 0.0, %v3820
        %v3822 = vpop.f32.mrb[0].mxu0
        %3823 = vmatprep.mubr.f32.mxu0 0.0
        %3824 = vmatmul.mubr.f32.gmra.mrb[0].mxu0 %v3655
        %v3825 = vpop.f32.mrb[0].mxu0
        %v3826 = vadd.f32 0.0, %v3825
        %v3827 = vpop.f32.mrb[0].mxu0
        %3828 = vmatprep.mubr.f32.mxu0 0.0
        %3829 = vmatmul.mubr.f32.gmra.mrb[0].mxu0 %v3656
        %v3830 = vpop.f32.mrb[0].mxu0
        %v3831 = vadd.f32 0.0, %v3830
        %v3832 = vpop.f32.mrb[0].mxu0
        %3833 = vmatprep.mubr.f32.mxu0 0.0
        %3834 = vmatmul.mubr.f32.gmra.mrb[0].mxu0 %v3657
        %v3835 = vpop.f32.mrb[0].mxu0
        %v3836 = vadd.f32 0.0, %v3835
        %v3837 = vpop.f32.mrb[0].mxu0
        %3838 = vmatprep.mubr.f32.mxu0 0.0
        %3839 = vmatmul.mubr.f32.gmra.mrb[0].mxu0 %v3658
        %v3840 = vpop.f32.mrb[0].mxu0
        %v3841 = vadd.f32 0.0, %v3840
        %v3842 = vpop.f32.mrb[0].mxu0
        %3843 = vmatprep.mubr.f32.mxu0 0.0
        %3844 = vmatmul.mubr.f32.gmra.mrb[0].mxu0 %v3659
        %v3845 = vpop.f32.mrb[0].mxu0
        %v3846 = vadd.f32 0.0, %v3845
        %v3847 = vpop.f32.mrb[0].mxu0
        %3848 = vmatprep.mubr.f32.mxu0 0.0
        %3849 = vmatmul.mubr.f32.gmra.mrb[0].mxu0 %v3660
        %v3850 = vpop.f32.mrb[0].mxu0
        %v3851 = vadd.f32 0.0, %v3850
        %v3852 = vpop.f32.mrb[0].mxu0
        %3853 = vmatprep.mubr.f32.mxu0 0.0
        %3854 = vmatmul.mubr.f32.gmra.mrb[0].mxu0 %v3661
        %v3855 = vpop.f32.mrb[0].mxu0
        %v3856 = vadd.f32 0.0, %v3855
        %v3857 = vpop.f32.mrb[0].mxu0
        %3858 = vmatprep.mubr.f32.mxu0 0.0
        %3859 = vmatmul.mubr.f32.gmra.mrb[0].mxu0 %v3662
        %v3860 = vpop.f32.mrb[0].mxu0
        %v3861 = vadd.f32 0.0, %v3860
        %v3862 = vpop.f32.mrb[0].mxu0
        %3863 = vmatprep.mubr.f32.mxu0 0.0
        %3864 = vmatmul.mubr.f32.gmra.mrb[0].mxu0 %v3663
        %v3865 = vpop.f32.mrb[0].mxu0
        %v3866 = vadd.f32 0.0, %v3865
        %v3867 = vpop.f32.mrb[0].mxu0
        %3868 = vmatprep.mubr.f32.mxu0 0.0
        %3869 = vmatmul.mubr.f32.gmra.mrb[0].mxu0 %v3664
        %v3870 = vpop.f32.mrb[0].mxu0
        %v3871 = vadd.f32 0.0, %v3870
        %v3872 = vpop.f32.mrb[0].mxu0
        %3873 = vmatprep.mubr.f32.mxu0 0.0
        %3874 = vmatmul.mubr.f32.gmra.mrb[0].mxu0 %v3665
        %v3875 = vpop.f32.mrb[0].mxu0
        %v3876 = vadd.f32 0.0, %v3875
        %v3877 = vpop.f32.mrb[0].mxu0
        %3878 = vmatprep.mubr.f32.mxu0 0.0
        %3879 = vmatmul.mubr.f32.gmra.mrb[0].mxu0 %v3666
        %v3880 = vpop.f32.mrb[0].mxu0
        %v3881 = vadd.f32 0.0, %v3880
        %v3882 = vpop.f32.mrb[0].mxu0
        %3883 = vmatprep.mubr.f32.mxu0 0.0
        %3884 = vmatmul.mubr.f32.gmra.mrb[0].mxu0 %v3667
        %v3885 = vpop.f32.mrb[0].mxu0
        %v3886 = vadd.f32 0.0, %v3885
        %v3887 = vpop.f32.mrb[0].mxu0
        %3888 = vmatprep.mubr.f32.mxu0 0.0
        %3889 = vmatmul.mubr.f32.gmra.mrb[0].mxu0 %v3668
        %v3890 = vpop.f32.mrb[0].mxu0
        %v3891 = vadd.f32 0.0, %v3890
        %v3892 = vpop.f32.mrb[0].mxu0
        %3893 = vmatprep.mubr.f32.mxu0 0.0
        %3894 = vmatmul.mubr.f32.gmra.mrb[0].mxu0 %v3669
        %v3895 = vpop.f32.mrb[0].mxu0
        %v3896 = vadd.f32 0.0, %v3895
        %v3897 = vpop.f32.mrb[0].mxu0
        %3898 = vmatprep.mubr.f32.mxu0 0.0
        %3899 = vmatmul.mubr.f32.gmra.mrb[0].mxu0 %v3670
        %v3900 = vpop.f32.mrb[0].mxu0
        %v3901 = vadd.f32 0.0, %v3900
        %v3902 = vpop.f32.mrb[0].mxu0
        %3903 = vmatprep.mubr.f32.mxu0 0.0
        %3904 = vmatmul.mubr.f32.gmra.mrb[0].mxu0 %v3671
        %v3905 = vpop.f32.mrb[0].mxu0
        %v3906 = vadd.f32 0.0, %v3905
        %v3907 = vpop.f32.mrb[0].mxu0
        %3908 = vmatprep.mubr.f32.mxu0 0.0
        %3909 = vmatmul.mubr.f32.gmra.mrb[0].mxu0 %v3672
        %v3910 = vpop.f32.mrb[0].mxu0
        %v3911 = vadd.f32 0.0, %v3910
        %v3912 = vpop.f32.mrb[0].mxu0
        %3913 = vdwg.mxu0
        %v3914 = vld [vmem:[%s8] sm:$0x1]
        %v3916 = vlaneseq
        %v3917 = vshrl.u32 %v3916, 7
        %v3918 = vsub.s32 0, %v3917
        %v3919 = vrot.slane %v3914, %v3918
        %v3921 = vmul.f32 %v3756, %v3919
        %v3922 = vmul.f32 %v3761, %v3919
        %v3923 = vmul.f32 %v3766, %v3919
        %v3924 = vmul.f32 %v3771, %v3919
        %v3925 = vmul.f32 %v3776, %v3919
        %v3926 = vmul.f32 %v3781, %v3919
        %v3927 = vmul.f32 %v3786, %v3919
        %v3928 = vmul.f32 %v3791, %v3919
        %v3929 = vmul.f32 %v3796, %v3919
        %v3930 = vmul.f32 %v3801, %v3919
        %v3931 = vmul.f32 %v3806, %v3919
        %v3932 = vmul.f32 %v3811, %v3919
        %v3933 = vmul.f32 %v3816, %v3919
        %v3934 = vmul.f32 %v3821, %v3919
        %v3935 = vmul.f32 %v3826, %v3919
        %v3936 = vmul.f32 %v3831, %v3919
        %v3937 = vmul.f32 %v3836, %v3919
        %v3938 = vmul.f32 %v3841, %v3919
        %v3939 = vmul.f32 %v3846, %v3919
        %v3940 = vmul.f32 %v3851, %v3919
        %v3941 = vmul.f32 %v3856, %v3919
        %v3942 = vmul.f32 %v3861, %v3919
        %v3943 = vmul.f32 %v3866, %v3919
        %v3944 = vmul.f32 %v3871, %v3919
        %v3945 = vmul.f32 %v3876, %v3919
        %v3946 = vmul.f32 %v3881, %v3919
        %v3947 = vmul.f32 %v3886, %v3919
        %v3948 = vmul.f32 %v3891, %v3919
        %v3949 = vmul.f32 %v3896, %v3919
        %v3950 = vmul.f32 %v3901, %v3919
        %v3951 = vmul.f32 %v3906, %v3919
        %v3952 = vmul.f32 %v3911, %v3919
        %v3953 = vld [vmem:[%s9] sm:$0x1]
        %v3955 = vlaneseq
        %v3956 = vshrl.u32 %v3955, 7
        %v3957 = vsub.s32 0, %v3956
        %v3958 = vrot.slane %v3953, %v3957
        %v3960 = vadd.f32 %v3921, %v3958
        %v3961 = vadd.f32 %v3922, %v3958
        %v3962 = vadd.f32 %v3923, %v3958
        %v3963 = vadd.f32 %v3924, %v3958
        %v3964 = vadd.f32 %v3925, %v3958
        %v3965 = vadd.f32 %v3926, %v3958
        %v3966 = vadd.f32 %v3927, %v3958
        %v3967 = vadd.f32 %v3928, %v3958
        %v3968 = vadd.f32 %v3929, %v3958
        %v3969 = vadd.f32 %v3930, %v3958
        %v3970 = vadd.f32 %v3931, %v3958
        %v3971 = vadd.f32 %v3932, %v3958
        %v3972 = vadd.f32 %v3933, %v3958
        %v3973 = vadd.f32 %v3934, %v3958
        %v3974 = vadd.f32 %v3935, %v3958
        %v3975 = vadd.f32 %v3936, %v3958
        %v3976 = vadd.f32 %v3937, %v3958
        %v3977 = vadd.f32 %v3938, %v3958
        %v3978 = vadd.f32 %v3939, %v3958
        %v3979 = vadd.f32 %v3940, %v3958
        %v3980 = vadd.f32 %v3941, %v3958
        %v3981 = vadd.f32 %v3942, %v3958
        %v3982 = vadd.f32 %v3943, %v3958
        %v3983 = vadd.f32 %v3944, %v3958
        %v3984 = vadd.f32 %v3945, %v3958
        %v3985 = vadd.f32 %v3946, %v3958
        %v3986 = vadd.f32 %v3947, %v3958
        %v3987 = vadd.f32 %v3948, %v3958
        %v3988 = vadd.f32 %v3949, %v3958
        %v3989 = vadd.f32 %v3950, %v3958
        %v3990 = vadd.f32 %v3951, %v3958
        %v3991 = vadd.f32 %v3952, %v3958
        %v3992 = vadd.f32 %v3960, %v422
        %v3993 = vadd.f32 %v3961, %v423
        %v3994 = vadd.f32 %v3962, %v424
        %v3995 = vadd.f32 %v3963, %v425
        %v3996 = vadd.f32 %v3964, %v426
        %v3997 = vadd.f32 %v3965, %v427
        %v3998 = vadd.f32 %v3966, %v428
        %v3999 = vadd.f32 %v3967, %v429
        %v4000 = vadd.f32 %v3968, %v430
        %v4001 = vadd.f32 %v3969, %v431
        %v4002 = vadd.f32 %v3970, %v432
        %v4003 = vadd.f32 %v3971, %v433
        %v4004 = vadd.f32 %v3972, %v434
        %v4005 = vadd.f32 %v3973, %v435
        %v4006 = vadd.f32 %v3974, %v436
        %v4007 = vadd.f32 %v3975, %v437
        %v4008 = vadd.f32 %v3976, %v438
        %v4009 = vadd.f32 %v3977, %v439
        %v4010 = vadd.f32 %v3978, %v440
        %v4011 = vadd.f32 %v3979, %v441
        %v4012 = vadd.f32 %v3980, %v442
        %v4013 = vadd.f32 %v3981, %v443
        %v4014 = vadd.f32 %v3982, %v444
        %v4015 = vadd.f32 %v3983, %v445
        %v4016 = vadd.f32 %v3984, %v446
        %v4017 = vadd.f32 %v3985, %v447
        %v4018 = vadd.f32 %v3986, %v448
        %v4019 = vadd.f32 %v3987, %v449
        %v4020 = vadd.f32 %v3988, %v450
        %v4021 = vadd.f32 %v3989, %v451
        %v4022 = vadd.f32 %v3990, %v452
        %v4023 = vadd.f32 %v3991, %v453
        %v4024 = vmax.f32 %v3992, 0.0
        %v4025 = vmax.f32 %v3993, 0.0
        %v4026 = vmax.f32 %v3994, 0.0
        %v4027 = vmax.f32 %v3995, 0.0
        %v4028 = vmax.f32 %v3996, 0.0
        %v4029 = vmax.f32 %v3997, 0.0
        %v4030 = vmax.f32 %v3998, 0.0
        %v4031 = vmax.f32 %v3999, 0.0
        %v4032 = vmax.f32 %v4000, 0.0
        %v4033 = vmax.f32 %v4001, 0.0
        %v4034 = vmax.f32 %v4002, 0.0
        %v4035 = vmax.f32 %v4003, 0.0
        %v4036 = vmax.f32 %v4004, 0.0
        %v4037 = vmax.f32 %v4005, 0.0
        %v4038 = vmax.f32 %v4006, 0.0
        %v4039 = vmax.f32 %v4007, 0.0
        %v4040 = vmax.f32 %v4008, 0.0
        %v4041 = vmax.f32 %v4009, 0.0
        %v4042 = vmax.f32 %v4010, 0.0
        %v4043 = vmax.f32 %v4011, 0.0
        %v4044 = vmax.f32 %v4012, 0.0
        %v4045 = vmax.f32 %v4013, 0.0
        %v4046 = vmax.f32 %v4014, 0.0
        %v4047 = vmax.f32 %v4015, 0.0
        %v4048 = vmax.f32 %v4016, 0.0
        %v4049 = vmax.f32 %v4017, 0.0
        %v4050 = vmax.f32 %v4018, 0.0
        %v4051 = vmax.f32 %v4019, 0.0
        %v4052 = vmax.f32 %v4020, 0.0
        %v4053 = vmax.f32 %v4021, 0.0
        %v4054 = vmax.f32 %v4022, 0.0
        %v4055 = vmax.f32 %v4023, 0.0
        %4056 = vst [vmem:[%s421] sm:$0xff] %v4024
        %4057 = vst [vmem:[%s421 + $0x8] sm:$0xff] %v4025
        %4058 = vst [vmem:[%s421 + $0x10] sm:$0xff] %v4026
        %4059 = vst [vmem:[%s421 + $0x18] sm:$0xff] %v4027
        %4060 = vst [vmem:[%s421 + $0x20] sm:$0xff] %v4028
        %4061 = vst [vmem:[%s421 + $0x28] sm:$0xff] %v4029
        %4062 = vst [vmem:[%s421 + $0x30] sm:$0xff] %v4030
        %4063 = vst [vmem:[%s421 + $0x38] sm:$0xff] %v4031
        %4064 = vst [vmem:[%s421 + $0x40] sm:$0xff] %v4032
        %4065 = vst [vmem:[%s421 + $0x48] sm:$0xff] %v4033
        %4066 = vst [vmem:[%s421 + $0x50] sm:$0xff] %v4034
        %4067 = vst [vmem:[%s421 + $0x58] sm:$0xff] %v4035
        %4068 = vst [vmem:[%s421 + $0x60] sm:$0xff] %v4036
        %4069 = vst [vmem:[%s421 + $0x68] sm:$0xff] %v4037
        %4070 = vst [vmem:[%s421 + $0x70] sm:$0xff] %v4038
        %4071 = vst [vmem:[%s421 + $0x78] sm:$0xff] %v4039
        %4072 = vst [vmem:[%s421 + $0x80] sm:$0xff] %v4040
        %4073 = vst [vmem:[%s421 + $0x88] sm:$0xff] %v4041
        %4074 = vst [vmem:[%s421 + $0x90] sm:$0xff] %v4042
        %4075 = vst [vmem:[%s421 + $0x98] sm:$0xff] %v4043
        %4076 = vst [vmem:[%s421 + $0xa0] sm:$0xff] %v4044
        %4077 = vst [vmem:[%s421 + $0xa8] sm:$0xff] %v4045
        %4078 = vst [vmem:[%s421 + $0xb0] sm:$0xff] %v4046
        %4079 = vst [vmem:[%s421 + $0xb8] sm:$0xff] %v4047
        %4080 = vst [vmem:[%s421 + $0xc0] sm:$0xff] %v4048
        %4081 = vst [vmem:[%s421 + $0xc8] sm:$0xff] %v4049
        %4082 = vst [vmem:[%s421 + $0xd0] sm:$0xff] %v4050
        %4083 = vst [vmem:[%s421 + $0xd8] sm:$0xff] %v4051
        %4084 = vst [vmem:[%s421 + $0xe0] sm:$0xff] %v4052
        %4085 = vst [vmem:[%s421 + $0xe8] sm:$0xff] %v4053
        %4086 = vst [vmem:[%s421 + $0xf0] sm:$0xff] %v4054
        %4087 = vst [vmem:[%s421 + $0xf8] sm:$0xff] %v4055
        %s4088 = sand.u32 %s252, 1
        %s4089 = scalar_lea.sflag [#allocation4], %s4088
        %s4090 = sand.u32 %s252, 1
        %s4091 = smul.addr %s4090, 256
        %s4092 = scalar_lea.vmem [#allocation10], %s4091
        // Predicated region
        $region77: #{tpu_custom_call.1} parent=59 // pred_check
          %p4093 = pneg %p262
        $region78: #{tpu_custom_call.1} parent=59 // pred_check_branch
          %4095 = sbr.rel (%p4093) target = $region80
        $region79: #{tpu_custom_call.1} parent=59 // pred_region
          %s4097 = ssub.s32 4096, 4096
          %4098 = vsyncadd %s4089, %s4097
          %s4099 = smul.addr %s29, 32
          %s4100 = smul.addr %s4099, 128
          %s4101 = scalar_lea.hbm %s10, %s4100
          %s4102 = sshll.u32 %s4092, 4
          %s4103 = int_to_ptr.vmem [resolvable:$true] %s4102
          %4108 = dma.vmem_to_hbm [thread:$0]  %s4103, 4096, %s4101, %s4089, 128, 128, 8
        $region80: #{tpu_custom_call.1} parent=59 // pred_fallthru
          _
      $region60: #{tpu_custom_call.1} parent=5 // pred_fallthru
        _
      %p4109 = scmp.le.s32.totalorder 2, %s24
      // Predicated region
      $region81: #{tpu_custom_call.1} parent=5 // pred_check
        %p4110 = pneg %p4109
      $region82: #{tpu_custom_call.1} parent=5 // pred_check_branch
        %4112 = sbr.rel (%p4110) target = $region84
      $region83: #{tpu_custom_call.1} parent=5 // pred_region
        %s4113 = ssub.s32 %s24, 2
        // Predicated region
        $region85: #{tpu_custom_call.1} parent=83 // pred_check
          %p4114 = pneg %p268
        $region86: #{tpu_custom_call.1} parent=83 // pred_check_branch
          %4116 = sbr.rel (%p4114) target = $region88
        $region87: #{tpu_custom_call.1} parent=83 // pred_region
          %s4117 = sand.u32 %s253, 1
          %s4118 = scalar_lea.sflag [#allocation4], %s4117
          %s4119 = sand.u32 %s253, 1
          %s4120 = smul.addr %s4119, 256
          %s4121 = scalar_lea.vmem [#allocation10], %s4120
          %4122 = dma.done %s4118, 4096
        $region88: #{tpu_custom_call.1} parent=83 // pred_fallthru
          _
      $region84: #{tpu_custom_call.1} parent=5 // pred_fallthru
        _
    $region6: #{tpu_custom_call.1} parent=1 // loop_footer
      %s28 = sadd.s32 1, %s24
    $region7: #{tpu_custom_call.1} parent=1 // loop_footer_branch
      %23 = sbr.rel target = $region3
    $region8: #{tpu_custom_call.1} parent=1 // loop_exit
      _
    %4123 = vsyncpa [#allocation3], 1
    %s4124 = scalar_lea.sflag [#allocation3], 1
    %4125 = vsyncpa %s4124, 1
    %4126 = vsyncpa [#allocation6], 1
    %4127 = vsyncpa [#allocation9], 1
    %4128 = vsyncpa [#allocation4], 1
    %s4129 = scalar_lea.sflag [#allocation4], 1
    %4130 = vsyncpa %s4129, 1

</llo_original>
